<compile_context>
chip_gen: v6e
topology: v6e:2x2x1
jax: 0.10.0
libtpu: 0.0.40
codegen_flags: <defaults>
</compile_context>

<pallas_src>
import math

import jax
import jax.numpy as jnp
from jax.experimental import pallas as pl
from jax.experimental.pallas import tpu as pltpu

BN_EPS = 1e-5   # nn.BatchNorm2d default eps


# ----------------------------- Pallas kernel --------------------------------

def _seprep_kernel(x_ref, w1_ref, b2_ref, w2w_ref, o_ref, zpad_ref):
    """Fused BN(+pad) -> 1x1 conv -> depthwise KxK conv for Bt images.

    x_ref:    (Bt, H, W, Cin)       raw input block (unpadded)
    w1_ref:   (Cin, Cout)           pointwise weight with BN scale folded in
    b2_ref:   (W, Cout)             output bias = (W1 @ bn_bias) * sum_taps(w2),
                                    pre-broadcast over W
    w2w_ref:  (K*K, W, Cout)        depthwise tap weights, pre-broadcast over W
    o_ref:    (Bt, H, W, Cout)
    zpad_ref: (Bt, H+2P, W, Cout)   VMEM scratch: z padded along H only (zeros)
    """
    Bt, H, W, Cin = x_ref.shape
    Cout = o_ref.shape[3]
    Hp = zpad_ref.shape[1]
    P = (Hp - H) // 2
    K = 2 * P + 1

    # ---- pointwise 1x1 conv (BN scale pre-folded): ONE big MXU matmul ----
    # Reshape merges leading dims only (W % 8 == 0), so it is a free relayout.
    x2 = x_ref[...].reshape(Bt * H * W, Cin)
    z = jnp.dot(x2, w1_ref[...], preferred_element_type=jnp.float32)

    # ---- stage z into the H-padded scratch (all offsets on leading dims -> aligned) ----
    if P > 0:
        halo = jnp.zeros((Bt, P, W, Cout), jnp.float32)
        zpad_ref[:, 0:P, :, :] = halo          # cheap: 2*P rows per step, megacore-safe
        zpad_ref[:, H + P:, :, :] = halo
    zpad_ref[:, P:P + H, :, :] = z.reshape(Bt, H, W, Cout).astype(zpad_ref.dtype)

    # ---- depthwise KxK 'valid' conv, strip-tiled over output rows ----
    S = math.gcd(H, 8)                         # rows per strip (8 at test shapes)
    nstrips = H // S
    b2 = b2_ref[...]                           # (W, Cout), hoisted once

    for b in range(Bt):                        # static, fully unrolled (short trip counts)
        for s in range(nstrips):
            row0 = s * S
            acc = None                         # init with first tap product (no zeros-add)
            for dh in range(K):
                # Aligned row-window load: only the leading H axis is offset.
                rows = zpad_ref[b, row0 + dh:row0 + dh + S, :, :]    # (S, W, Cout)
                for dw in range(K):
                    d = dw - P
                    if d == 0:
                        win = rows
                    elif d > 0:
                        # win[:, w] = rows[:, w+d], zero past the right edge
                        win = jnp.concatenate(
                            [rows[:, d:, :],
                             jnp.zeros((S, d, Cout), rows.dtype)], axis=1)
                    else:
                        # win[:, w] = rows[:, w+d], zero before the left edge
                        win = jnp.concatenate(
                            [jnp.zeros((S, -d, Cout), rows.dtype),
                             rows[:, :d, :]], axis=1)
                    t = win * w2w_ref[dh * K + dw]                   # (S,W,Cout)*(W,Cout)
                    acc = t if acc is None else acc + t
            # lane-dense store of one finished strip (bounds live ranges)
            o_ref[b, row0:row0 + S, :, :] = (acc + b2).astype(o_ref.dtype)


# ------------------------------- wrappers ------------------------------------

def _pick_images_per_step(B, per_image_block_bytes, vmem_budget_bytes=8 << 20):
    """Largest Bt | B s.t. the block fits the VMEM budget and (when B>=2) the grid
    keeps >= 2 steps so both v7x TensorCores get work (parallel axis)."""
    best = 1
    for bt in range(1, B + 1):
        if B % bt:
            continue
        if bt * per_image_block_bytes > vmem_budget_bytes:
            continue
        if B >= 2 and (B // bt) < 2:
            continue
        best = bt
    return best


def seprep_conv(x_cl, w1s, bias2, w2t, *, compute_dtype=None):
    """SepRepConv on channels-last input. x_cl: (B, H, W, Cin) -> (B, H, W, Cout).

    Channels-last pipelines should call this directly (no layout transposes).
    """
    B, H, W, Cin = x_cl.shape
    Cout = w1s.shape[1]
    KK = w2t.shape[0]
    K = int(round(math.sqrt(KK)))
    P = (K - 1) // 2
    assert W % 8 == 0, "W must be a multiple of 8 (sublane dim of the VMEM tiles)"

    itemsize = 4
    per_img = (H * W * Cin * itemsize * 2            # input block, double-buffered
               + H * W * Cout * itemsize * 2         # output block, double-buffered
               + (H + 2 * P) * W * Cout * itemsize)  # zpad scratch
    Bt = _pick_images_per_step(B, per_img)
    grid = (B // Bt,)

    if compute_dtype is not None:                    # bf16 MXU path (off by default)
        x_cl = x_cl.astype(compute_dtype)
        w1s = w1s.astype(compute_dtype)

    # Pre-broadcast bias / tap weights over W (sublane axis) so the kernel never
    # needs an in-loop sublane broadcast.
    b2 = jnp.broadcast_to(jnp.asarray(bias2, jnp.float32).reshape(1, Cout), (W, Cout))
    w2w = jnp.broadcast_to(jnp.asarray(w2t, jnp.float32).reshape(KK, 1, Cout),
                           (KK, W, Cout))

    flops = 2 * B * H * W * Cin * Cout + 2 * B * H * W * KK * Cout
    bytes_accessed = (B * H * W * Cin * x_cl.dtype.itemsize
                      + B * H * W * Cout * 4
                      + Cin * Cout * w1s.dtype.itemsize
                      + W * Cout * 4 + KK * W * Cout * 4)

    return pl.pallas_call(
        _seprep_kernel,
        out_shape=jax.ShapeDtypeStruct((B, H, W, Cout), jnp.float32),
        grid_spec=pltpu.PrefetchScalarGridSpec(
            num_scalar_prefetch=0,
            grid=grid,
            in_specs=[
                pl.BlockSpec((Bt, H, W, Cin), lambda g: (g, 0, 0, 0)),
                pl.BlockSpec((Cin, Cout), lambda g: (0, 0)),
                pl.BlockSpec((W, Cout), lambda g: (0, 0)),
                pl.BlockSpec((KK, W, Cout), lambda g: (0, 0, 0)),
            ],
            out_specs=pl.BlockSpec((Bt, H, W, Cout), lambda g: (g, 0, 0, 0)),
            scratch_shapes=[pltpu.VMEM((Bt, H + 2 * P, W, Cout), jnp.float32)],
        ),
        compiler_params=pltpu.CompilerParams(
            dimension_semantics=("parallel",)),
        cost_estimate=pl.CostEstimate(
            flops=int(flops),
            transcendentals=0,
            bytes_accessed=int(bytes_accessed)),
    )(x_cl, w1s, b2, w2w)


def fold_params(gamma, beta, mean, var, w1, w2):
    """Fold eval-mode BN + the constant-border bias into the conv weights.

    gamma/beta/mean/var: (Cin,)   BatchNorm2d affine params / running stats
    w1: (Cout, Cin)   == Conv2d(Cin, Cout, 1).weight[:, :, 0, 0]
    w2: (Cout, K, K)  == Conv2d(Cout, Cout, K, groups=Cout).weight[:, 0]
    """
    s = gamma / jnp.sqrt(var + BN_EPS)             # (Cin,)
    b = beta - mean * s                            # (Cin,)  == BNAndPad pad value
    w1s = (w1 * s[None, :]).T                      # (Cin, Cout)  BN scale folded
    b1 = w1 @ b                                    # (Cout,) pointwise output in the border
    Cout, K, _ = w2.shape
    w2t = w2.reshape(Cout, K * K).T                # (K*K, Cout) tap-major
    bias2 = b1 * jnp.sum(w2, axis=(1, 2))          # (Cout,) refolded output bias
    return dict(w1s=w1s, bias2=bias2, w2t=w2t)


@jax.jit
def seprep_forward(x_bchw, params):
    """NCHW adapter matching the PyTorch module: (B, Cin, H, W) -> (B, Cout, H, W).
    (Channels-last callers should use seprep_conv directly and skip both transposes.)"""
    x = jnp.transpose(x_bchw, (0, 2, 3, 1))
    y = seprep_conv(x, params['w1s'], params['bias2'], params['w2t'])
    return jnp.transpose(y, (0, 3, 1, 2))


# --------------------------- plain-JAX reference -----------------------------

def _ref_forward(x_bchw, gamma, beta, mean, var, w1, w2):
    """Faithful eval-mode reference of SepRepConv.forward."""
    B, Cin, H, W = x_bchw.shape
    Cout, K, _ = w2.shape
    P = (K - 1) // 2
    s = gamma / jnp.sqrt(var + BN_EPS)
    b = beta - mean * s
    x = jnp.transpose(x_bchw, (0, 2, 3, 1))
    xp = jnp.pad(x, ((0, 0), (P, P), (P, P), (0, 0)))          # zero pad
    y = xp * s + b                                             # == BNAndPad output
    z = jnp.einsum('bhwc,oc->bhwo', y, w1,
                   precision=jax.lax.Precision.HIGHEST)        # 1x1 conv
    out = jnp.zeros((B, H, W, Cout), jnp.float32)
    for dh in range(K):
        for dw in range(K):
            out = out + z[:, dh:dh + H, dw:dw + W, :] * w2[:, dh, dw]
    return jnp.transpose(out, (0, 3, 1, 2))


# ---------------------------------- main --------------------------------------

if __name__ == "__main__":
    B, Cin, Cout, H, W, K = 4, 32, 128, 16, 16, 3
    key = jax.random.PRNGKey(0)
    kx, kg, kb, km, kv, k1, k2 = jax.random.split(key, 7)

    x = jax.random.normal(kx, (B, Cin, H, W), jnp.float32)
    gamma = 1.0 + 0.1 * jax.random.normal(kg, (Cin,), jnp.float32)
    beta = 0.1 * jax.random.normal(kb, (Cin,), jnp.float32)
    mean = 0.1 * jax.random.normal(km, (Cin,), jnp.float32)
    var = jnp.abs(jax.random.normal(kv, (Cin,), jnp.float32)) * 0.5 + 0.5
    w1 = 0.1 * jax.random.normal(k1, (Cout, Cin), jnp.float32)    # conv1x1 weight[:,:,0,0]
    w2 = 0.2 * jax.random.normal(k2, (Cout, K, K), jnp.float32)   # depthwise weight[:,0]

    params = fold_params(gamma, beta, mean, var, w1, w2)
    out = jax.block_until_ready(seprep_forward(x, params))
    assert out.shape == (B, Cout, H, W), out.shape

    ref = _ref_forward(x, gamma, beta, mean, var, w1, w2)
    max_err = float(jnp.max(jnp.abs(out - ref)))
    assert jnp.allclose(out, ref, atol=2e-3, rtol=2e-3), f"mismatch: {max_err}"

    print("KERNEL_OK")
</pallas_src>

<mosaic_0001>
module attributes {stable_mosaic.version = 11 : i64} {
  func.func @_seprep_kernel(%arg0: i32, %arg1: memref<2x16x16x32xf32, #tpu.memory_space<vmem>>, %arg2: memref<32x128xf32, #tpu.memory_space<vmem>>, %arg3: memref<16x128xf32, #tpu.memory_space<vmem>>, %arg4: memref<9x16x128xf32, #tpu.memory_space<vmem>>, %arg5: memref<2x16x16x128xf32, #tpu.memory_space<vmem>>, %arg6: memref<2x18x16x128xf32, #tpu.memory_space<vmem>>) attributes {dimension_semantics = [#tpu.dimension_semantics<parallel>], iteration_bounds = array<i64: 2>, scalar_prefetch = 0 : i64, scratch_operands = 1 : i64, tpu.core_type = #tpu.core_type<tc>, window_params = [{transform_indices = @transform_0, window_bounds = array<i64: 2, 16, 16, 32>}, {pipeline_mode = #tpu.pipeline_mode<synchronous>, transform_indices = @transform_1, window_bounds = array<i64: 32, 128>}, {pipeline_mode = #tpu.pipeline_mode<synchronous>, transform_indices = @transform_2, window_bounds = array<i64: 16, 128>}, {pipeline_mode = #tpu.pipeline_mode<synchronous>, transform_indices = @transform_3, window_bounds = array<i64: 9, 16, 128>}, {transform_indices = @transform_4, window_bounds = array<i64: 2, 16, 16, 128>}]} {
    %c0 = arith.constant 0 : index
    %c0_0 = arith.constant 0 : index
    %c0_1 = arith.constant 0 : index
    %c0_2 = arith.constant 0 : index
    %0 = vector.load %arg1[%c0, %c0_0, %c0_1, %c0_2] : memref<2x16x16x32xf32, #tpu.memory_space<vmem>>, vector<2x16x16x32xf32>
    %1 = vector.shape_cast %0 : vector<2x16x16x32xf32> to vector<512x32xf32>
    %c0_3 = arith.constant 0 : index
    %c0_4 = arith.constant 0 : index
    %2 = vector.load %arg2[%c0_3, %c0_4] : memref<32x128xf32, #tpu.memory_space<vmem>>, vector<32x128xf32>
    %cst = arith.constant dense<0.000000e+00> : vector<512x128xf32>
    %3 = tpu.matmul %1, %2, %cst {dimension_numbers = #tpu.dot_dimension_numbers<[1], [0], [0], [1], [0, 0, 1, 1], [], []>} : vector<512x32xf32>, vector<32x128xf32>, vector<512x128xf32> -> vector<512x128xf32>
    %cst_5 = arith.constant 0.000000e+00 : f32
    %4 = vector.broadcast %cst_5 : f32 to vector<2x1x16x128xf32>
    %c0_6 = arith.constant 0 : index
    %c0_7 = arith.constant 0 : index
    %c0_8 = arith.constant 0 : index
    %c0_9 = arith.constant 0 : index
    %5 = vector.load %arg6[%c0_6, %c0_7, %c0_8, %c0_9] : memref<2x18x16x128xf32, #tpu.memory_space<vmem>>, vector<2x1x16x128xf32>
    tpu.vector_store %arg6[%c0_6, %c0_7, %c0_8, %c0_9], %4 {strides = array<i32>} : memref<2x18x16x128xf32, #tpu.memory_space<vmem>>, vector<2x1x16x128xf32>,
    %c0_10 = arith.constant 0 : index
    %c17 = arith.constant 17 : index
    %c0_11 = arith.constant 0 : index
    %c0_12 = arith.constant 0 : index
    %6 = vector.load %arg6[%c0_10, %c17, %c0_11, %c0_12] : memref<2x18x16x128xf32, #tpu.memory_space<vmem>>, vector<2x1x16x128xf32>
    tpu.vector_store %arg6[%c0_10, %c17, %c0_11, %c0_12], %4 {strides = array<i32>} : memref<2x18x16x128xf32, #tpu.memory_space<vmem>>, vector<2x1x16x128xf32>,
    %7 = vector.shape_cast %3 : vector<512x128xf32> to vector<2x16x16x128xf32>
    %c0_13 = arith.constant 0 : index
    %c1 = arith.constant 1 : index
    %c0_14 = arith.constant 0 : index
    %c0_15 = arith.constant 0 : index
    %8 = vector.load %arg6[%c0_13, %c1, %c0_14, %c0_15] : memref<2x18x16x128xf32, #tpu.memory_space<vmem>>, vector<2x16x16x128xf32>
    tpu.vector_store %arg6[%c0_13, %c1, %c0_14, %c0_15], %7 {strides = array<i32>} : memref<2x18x16x128xf32, #tpu.memory_space<vmem>>, vector<2x16x16x128xf32>,
    %c0_16 = arith.constant 0 : index
    %c0_17 = arith.constant 0 : index
    %9 = vector.load %arg3[%c0_16, %c0_17] : memref<16x128xf32, #tpu.memory_space<vmem>>, vector<16x128xf32>
    %c0_18 = arith.constant 0 : index
    %c0_19 = arith.constant 0 : index
    %c0_20 = arith.constant 0 : index
    %c0_21 = arith.constant 0 : index
    %10 = vector.load %arg6[%c0_18, %c0_19, %c0_20, %c0_21] : memref<2x18x16x128xf32, #tpu.memory_space<vmem>>, vector<1x8x16x128xf32>
    %11 = vector.shape_cast %10 : vector<1x8x16x128xf32> to vector<8x16x128xf32>
    %cst_22 = arith.constant 0.000000e+00 : f32
    %12 = vector.broadcast %cst_22 : f32 to vector<8x1x128xf32>
    %13 = vector.extract_strided_slice %11 {offsets = [0, 0, 0], sizes = [8, 15, 128], strides = [1, 1, 1]} : vector<8x16x128xf32> to vector<8x15x128xf32>
    %14 = tpu.concatenate %12, %13 in 1 : vector<8x1x128xf32>, vector<8x15x128xf32> -> vector<8x16x128xf32>
    %c0_23 = arith.constant 0 : index
    %c0_24 = arith.constant 0 : index
    %c0_25 = arith.constant 0 : index
    %15 = vector.load %arg4[%c0_23, %c0_24, %c0_25] : memref<9x16x128xf32, #tpu.memory_space<vmem>>, vector<1x16x128xf32>
    %16 = vector.shape_cast %15 : vector<1x16x128xf32> to vector<16x128xf32>
    %17 = vector.shape_cast %16 : vector<16x128xf32> to vector<1x16x128xf32>
    %18 = vector.broadcast %17 : vector<1x16x128xf32> to vector<8x16x128xf32>
    %19 = arith.mulf %14, %18 : vector<8x16x128xf32>
    %c1_26 = arith.constant 1 : index
    %c0_27 = arith.constant 0 : index
    %c0_28 = arith.constant 0 : index
    %20 = vector.load %arg4[%c1_26, %c0_27, %c0_28] : memref<9x16x128xf32, #tpu.memory_space<vmem>>, vector<1x16x128xf32>
    %21 = vector.shape_cast %20 : vector<1x16x128xf32> to vector<16x128xf32>
    %22 = vector.shape_cast %21 : vector<16x128xf32> to vector<1x16x128xf32>
    %23 = vector.broadcast %22 : vector<1x16x128xf32> to vector<8x16x128xf32>
    %24 = arith.mulf %11, %23 : vector<8x16x128xf32>
    %25 = arith.addf %19, %24 : vector<8x16x128xf32>
    %26 = vector.extract_strided_slice %11 {offsets = [0, 1, 0], sizes = [8, 15, 128], strides = [1, 1, 1]} : vector<8x16x128xf32> to vector<8x15x128xf32>
    %cst_29 = arith.constant 0.000000e+00 : f32
    %27 = vector.broadcast %cst_29 : f32 to vector<8x1x128xf32>
    %28 = tpu.concatenate %26, %27 in 1 : vector<8x15x128xf32>, vector<8x1x128xf32> -> vector<8x16x128xf32>
    %c2 = arith.constant 2 : index
    %c0_30 = arith.constant 0 : index
    %c0_31 = arith.constant 0 : index
    %29 = vector.load %arg4[%c2, %c0_30, %c0_31] : memref<9x16x128xf32, #tpu.memory_space<vmem>>, vector<1x16x128xf32>
    %30 = vector.shape_cast %29 : vector<1x16x128xf32> to vector<16x128xf32>
    %31 = vector.shape_cast %30 : vector<16x128xf32> to vector<1x16x128xf32>
    %32 = vector.broadcast %31 : vector<1x16x128xf32> to vector<8x16x128xf32>
    %33 = arith.mulf %28, %32 : vector<8x16x128xf32>
    %34 = arith.addf %25, %33 : vector<8x16x128xf32>
    %c0_32 = arith.constant 0 : index
    %c1_33 = arith.constant 1 : index
    %c0_34 = arith.constant 0 : index
    %c0_35 = arith.constant 0 : index
    %35 = vector.load %arg6[%c0_32, %c1_33, %c0_34, %c0_35] : memref<2x18x16x128xf32, #tpu.memory_space<vmem>>, vector<1x8x16x128xf32>
    %36 = vector.shape_cast %35 : vector<1x8x16x128xf32> to vector<8x16x128xf32>
    %cst_36 = arith.constant 0.000000e+00 : f32
    %37 = vector.broadcast %cst_36 : f32 to vector<8x1x128xf32>
    %38 = vector.extract_strided_slice %36 {offsets = [0, 0, 0], sizes = [8, 15, 128], strides = [1, 1, 1]} : vector<8x16x128xf32> to vector<8x15x128xf32>
    %39 = tpu.concatenate %37, %38 in 1 : vector<8x1x128xf32>, vector<8x15x128xf32> -> vector<8x16x128xf32>
    %c3 = arith.constant 3 : index
    %c0_37 = arith.constant 0 : index
    %c0_38 = arith.constant 0 : index
    %40 = vector.load %arg4[%c3, %c0_37, %c0_38] : memref<9x16x128xf32, #tpu.memory_space<vmem>>, vector<1x16x128xf32>
    %41 = vector.shape_cast %40 : vector<1x16x128xf32> to vector<16x128xf32>
    %42 = vector.shape_cast %41 : vector<16x128xf32> to vector<1x16x128xf32>
    %43 = vector.broadcast %42 : vector<1x16x128xf32> to vector<8x16x128xf32>
    %44 = arith.mulf %39, %43 : vector<8x16x128xf32>
    %45 = arith.addf %34, %44 : vector<8x16x128xf32>
    %c4 = arith.constant 4 : index
    %c0_39 = arith.constant 0 : index
    %c0_40 = arith.constant 0 : index
    %46 = vector.load %arg4[%c4, %c0_39, %c0_40] : memref<9x16x128xf32, #tpu.memory_space<vmem>>, vector<1x16x128xf32>
    %47 = vector.shape_cast %46 : vector<1x16x128xf32> to vector<16x128xf32>
    %48 = vector.shape_cast %47 : vector<16x128xf32> to vector<1x16x128xf32>
    %49 = vector.broadcast %48 : vector<1x16x128xf32> to vector<8x16x128xf32>
    %50 = arith.mulf %36, %49 : vector<8x16x128xf32>
    %51 = arith.addf %45, %50 : vector<8x16x128xf32>
    %52 = vector.extract_strided_slice %36 {offsets = [0, 1, 0], sizes = [8, 15, 128], strides = [1, 1, 1]} : vector<8x16x128xf32> to vector<8x15x128xf32>
    %cst_41 = arith.constant 0.000000e+00 : f32
    %53 = vector.broadcast %cst_41 : f32 to vector<8x1x128xf32>
    %54 = tpu.concatenate %52, %53 in 1 : vector<8x15x128xf32>, vector<8x1x128xf32> -> vector<8x16x128xf32>
    %c5 = arith.constant 5 : index
    %c0_42 = arith.constant 0 : index
    %c0_43 = arith.constant 0 : index
    %55 = vector.load %arg4[%c5, %c0_42, %c0_43] : memref<9x16x128xf32, #tpu.memory_space<vmem>>, vector<1x16x128xf32>
    %56 = vector.shape_cast %55 : vector<1x16x128xf32> to vector<16x128xf32>
    %57 = vector.shape_cast %56 : vector<16x128xf32> to vector<1x16x128xf32>
    %58 = vector.broadcast %57 : vector<1x16x128xf32> to vector<8x16x128xf32>
    %59 = arith.mulf %54, %58 : vector<8x16x128xf32>
    %60 = arith.addf %51, %59 : vector<8x16x128xf32>
    %c0_44 = arith.constant 0 : index
    %c2_45 = arith.constant 2 : index
    %c0_46 = arith.constant 0 : index
    %c0_47 = arith.constant 0 : index
    %61 = vector.load %arg6[%c0_44, %c2_45, %c0_46, %c0_47] : memref<2x18x16x128xf32, #tpu.memory_space<vmem>>, vector<1x8x16x128xf32>
    %62 = vector.shape_cast %61 : vector<1x8x16x128xf32> to vector<8x16x128xf32>
    %cst_48 = arith.constant 0.000000e+00 : f32
    %63 = vector.broadcast %cst_48 : f32 to vector<8x1x128xf32>
    %64 = vector.extract_strided_slice %62 {offsets = [0, 0, 0], sizes = [8, 15, 128], strides = [1, 1, 1]} : vector<8x16x128xf32> to vector<8x15x128xf32>
    %65 = tpu.concatenate %63, %64 in 1 : vector<8x1x128xf32>, vector<8x15x128xf32> -> vector<8x16x128xf32>
    %c6 = arith.constant 6 : index
    %c0_49 = arith.constant 0 : index
    %c0_50 = arith.constant 0 : index
    %66 = vector.load %arg4[%c6, %c0_49, %c0_50] : memref<9x16x128xf32, #tpu.memory_space<vmem>>, vector<1x16x128xf32>
    %67 = vector.shape_cast %66 : vector<1x16x128xf32> to vector<16x128xf32>
    %68 = vector.shape_cast %67 : vector<16x128xf32> to vector<1x16x128xf32>
    %69 = vector.broadcast %68 : vector<1x16x128xf32> to vector<8x16x128xf32>
    %70 = arith.mulf %65, %69 : vector<8x16x128xf32>
    %71 = arith.addf %60, %70 : vector<8x16x128xf32>
    %c7 = arith.constant 7 : index
    %c0_51 = arith.constant 0 : index
    %c0_52 = arith.constant 0 : index
    %72 = vector.load %arg4[%c7, %c0_51, %c0_52] : memref<9x16x128xf32, #tpu.memory_space<vmem>>, vector<1x16x128xf32>
    %73 = vector.shape_cast %72 : vector<1x16x128xf32> to vector<16x128xf32>
    %74 = vector.shape_cast %73 : vector<16x128xf32> to vector<1x16x128xf32>
    %75 = vector.broadcast %74 : vector<1x16x128xf32> to vector<8x16x128xf32>
    %76 = arith.mulf %62, %75 : vector<8x16x128xf32>
    %77 = arith.addf %71, %76 : vector<8x16x128xf32>
    %78 = vector.extract_strided_slice %62 {offsets = [0, 1, 0], sizes = [8, 15, 128], strides = [1, 1, 1]} : vector<8x16x128xf32> to vector<8x15x128xf32>
    %cst_53 = arith.constant 0.000000e+00 : f32
    %79 = vector.broadcast %cst_53 : f32 to vector<8x1x128xf32>
    %80 = tpu.concatenate %78, %79 in 1 : vector<8x15x128xf32>, vector<8x1x128xf32> -> vector<8x16x128xf32>
    %c8 = arith.constant 8 : index
    %c0_54 = arith.constant 0 : index
    %c0_55 = arith.constant 0 : index
    %81 = vector.load %arg4[%c8, %c0_54, %c0_55] : memref<9x16x128xf32, #tpu.memory_space<vmem>>, vector<1x16x128xf32>
    %82 = vector.shape_cast %81 : vector<1x16x128xf32> to vector<16x128xf32>
    %83 = vector.shape_cast %82 : vector<16x128xf32> to vector<1x16x128xf32>
    %84 = vector.broadcast %83 : vector<1x16x128xf32> to vector<8x16x128xf32>
    %85 = arith.mulf %80, %84 : vector<8x16x128xf32>
    %86 = arith.addf %77, %85 : vector<8x16x128xf32>
    %87 = vector.shape_cast %9 : vector<16x128xf32> to vector<1x16x128xf32>
    %88 = vector.broadcast %87 : vector<1x16x128xf32> to vector<8x16x128xf32>
    %89 = arith.addf %86, %88 : vector<8x16x128xf32>
    %c0_56 = arith.constant 0 : index
    %c0_57 = arith.constant 0 : index
    %c0_58 = arith.constant 0 : index
    %c0_59 = arith.constant 0 : index
    %90 = vector.load %arg5[%c0_56, %c0_57, %c0_58, %c0_59] : memref<2x16x16x128xf32, #tpu.memory_space<vmem>>, vector<1x8x16x128xf32>
    %91 = vector.shape_cast %90 : vector<1x8x16x128xf32> to vector<8x16x128xf32>
    %92 = vector.shape_cast %89 : vector<8x16x128xf32> to vector<1x8x16x128xf32>
    tpu.vector_store %arg5[%c0_56, %c0_57, %c0_58, %c0_59], %92 {strides = array<i32>} : memref<2x16x16x128xf32, #tpu.memory_space<vmem>>, vector<1x8x16x128xf32>,
    %c0_60 = arith.constant 0 : index
    %c8_61 = arith.constant 8 : index
    %c0_62 = arith.constant 0 : index
    %c0_63 = arith.constant 0 : index
    %93 = vector.load %arg6[%c0_60, %c8_61, %c0_62, %c0_63] : memref<2x18x16x128xf32, #tpu.memory_space<vmem>>, vector<1x8x16x128xf32>
    %94 = vector.shape_cast %93 : vector<1x8x16x128xf32> to vector<8x16x128xf32>
    %cst_64 = arith.constant 0.000000e+00 : f32
    %95 = vector.broadcast %cst_64 : f32 to vector<8x1x128xf32>
    %96 = vector.extract_strided_slice %94 {offsets = [0, 0, 0], sizes = [8, 15, 128], strides = [1, 1, 1]} : vector<8x16x128xf32> to vector<8x15x128xf32>
    %97 = tpu.concatenate %95, %96 in 1 : vector<8x1x128xf32>, vector<8x15x128xf32> -> vector<8x16x128xf32>
    %c0_65 = arith.constant 0 : index
    %c0_66 = arith.constant 0 : index
    %c0_67 = arith.constant 0 : index
    %98 = vector.load %arg4[%c0_65, %c0_66, %c0_67] : memref<9x16x128xf32, #tpu.memory_space<vmem>>, vector<1x16x128xf32>
    %99 = vector.shape_cast %98 : vector<1x16x128xf32> to vector<16x128xf32>
    %100 = vector.shape_cast %99 : vector<16x128xf32> to vector<1x16x128xf32>
    %101 = vector.broadcast %100 : vector<1x16x128xf32> to vector<8x16x128xf32>
    %102 = arith.mulf %97, %101 : vector<8x16x128xf32>
    %c1_68 = arith.constant 1 : index
    %c0_69 = arith.constant 0 : index
    %c0_70 = arith.constant 0 : index
    %103 = vector.load %arg4[%c1_68, %c0_69, %c0_70] : memref<9x16x128xf32, #tpu.memory_space<vmem>>, vector<1x16x128xf32>
    %104 = vector.shape_cast %103 : vector<1x16x128xf32> to vector<16x128xf32>
    %105 = vector.shape_cast %104 : vector<16x128xf32> to vector<1x16x128xf32>
    %106 = vector.broadcast %105 : vector<1x16x128xf32> to vector<8x16x128xf32>
    %107 = arith.mulf %94, %106 : vector<8x16x128xf32>
    %108 = arith.addf %102, %107 : vector<8x16x128xf32>
    %109 = vector.extract_strided_slice %94 {offsets = [0, 1, 0], sizes = [8, 15, 128], strides = [1, 1, 1]} : vector<8x16x128xf32> to vector<8x15x128xf32>
    %cst_71 = arith.constant 0.000000e+00 : f32
    %110 = vector.broadcast %cst_71 : f32 to vector<8x1x128xf32>
    %111 = tpu.concatenate %109, %110 in 1 : vector<8x15x128xf32>, vector<8x1x128xf32> -> vector<8x16x128xf32>
    %c2_72 = arith.constant 2 : index
    %c0_73 = arith.constant 0 : index
    %c0_74 = arith.constant 0 : index
    %112 = vector.load %arg4[%c2_72, %c0_73, %c0_74] : memref<9x16x128xf32, #tpu.memory_space<vmem>>, vector<1x16x128xf32>
    %113 = vector.shape_cast %112 : vector<1x16x128xf32> to vector<16x128xf32>
    %114 = vector.shape_cast %113 : vector<16x128xf32> to vector<1x16x128xf32>
    %115 = vector.broadcast %114 : vector<1x16x128xf32> to vector<8x16x128xf32>
    %116 = arith.mulf %111, %115 : vector<8x16x128xf32>
    %117 = arith.addf %108, %116 : vector<8x16x128xf32>
    %c0_75 = arith.constant 0 : index
    %c9 = arith.constant 9 : index
    %c0_76 = arith.constant 0 : index
    %c0_77 = arith.constant 0 : index
    %118 = vector.load %arg6[%c0_75, %c9, %c0_76, %c0_77] : memref<2x18x16x128xf32, #tpu.memory_space<vmem>>, vector<1x8x16x128xf32>
    %119 = vector.shape_cast %118 : vector<1x8x16x128xf32> to vector<8x16x128xf32>
    %cst_78 = arith.constant 0.000000e+00 : f32
    %120 = vector.broadcast %cst_78 : f32 to vector<8x1x128xf32>
    %121 = vector.extract_strided_slice %119 {offsets = [0, 0, 0], sizes = [8, 15, 128], strides = [1, 1, 1]} : vector<8x16x128xf32> to vector<8x15x128xf32>
    %122 = tpu.concatenate %120, %121 in 1 : vector<8x1x128xf32>, vector<8x15x128xf32> -> vector<8x16x128xf32>
    %c3_79 = arith.constant 3 : index
    %c0_80 = arith.constant 0 : index
    %c0_81 = arith.constant 0 : index
    %123 = vector.load %arg4[%c3_79, %c0_80, %c0_81] : memref<9x16x128xf32, #tpu.memory_space<vmem>>, vector<1x16x128xf32>
    %124 = vector.shape_cast %123 : vector<1x16x128xf32> to vector<16x128xf32>
    %125 = vector.shape_cast %124 : vector<16x128xf32> to vector<1x16x128xf32>
    %126 = vector.broadcast %125 : vector<1x16x128xf32> to vector<8x16x128xf32>
    %127 = arith.mulf %122, %126 : vector<8x16x128xf32>
    %128 = arith.addf %117, %127 : vector<8x16x128xf32>
    %c4_82 = arith.constant 4 : index
    %c0_83 = arith.constant 0 : index
    %c0_84 = arith.constant 0 : index
    %129 = vector.load %arg4[%c4_82, %c0_83, %c0_84] : memref<9x16x128xf32, #tpu.memory_space<vmem>>, vector<1x16x128xf32>
    %130 = vector.shape_cast %129 : vector<1x16x128xf32> to vector<16x128xf32>
    %131 = vector.shape_cast %130 : vector<16x128xf32> to vector<1x16x128xf32>
    %132 = vector.broadcast %131 : vector<1x16x128xf32> to vector<8x16x128xf32>
    %133 = arith.mulf %119, %132 : vector<8x16x128xf32>
    %134 = arith.addf %128, %133 : vector<8x16x128xf32>
    %135 = vector.extract_strided_slice %119 {offsets = [0, 1, 0], sizes = [8, 15, 128], strides = [1, 1, 1]} : vector<8x16x128xf32> to vector<8x15x128xf32>
    %cst_85 = arith.constant 0.000000e+00 : f32
    %136 = vector.broadcast %cst_85 : f32 to vector<8x1x128xf32>
    %137 = tpu.concatenate %135, %136 in 1 : vector<8x15x128xf32>, vector<8x1x128xf32> -> vector<8x16x128xf32>
    %c5_86 = arith.constant 5 : index
    %c0_87 = arith.constant 0 : index
    %c0_88 = arith.constant 0 : index
    %138 = vector.load %arg4[%c5_86, %c0_87, %c0_88] : memref<9x16x128xf32, #tpu.memory_space<vmem>>, vector<1x16x128xf32>
    %139 = vector.shape_cast %138 : vector<1x16x128xf32> to vector<16x128xf32>
    %140 = vector.shape_cast %139 : vector<16x128xf32> to vector<1x16x128xf32>
    %141 = vector.broadcast %140 : vector<1x16x128xf32> to vector<8x16x128xf32>
    %142 = arith.mulf %137, %141 : vector<8x16x128xf32>
    %143 = arith.addf %134, %142 : vector<8x16x128xf32>
    %c0_89 = arith.constant 0 : index
    %c10 = arith.constant 10 : index
    %c0_90 = arith.constant 0 : index
    %c0_91 = arith.constant 0 : index
    %144 = vector.load %arg6[%c0_89, %c10, %c0_90, %c0_91] : memref<2x18x16x128xf32, #tpu.memory_space<vmem>>, vector<1x8x16x128xf32>
    %145 = vector.shape_cast %144 : vector<1x8x16x128xf32> to vector<8x16x128xf32>
    %cst_92 = arith.constant 0.000000e+00 : f32
    %146 = vector.broadcast %cst_92 : f32 to vector<8x1x128xf32>
    %147 = vector.extract_strided_slice %145 {offsets = [0, 0, 0], sizes = [8, 15, 128], strides = [1, 1, 1]} : vector<8x16x128xf32> to vector<8x15x128xf32>
    %148 = tpu.concatenate %146, %147 in 1 : vector<8x1x128xf32>, vector<8x15x128xf32> -> vector<8x16x128xf32>
    %c6_93 = arith.constant 6 : index
    %c0_94 = arith.constant 0 : index
    %c0_95 = arith.constant 0 : index
    %149 = vector.load %arg4[%c6_93, %c0_94, %c0_95] : memref<9x16x128xf32, #tpu.memory_space<vmem>>, vector<1x16x128xf32>
    %150 = vector.shape_cast %149 : vector<1x16x128xf32> to vector<16x128xf32>
    %151 = vector.shape_cast %150 : vector<16x128xf32> to vector<1x16x128xf32>
    %152 = vector.broadcast %151 : vector<1x16x128xf32> to vector<8x16x128xf32>
    %153 = arith.mulf %148, %152 : vector<8x16x128xf32>
    %154 = arith.addf %143, %153 : vector<8x16x128xf32>
    %c7_96 = arith.constant 7 : index
    %c0_97 = arith.constant 0 : index
    %c0_98 = arith.constant 0 : index
    %155 = vector.load %arg4[%c7_96, %c0_97, %c0_98] : memref<9x16x128xf32, #tpu.memory_space<vmem>>, vector<1x16x128xf32>
    %156 = vector.shape_cast %155 : vector<1x16x128xf32> to vector<16x128xf32>
    %157 = vector.shape_cast %156 : vector<16x128xf32> to vector<1x16x128xf32>
    %158 = vector.broadcast %157 : vector<1x16x128xf32> to vector<8x16x128xf32>
    %159 = arith.mulf %145, %158 : vector<8x16x128xf32>
    %160 = arith.addf %154, %159 : vector<8x16x128xf32>
    %161 = vector.extract_strided_slice %145 {offsets = [0, 1, 0], sizes = [8, 15, 128], strides = [1, 1, 1]} : vector<8x16x128xf32> to vector<8x15x128xf32>
    %cst_99 = arith.constant 0.000000e+00 : f32
    %162 = vector.broadcast %cst_99 : f32 to vector<8x1x128xf32>
    %163 = tpu.concatenate %161, %162 in 1 : vector<8x15x128xf32>, vector<8x1x128xf32> -> vector<8x16x128xf32>
    %c8_100 = arith.constant 8 : index
    %c0_101 = arith.constant 0 : index
    %c0_102 = arith.constant 0 : index
    %164 = vector.load %arg4[%c8_100, %c0_101, %c0_102] : memref<9x16x128xf32, #tpu.memory_space<vmem>>, vector<1x16x128xf32>
    %165 = vector.shape_cast %164 : vector<1x16x128xf32> to vector<16x128xf32>
    %166 = vector.shape_cast %165 : vector<16x128xf32> to vector<1x16x128xf32>
    %167 = vector.broadcast %166 : vector<1x16x128xf32> to vector<8x16x128xf32>
    %168 = arith.mulf %163, %167 : vector<8x16x128xf32>
    %169 = arith.addf %160, %168 : vector<8x16x128xf32>
    %170 = vector.shape_cast %9 : vector<16x128xf32> to vector<1x16x128xf32>
    %171 = vector.broadcast %170 : vector<1x16x128xf32> to vector<8x16x128xf32>
    %172 = arith.addf %169, %171 : vector<8x16x128xf32>
    %c0_103 = arith.constant 0 : index
    %c8_104 = arith.constant 8 : index
    %c0_105 = arith.constant 0 : index
    %c0_106 = arith.constant 0 : index
    %173 = vector.load %arg5[%c0_103, %c8_104, %c0_105, %c0_106] : memref<2x16x16x128xf32, #tpu.memory_space<vmem>>, vector<1x8x16x128xf32>
    %174 = vector.shape_cast %173 : vector<1x8x16x128xf32> to vector<8x16x128xf32>
    %175 = vector.shape_cast %172 : vector<8x16x128xf32> to vector<1x8x16x128xf32>
    tpu.vector_store %arg5[%c0_103, %c8_104, %c0_105, %c0_106], %175 {strides = array<i32>} : memref<2x16x16x128xf32, #tpu.memory_space<vmem>>, vector<1x8x16x128xf32>,
    %c1_107 = arith.constant 1 : index
    %c0_108 = arith.constant 0 : index
    %c0_109 = arith.constant 0 : index
    %c0_110 = arith.constant 0 : index
    %176 = vector.load %arg6[%c1_107, %c0_108, %c0_109, %c0_110] : memref<2x18x16x128xf32, #tpu.memory_space<vmem>>, vector<1x8x16x128xf32>
    %177 = vector.shape_cast %176 : vector<1x8x16x128xf32> to vector<8x16x128xf32>
    %cst_111 = arith.constant 0.000000e+00 : f32
    %178 = vector.broadcast %cst_111 : f32 to vector<8x1x128xf32>
    %179 = vector.extract_strided_slice %177 {offsets = [0, 0, 0], sizes = [8, 15, 128], strides = [1, 1, 1]} : vector<8x16x128xf32> to vector<8x15x128xf32>
    %180 = tpu.concatenate %178, %179 in 1 : vector<8x1x128xf32>, vector<8x15x128xf32> -> vector<8x16x128xf32>
    %c0_112 = arith.constant 0 : index
    %c0_113 = arith.constant 0 : index
    %c0_114 = arith.constant 0 : index
    %181 = vector.load %arg4[%c0_112, %c0_113, %c0_114] : memref<9x16x128xf32, #tpu.memory_space<vmem>>, vector<1x16x128xf32>
    %182 = vector.shape_cast %181 : vector<1x16x128xf32> to vector<16x128xf32>
    %183 = vector.shape_cast %182 : vector<16x128xf32> to vector<1x16x128xf32>
    %184 = vector.broadcast %183 : vector<1x16x128xf32> to vector<8x16x128xf32>
    %185 = arith.mulf %180, %184 : vector<8x16x128xf32>
    %c1_115 = arith.constant 1 : index
    %c0_116 = arith.constant 0 : index
    %c0_117 = arith.constant 0 : index
    %186 = vector.load %arg4[%c1_115, %c0_116, %c0_117] : memref<9x16x128xf32, #tpu.memory_space<vmem>>, vector<1x16x128xf32>
    %187 = vector.shape_cast %186 : vector<1x16x128xf32> to vector<16x128xf32>
    %188 = vector.shape_cast %187 : vector<16x128xf32> to vector<1x16x128xf32>
    %189 = vector.broadcast %188 : vector<1x16x128xf32> to vector<8x16x128xf32>
    %190 = arith.mulf %177, %189 : vector<8x16x128xf32>
    %191 = arith.addf %185, %190 : vector<8x16x128xf32>
    %192 = vector.extract_strided_slice %177 {offsets = [0, 1, 0], sizes = [8, 15, 128], strides = [1, 1, 1]} : vector<8x16x128xf32> to vector<8x15x128xf32>
    %cst_118 = arith.constant 0.000000e+00 : f32
    %193 = vector.broadcast %cst_118 : f32 to vector<8x1x128xf32>
    %194 = tpu.concatenate %192, %193 in 1 : vector<8x15x128xf32>, vector<8x1x128xf32> -> vector<8x16x128xf32>
    %c2_119 = arith.constant 2 : index
    %c0_120 = arith.constant 0 : index
    %c0_121 = arith.constant 0 : index
    %195 = vector.load %arg4[%c2_119, %c0_120, %c0_121] : memref<9x16x128xf32, #tpu.memory_space<vmem>>, vector<1x16x128xf32>
    %196 = vector.shape_cast %195 : vector<1x16x128xf32> to vector<16x128xf32>
    %197 = vector.shape_cast %196 : vector<16x128xf32> to vector<1x16x128xf32>
    %198 = vector.broadcast %197 : vector<1x16x128xf32> to vector<8x16x128xf32>
    %199 = arith.mulf %194, %198 : vector<8x16x128xf32>
    %200 = arith.addf %191, %199 : vector<8x16x128xf32>
    %c1_122 = arith.constant 1 : index
    %c1_123 = arith.constant 1 : index
    %c0_124 = arith.constant 0 : index
    %c0_125 = arith.constant 0 : index
    %201 = vector.load %arg6[%c1_122, %c1_123, %c0_124, %c0_125] : memref<2x18x16x128xf32, #tpu.memory_space<vmem>>, vector<1x8x16x128xf32>
    %202 = vector.shape_cast %201 : vector<1x8x16x128xf32> to vector<8x16x128xf32>
    %cst_126 = arith.constant 0.000000e+00 : f32
    %203 = vector.broadcast %cst_126 : f32 to vector<8x1x128xf32>
    %204 = vector.extract_strided_slice %202 {offsets = [0, 0, 0], sizes = [8, 15, 128], strides = [1, 1, 1]} : vector<8x16x128xf32> to vector<8x15x128xf32>
    %205 = tpu.concatenate %203, %204 in 1 : vector<8x1x128xf32>, vector<8x15x128xf32> -> vector<8x16x128xf32>
    %c3_127 = arith.constant 3 : index
    %c0_128 = arith.constant 0 : index
    %c0_129 = arith.constant 0 : index
    %206 = vector.load %arg4[%c3_127, %c0_128, %c0_129] : memref<9x16x128xf32, #tpu.memory_space<vmem>>, vector<1x16x128xf32>
    %207 = vector.shape_cast %206 : vector<1x16x128xf32> to vector<16x128xf32>
    %208 = vector.shape_cast %207 : vector<16x128xf32> to vector<1x16x128xf32>
    %209 = vector.broadcast %208 : vector<1x16x128xf32> to vector<8x16x128xf32>
    %210 = arith.mulf %205, %209 : vector<8x16x128xf32>
    %211 = arith.addf %200, %210 : vector<8x16x128xf32>
    %c4_130 = arith.constant 4 : index
    %c0_131 = arith.constant 0 : index
    %c0_132 = arith.constant 0 : index
    %212 = vector.load %arg4[%c4_130, %c0_131, %c0_132] : memref<9x16x128xf32, #tpu.memory_space<vmem>>, vector<1x16x128xf32>
    %213 = vector.shape_cast %212 : vector<1x16x128xf32> to vector<16x128xf32>
    %214 = vector.shape_cast %213 : vector<16x128xf32> to vector<1x16x128xf32>
    %215 = vector.broadcast %214 : vector<1x16x128xf32> to vector<8x16x128xf32>
    %216 = arith.mulf %202, %215 : vector<8x16x128xf32>
    %217 = arith.addf %211, %216 : vector<8x16x128xf32>
    %218 = vector.extract_strided_slice %202 {offsets = [0, 1, 0], sizes = [8, 15, 128], strides = [1, 1, 1]} : vector<8x16x128xf32> to vector<8x15x128xf32>
    %cst_133 = arith.constant 0.000000e+00 : f32
    %219 = vector.broadcast %cst_133 : f32 to vector<8x1x128xf32>
    %220 = tpu.concatenate %218, %219 in 1 : vector<8x15x128xf32>, vector<8x1x128xf32> -> vector<8x16x128xf32>
    %c5_134 = arith.constant 5 : index
    %c0_135 = arith.constant 0 : index
    %c0_136 = arith.constant 0 : index
    %221 = vector.load %arg4[%c5_134, %c0_135, %c0_136] : memref<9x16x128xf32, #tpu.memory_space<vmem>>, vector<1x16x128xf32>
    %222 = vector.shape_cast %221 : vector<1x16x128xf32> to vector<16x128xf32>
    %223 = vector.shape_cast %222 : vector<16x128xf32> to vector<1x16x128xf32>
    %224 = vector.broadcast %223 : vector<1x16x128xf32> to vector<8x16x128xf32>
    %225 = arith.mulf %220, %224 : vector<8x16x128xf32>
    %226 = arith.addf %217, %225 : vector<8x16x128xf32>
    %c1_137 = arith.constant 1 : index
    %c2_138 = arith.constant 2 : index
    %c0_139 = arith.constant 0 : index
    %c0_140 = arith.constant 0 : index
    %227 = vector.load %arg6[%c1_137, %c2_138, %c0_139, %c0_140] : memref<2x18x16x128xf32, #tpu.memory_space<vmem>>, vector<1x8x16x128xf32>
    %228 = vector.shape_cast %227 : vector<1x8x16x128xf32> to vector<8x16x128xf32>
    %cst_141 = arith.constant 0.000000e+00 : f32
    %229 = vector.broadcast %cst_141 : f32 to vector<8x1x128xf32>
    %230 = vector.extract_strided_slice %228 {offsets = [0, 0, 0], sizes = [8, 15, 128], strides = [1, 1, 1]} : vector<8x16x128xf32> to vector<8x15x128xf32>
    %231 = tpu.concatenate %229, %230 in 1 : vector<8x1x128xf32>, vector<8x15x128xf32> -> vector<8x16x128xf32>
    %c6_142 = arith.constant 6 : index
    %c0_143 = arith.constant 0 : index
    %c0_144 = arith.constant 0 : index
    %232 = vector.load %arg4[%c6_142, %c0_143, %c0_144] : memref<9x16x128xf32, #tpu.memory_space<vmem>>, vector<1x16x128xf32>
    %233 = vector.shape_cast %232 : vector<1x16x128xf32> to vector<16x128xf32>
    %234 = vector.shape_cast %233 : vector<16x128xf32> to vector<1x16x128xf32>
    %235 = vector.broadcast %234 : vector<1x16x128xf32> to vector<8x16x128xf32>
    %236 = arith.mulf %231, %235 : vector<8x16x128xf32>
    %237 = arith.addf %226, %236 : vector<8x16x128xf32>
    %c7_145 = arith.constant 7 : index
    %c0_146 = arith.constant 0 : index
    %c0_147 = arith.constant 0 : index
    %238 = vector.load %arg4[%c7_145, %c0_146, %c0_147] : memref<9x16x128xf32, #tpu.memory_space<vmem>>, vector<1x16x128xf32>
    %239 = vector.shape_cast %238 : vector<1x16x128xf32> to vector<16x128xf32>
    %240 = vector.shape_cast %239 : vector<16x128xf32> to vector<1x16x128xf32>
    %241 = vector.broadcast %240 : vector<1x16x128xf32> to vector<8x16x128xf32>
    %242 = arith.mulf %228, %241 : vector<8x16x128xf32>
    %243 = arith.addf %237, %242 : vector<8x16x128xf32>
    %244 = vector.extract_strided_slice %228 {offsets = [0, 1, 0], sizes = [8, 15, 128], strides = [1, 1, 1]} : vector<8x16x128xf32> to vector<8x15x128xf32>
    %cst_148 = arith.constant 0.000000e+00 : f32
    %245 = vector.broadcast %cst_148 : f32 to vector<8x1x128xf32>
    %246 = tpu.concatenate %244, %245 in 1 : vector<8x15x128xf32>, vector<8x1x128xf32> -> vector<8x16x128xf32>
    %c8_149 = arith.constant 8 : index
    %c0_150 = arith.constant 0 : index
    %c0_151 = arith.constant 0 : index
    %247 = vector.load %arg4[%c8_149, %c0_150, %c0_151] : memref<9x16x128xf32, #tpu.memory_space<vmem>>, vector<1x16x128xf32>
    %248 = vector.shape_cast %247 : vector<1x16x128xf32> to vector<16x128xf32>
    %249 = vector.shape_cast %248 : vector<16x128xf32> to vector<1x16x128xf32>
    %250 = vector.broadcast %249 : vector<1x16x128xf32> to vector<8x16x128xf32>
    %251 = arith.mulf %246, %250 : vector<8x16x128xf32>
    %252 = arith.addf %243, %251 : vector<8x16x128xf32>
    %253 = vector.shape_cast %9 : vector<16x128xf32> to vector<1x16x128xf32>
    %254 = vector.broadcast %253 : vector<1x16x128xf32> to vector<8x16x128xf32>
    %255 = arith.addf %252, %254 : vector<8x16x128xf32>
    %c1_152 = arith.constant 1 : index
    %c0_153 = arith.constant 0 : index
    %c0_154 = arith.constant 0 : index
    %c0_155 = arith.constant 0 : index
    %256 = vector.load %arg5[%c1_152, %c0_153, %c0_154, %c0_155] : memref<2x16x16x128xf32, #tpu.memory_space<vmem>>, vector<1x8x16x128xf32>
    %257 = vector.shape_cast %256 : vector<1x8x16x128xf32> to vector<8x16x128xf32>
    %258 = vector.shape_cast %255 : vector<8x16x128xf32> to vector<1x8x16x128xf32>
    tpu.vector_store %arg5[%c1_152, %c0_153, %c0_154, %c0_155], %258 {strides = array<i32>} : memref<2x16x16x128xf32, #tpu.memory_space<vmem>>, vector<1x8x16x128xf32>,
    %c1_156 = arith.constant 1 : index
    %c8_157 = arith.constant 8 : index
    %c0_158 = arith.constant 0 : index
    %c0_159 = arith.constant 0 : index
    %259 = vector.load %arg6[%c1_156, %c8_157, %c0_158, %c0_159] : memref<2x18x16x128xf32, #tpu.memory_space<vmem>>, vector<1x8x16x128xf32>
    %260 = vector.shape_cast %259 : vector<1x8x16x128xf32> to vector<8x16x128xf32>
    %cst_160 = arith.constant 0.000000e+00 : f32
    %261 = vector.broadcast %cst_160 : f32 to vector<8x1x128xf32>
    %262 = vector.extract_strided_slice %260 {offsets = [0, 0, 0], sizes = [8, 15, 128], strides = [1, 1, 1]} : vector<8x16x128xf32> to vector<8x15x128xf32>
    %263 = tpu.concatenate %261, %262 in 1 : vector<8x1x128xf32>, vector<8x15x128xf32> -> vector<8x16x128xf32>
    %c0_161 = arith.constant 0 : index
    %c0_162 = arith.constant 0 : index
    %c0_163 = arith.constant 0 : index
    %264 = vector.load %arg4[%c0_161, %c0_162, %c0_163] : memref<9x16x128xf32, #tpu.memory_space<vmem>>, vector<1x16x128xf32>
    %265 = vector.shape_cast %264 : vector<1x16x128xf32> to vector<16x128xf32>
    %266 = vector.shape_cast %265 : vector<16x128xf32> to vector<1x16x128xf32>
    %267 = vector.broadcast %266 : vector<1x16x128xf32> to vector<8x16x128xf32>
    %268 = arith.mulf %263, %267 : vector<8x16x128xf32>
    %c1_164 = arith.constant 1 : index
    %c0_165 = arith.constant 0 : index
    %c0_166 = arith.constant 0 : index
    %269 = vector.load %arg4[%c1_164, %c0_165, %c0_166] : memref<9x16x128xf32, #tpu.memory_space<vmem>>, vector<1x16x128xf32>
    %270 = vector.shape_cast %269 : vector<1x16x128xf32> to vector<16x128xf32>
    %271 = vector.shape_cast %270 : vector<16x128xf32> to vector<1x16x128xf32>
    %272 = vector.broadcast %271 : vector<1x16x128xf32> to vector<8x16x128xf32>
    %273 = arith.mulf %260, %272 : vector<8x16x128xf32>
    %274 = arith.addf %268, %273 : vector<8x16x128xf32>
    %275 = vector.extract_strided_slice %260 {offsets = [0, 1, 0], sizes = [8, 15, 128], strides = [1, 1, 1]} : vector<8x16x128xf32> to vector<8x15x128xf32>
    %cst_167 = arith.constant 0.000000e+00 : f32
    %276 = vector.broadcast %cst_167 : f32 to vector<8x1x128xf32>
    %277 = tpu.concatenate %275, %276 in 1 : vector<8x15x128xf32>, vector<8x1x128xf32> -> vector<8x16x128xf32>
    %c2_168 = arith.constant 2 : index
    %c0_169 = arith.constant 0 : index
    %c0_170 = arith.constant 0 : index
    %278 = vector.load %arg4[%c2_168, %c0_169, %c0_170] : memref<9x16x128xf32, #tpu.memory_space<vmem>>, vector<1x16x128xf32>
    %279 = vector.shape_cast %278 : vector<1x16x128xf32> to vector<16x128xf32>
    %280 = vector.shape_cast %279 : vector<16x128xf32> to vector<1x16x128xf32>
    %281 = vector.broadcast %280 : vector<1x16x128xf32> to vector<8x16x128xf32>
    %282 = arith.mulf %277, %281 : vector<8x16x128xf32>
    %283 = arith.addf %274, %282 : vector<8x16x128xf32>
    %c1_171 = arith.constant 1 : index
    %c9_172 = arith.constant 9 : index
    %c0_173 = arith.constant 0 : index
    %c0_174 = arith.constant 0 : index
    %284 = vector.load %arg6[%c1_171, %c9_172, %c0_173, %c0_174] : memref<2x18x16x128xf32, #tpu.memory_space<vmem>>, vector<1x8x16x128xf32>
    %285 = vector.shape_cast %284 : vector<1x8x16x128xf32> to vector<8x16x128xf32>
    %cst_175 = arith.constant 0.000000e+00 : f32
    %286 = vector.broadcast %cst_175 : f32 to vector<8x1x128xf32>
    %287 = vector.extract_strided_slice %285 {offsets = [0, 0, 0], sizes = [8, 15, 128], strides = [1, 1, 1]} : vector<8x16x128xf32> to vector<8x15x128xf32>
    %288 = tpu.concatenate %286, %287 in 1 : vector<8x1x128xf32>, vector<8x15x128xf32> -> vector<8x16x128xf32>
    %c3_176 = arith.constant 3 : index
    %c0_177 = arith.constant 0 : index
    %c0_178 = arith.constant 0 : index
    %289 = vector.load %arg4[%c3_176, %c0_177, %c0_178] : memref<9x16x128xf32, #tpu.memory_space<vmem>>, vector<1x16x128xf32>
    %290 = vector.shape_cast %289 : vector<1x16x128xf32> to vector<16x128xf32>
    %291 = vector.shape_cast %290 : vector<16x128xf32> to vector<1x16x128xf32>
    %292 = vector.broadcast %291 : vector<1x16x128xf32> to vector<8x16x128xf32>
    %293 = arith.mulf %288, %292 : vector<8x16x128xf32>
    %294 = arith.addf %283, %293 : vector<8x16x128xf32>
    %c4_179 = arith.constant 4 : index
    %c0_180 = arith.constant 0 : index
    %c0_181 = arith.constant 0 : index
    %295 = vector.load %arg4[%c4_179, %c0_180, %c0_181] : memref<9x16x128xf32, #tpu.memory_space<vmem>>, vector<1x16x128xf32>
    %296 = vector.shape_cast %295 : vector<1x16x128xf32> to vector<16x128xf32>
    %297 = vector.shape_cast %296 : vector<16x128xf32> to vector<1x16x128xf32>
    %298 = vector.broadcast %297 : vector<1x16x128xf32> to vector<8x16x128xf32>
    %299 = arith.mulf %285, %298 : vector<8x16x128xf32>
    %300 = arith.addf %294, %299 : vector<8x16x128xf32>
    %301 = vector.extract_strided_slice %285 {offsets = [0, 1, 0], sizes = [8, 15, 128], strides = [1, 1, 1]} : vector<8x16x128xf32> to vector<8x15x128xf32>
    %cst_182 = arith.constant 0.000000e+00 : f32
    %302 = vector.broadcast %cst_182 : f32 to vector<8x1x128xf32>
    %303 = tpu.concatenate %301, %302 in 1 : vector<8x15x128xf32>, vector<8x1x128xf32> -> vector<8x16x128xf32>
    %c5_183 = arith.constant 5 : index
    %c0_184 = arith.constant 0 : index
    %c0_185 = arith.constant 0 : index
    %304 = vector.load %arg4[%c5_183, %c0_184, %c0_185] : memref<9x16x128xf32, #tpu.memory_space<vmem>>, vector<1x16x128xf32>
    %305 = vector.shape_cast %304 : vector<1x16x128xf32> to vector<16x128xf32>
    %306 = vector.shape_cast %305 : vector<16x128xf32> to vector<1x16x128xf32>
    %307 = vector.broadcast %306 : vector<1x16x128xf32> to vector<8x16x128xf32>
    %308 = arith.mulf %303, %307 : vector<8x16x128xf32>
    %309 = arith.addf %300, %308 : vector<8x16x128xf32>
    %c1_186 = arith.constant 1 : index
    %c10_187 = arith.constant 10 : index
    %c0_188 = arith.constant 0 : index
    %c0_189 = arith.constant 0 : index
    %310 = vector.load %arg6[%c1_186, %c10_187, %c0_188, %c0_189] : memref<2x18x16x128xf32, #tpu.memory_space<vmem>>, vector<1x8x16x128xf32>
    %311 = vector.shape_cast %310 : vector<1x8x16x128xf32> to vector<8x16x128xf32>
    %cst_190 = arith.constant 0.000000e+00 : f32
    %312 = vector.broadcast %cst_190 : f32 to vector<8x1x128xf32>
    %313 = vector.extract_strided_slice %311 {offsets = [0, 0, 0], sizes = [8, 15, 128], strides = [1, 1, 1]} : vector<8x16x128xf32> to vector<8x15x128xf32>
    %314 = tpu.concatenate %312, %313 in 1 : vector<8x1x128xf32>, vector<8x15x128xf32> -> vector<8x16x128xf32>
    %c6_191 = arith.constant 6 : index
    %c0_192 = arith.constant 0 : index
    %c0_193 = arith.constant 0 : index
    %315 = vector.load %arg4[%c6_191, %c0_192, %c0_193] : memref<9x16x128xf32, #tpu.memory_space<vmem>>, vector<1x16x128xf32>
    %316 = vector.shape_cast %315 : vector<1x16x128xf32> to vector<16x128xf32>
    %317 = vector.shape_cast %316 : vector<16x128xf32> to vector<1x16x128xf32>
    %318 = vector.broadcast %317 : vector<1x16x128xf32> to vector<8x16x128xf32>
    %319 = arith.mulf %314, %318 : vector<8x16x128xf32>
    %320 = arith.addf %309, %319 : vector<8x16x128xf32>
    %c7_194 = arith.constant 7 : index
    %c0_195 = arith.constant 0 : index
    %c0_196 = arith.constant 0 : index
    %321 = vector.load %arg4[%c7_194, %c0_195, %c0_196] : memref<9x16x128xf32, #tpu.memory_space<vmem>>, vector<1x16x128xf32>
    %322 = vector.shape_cast %321 : vector<1x16x128xf32> to vector<16x128xf32>
    %323 = vector.shape_cast %322 : vector<16x128xf32> to vector<1x16x128xf32>
    %324 = vector.broadcast %323 : vector<1x16x128xf32> to vector<8x16x128xf32>
    %325 = arith.mulf %311, %324 : vector<8x16x128xf32>
    %326 = arith.addf %320, %325 : vector<8x16x128xf32>
    %327 = vector.extract_strided_slice %311 {offsets = [0, 1, 0], sizes = [8, 15, 128], strides = [1, 1, 1]} : vector<8x16x128xf32> to vector<8x15x128xf32>
    %cst_197 = arith.constant 0.000000e+00 : f32
    %328 = vector.broadcast %cst_197 : f32 to vector<8x1x128xf32>
    %329 = tpu.concatenate %327, %328 in 1 : vector<8x15x128xf32>, vector<8x1x128xf32> -> vector<8x16x128xf32>
    %c8_198 = arith.constant 8 : index
    %c0_199 = arith.constant 0 : index
    %c0_200 = arith.constant 0 : index
    %330 = vector.load %arg4[%c8_198, %c0_199, %c0_200] : memref<9x16x128xf32, #tpu.memory_space<vmem>>, vector<1x16x128xf32>
    %331 = vector.shape_cast %330 : vector<1x16x128xf32> to vector<16x128xf32>
    %332 = vector.shape_cast %331 : vector<16x128xf32> to vector<1x16x128xf32>
    %333 = vector.broadcast %332 : vector<1x16x128xf32> to vector<8x16x128xf32>
    %334 = arith.mulf %329, %333 : vector<8x16x128xf32>
    %335 = arith.addf %326, %334 : vector<8x16x128xf32>
    %336 = vector.shape_cast %9 : vector<16x128xf32> to vector<1x16x128xf32>
    %337 = vector.broadcast %336 : vector<1x16x128xf32> to vector<8x16x128xf32>
    %338 = arith.addf %335, %337 : vector<8x16x128xf32>
    %c1_201 = arith.constant 1 : index
    %c8_202 = arith.constant 8 : index
    %c0_203 = arith.constant 0 : index
    %c0_204 = arith.constant 0 : index
    %339 = vector.load %arg5[%c1_201, %c8_202, %c0_203, %c0_204] : memref<2x16x16x128xf32, #tpu.memory_space<vmem>>, vector<1x8x16x128xf32>
    %340 = vector.shape_cast %339 : vector<1x8x16x128xf32> to vector<8x16x128xf32>
    %341 = vector.shape_cast %338 : vector<8x16x128xf32> to vector<1x8x16x128xf32>
    tpu.vector_store %arg5[%c1_201, %c8_202, %c0_203, %c0_204], %341 {strides = array<i32>} : memref<2x16x16x128xf32, #tpu.memory_space<vmem>>, vector<1x8x16x128xf32>,
    return
  }
  func.func @transform_0(%arg0: i32) -> (i32, i32, i32, i32) {
    %c0_i32 = arith.constant 0 : i32
    %c0_i32_0 = arith.constant 0 : i32
    %c0_i32_1 = arith.constant 0 : i32
    %c0_i32_2 = arith.constant 0 : i32
    return %arg0, %c0_i32, %c0_i32_0, %c0_i32_1 : i32, i32, i32, i32
  }
  func.func @transform_1(%arg0: i32) -> (i32, i32) {
    %c0_i32 = arith.constant 0 : i32
    %c0_i32_0 = arith.constant 0 : i32
    %c0_i32_1 = arith.constant 0 : i32
    return %c0_i32, %c0_i32_0 : i32, i32
  }
  func.func @transform_2(%arg0: i32) -> (i32, i32) {
    %c0_i32 = arith.constant 0 : i32
    %c0_i32_0 = arith.constant 0 : i32
    %c0_i32_1 = arith.constant 0 : i32
    return %c0_i32, %c0_i32_0 : i32, i32
  }
  func.func @transform_3(%arg0: i32) -> (i32, i32, i32) {
    %c0_i32 = arith.constant 0 : i32
    %c0_i32_0 = arith.constant 0 : i32
    %c0_i32_1 = arith.constant 0 : i32
    %c0_i32_2 = arith.constant 0 : i32
    return %c0_i32, %c0_i32_0, %c0_i32_1 : i32, i32, i32
  }
  func.func @transform_4(%arg0: i32) -> (i32, i32, i32, i32) {
    %c0_i32 = arith.constant 0 : i32
    %c0_i32_0 = arith.constant 0 : i32
    %c0_i32_1 = arith.constant 0 : i32
    %c0_i32_2 = arith.constant 0 : i32
    return %arg0, %c0_i32, %c0_i32_0, %c0_i32_1 : i32, i32, i32, i32
  }
}

</mosaic_0001>

<llo_original>
// kernel: seprep_forward.1
$region0: #{seprep_forward.1}
  #allocation0 [shape = 'u32[]', space=smem, size = 0x4, offset = 0x4, fixed_abs, tag = 'smem constant byte address 0x4 - core index']
  #allocation1 [shape = 'u32[144,128]{1,0:T(1,128)}', space=vmem, size = 0x12000, scoped, tag = 'internal scratch']
  #allocation2 [shape = 'f32[2,18,16,128]{3,2,1,0:T(8,128)}', space=vmem, size = 0x48000, scoped, tag = 'scratch operand']
  %s0 = inlined_call_operand.hbm [shape: f32[4,16,16,32], index: 0, kind: input, shape index: {}]
  %s1 = inlined_call_operand.vmem [shape: f32[32,128], index: 1, kind: input, shape index: {}]
  %s2 = inlined_call_operand.vmem [shape: f32[16,128], index: 2, kind: input, shape index: {}]
  %s3 = inlined_call_operand.vmem [shape: f32[9,16,128], index: 3, kind: input, shape index: {}]
  %s4 = inlined_call_operand.hbm [shape: f32[4,16,16,128], index: 4, kind: output, shape index: {}]
  %s5 = sld [smem:[#allocation0]]
  $region53: #{seprep_forward.1} parent=0
    _
  %s7 = ssub.s32 1, %s5
  %s8 = scalar_select 0, %s7, %s5
  $region1: #{seprep_forward.1} parent=0
    #allocation3 [shape = 'u8[524288]{0}', space=vmem, size = 0x80000, scoped, tag = 'input window, operand 0']
    #allocation4 [shape = 's32[2]{0}', space=sflag, size = 0x8, scoped, tag = 'scoped memory for seprep_forward.1']
    #allocation5 [shape = 's32[2]{0}', space=sflag, size = 0x8, scoped, tag = 'scoped memory for seprep_forward.1']
    #allocation6 [shape = 'u8[524288]{0}', space=vmem, size = 0x80000, scoped, tag = 'output window, operand 0']
    %9 = vsyncpa [#allocation4], 0
    %s10 = scalar_lea.sflag [#allocation4], 1
    %11 = vsyncpa %s10, 0
    %12 = vsyncpa [#allocation5], 0
    %s13 = scalar_lea.sflag [#allocation5], 1
    %14 = vsyncpa %s13, 0
    loop: start=0, step=1, limit=4
    $region2: #{seprep_forward.1} parent=1 // loop_pre_header
      _
    $region3: #{seprep_forward.1} parent=1 // loop_header
      %s16 = sphi 0, %s20
      %p17 = scmp.ge.s32.totalorder %s16, 4
      %s26 = sphi 0, %s28
      %s29 = sphi 0, %s26
      %s30 = sphi 0, %s29
      %s46 = sphi 0, %s30
      %s50 = sphi 0, %s50
      %s52 = sphi 0, %s50
      %s53 = sphi 0, %s52
      %s67 = sphi 0, %s53
      %s71 = sphi 0, %s71
      %s73 = sphi 0, %s71
      %s74 = sphi 0, %s73
      %s88 = sphi 0, %s74
      %s92 = sphi 0, %s92
      %s94 = sphi 0, %s92
      %s95 = sphi 0, %s94
      %s109 = sphi 0, %s95
      %s115 = sphi 0, %s117
      %s118 = sphi 0, %s115
      %s119 = sphi 0, %s118
      %s135 = sphi 0, %s119
    $region4: #{seprep_forward.1} parent=1 // loop_header_branch
      %19 = sbr.rel (%p17) target = $region8
    $region5: #{seprep_forward.1} parent=1 // loop_body
      %s21 = ssub.s32 %s16, 1
      %s22 = ssub.s32 %s16, 2
      %s23 = sadd.s32 %s16, 1
      %s24 = ssub.s32 %s16, %s23
      %p25 = scmp.eq.s32.totalorder %s24, 0
      %s27 = sadd.s32 %s26, 1
      %s28 = scalar_select %p25, %s26, %s27
      %p31 = pneg %p25
      %p32 = scmp.eq.s32.totalorder %s16, 1
      %p33 = por %p31, %p32
      %p34 = scmp.ne.s32.totalorder %s26, %s29
      %p35 = scmp.eq.s32.totalorder %s16, 0
      %p36 = por %p34, %p35
      %p37 = scmp.ne.s32.totalorder %s26, %s29
      %p38 = scmp.eq.s32.totalorder %s21, 1
      %p39 = por %p37, %p38
      %p40 = scmp.ne.s32.totalorder %s29, %s30
      %p41 = scmp.eq.s32.totalorder %s21, 0
      %p42 = por %p40, %p41
      %p43 = scmp.ne.s32.totalorder %s29, %s30
      %p44 = scmp.eq.s32.totalorder %s22, 1
      %p45 = por %p43, %p44
      %p47 = scmp.ne.s32.totalorder %s30, %s46
      %p48 = scmp.eq.s32.totalorder %s22, 0
      %p49 = por %p47, %p48
      %s51 = sadd.s32 %s50, 1
      %p54 = scmp.eq.s32.totalorder %s16, 1
      %p55 = scmp.ne.s32.totalorder %s50, %s52
      %p56 = scmp.eq.s32.totalorder %s16, 0
      %p57 = por %p55, %p56
      %p58 = scmp.ne.s32.totalorder %s50, %s52
      %p59 = scmp.eq.s32.totalorder %s21, 1
      %p60 = por %p58, %p59
      %p61 = scmp.ne.s32.totalorder %s52, %s53
      %p62 = scmp.eq.s32.totalorder %s21, 0
      %p63 = por %p61, %p62
      %p64 = scmp.ne.s32.totalorder %s52, %s53
      %p65 = scmp.eq.s32.totalorder %s22, 1
      %p66 = por %p64, %p65
      %p68 = scmp.ne.s32.totalorder %s53, %s67
      %p69 = scmp.eq.s32.totalorder %s22, 0
      %p70 = por %p68, %p69
      %s72 = sadd.s32 %s71, 1
      %p75 = scmp.eq.s32.totalorder %s16, 1
      %p76 = scmp.ne.s32.totalorder %s71, %s73
      %p77 = scmp.eq.s32.totalorder %s16, 0
      %p78 = por %p76, %p77
      %p79 = scmp.ne.s32.totalorder %s71, %s73
      %p80 = scmp.eq.s32.totalorder %s21, 1
      %p81 = por %p79, %p80
      %p82 = scmp.ne.s32.totalorder %s73, %s74
      %p83 = scmp.eq.s32.totalorder %s21, 0
      %p84 = por %p82, %p83
      %p85 = scmp.ne.s32.totalorder %s73, %s74
      %p86 = scmp.eq.s32.totalorder %s22, 1
      %p87 = por %p85, %p86
      %p89 = scmp.ne.s32.totalorder %s74, %s88
      %p90 = scmp.eq.s32.totalorder %s22, 0
      %p91 = por %p89, %p90
      %s93 = sadd.s32 %s92, 1
      %p96 = scmp.eq.s32.totalorder %s16, 1
      %p97 = scmp.ne.s32.totalorder %s92, %s94
      %p98 = scmp.eq.s32.totalorder %s16, 0
      %p99 = por %p97, %p98
      %p100 = scmp.ne.s32.totalorder %s92, %s94
      %p101 = scmp.eq.s32.totalorder %s21, 1
      %p102 = por %p100, %p101
      %p103 = scmp.ne.s32.totalorder %s94, %s95
      %p104 = scmp.eq.s32.totalorder %s21, 0
      %p105 = por %p103, %p104
      %p106 = scmp.ne.s32.totalorder %s94, %s95
      %p107 = scmp.eq.s32.totalorder %s22, 1
      %p108 = por %p106, %p107
      %p110 = scmp.ne.s32.totalorder %s95, %s109
      %p111 = scmp.eq.s32.totalorder %s22, 0
      %p112 = por %p110, %p111
      %s113 = ssub.s32 %s16, %s23
      %p114 = scmp.eq.s32.totalorder %s113, 0
      %s116 = sadd.s32 %s115, 1
      %s117 = scalar_select %p114, %s115, %s116
      %p120 = pneg %p114
      %p121 = scmp.eq.s32.totalorder %s16, 1
      %p122 = por %p120, %p121
      %p123 = scmp.ne.s32.totalorder %s115, %s118
      %p124 = scmp.eq.s32.totalorder %s16, 0
      %p125 = por %p123, %p124
      %p126 = scmp.ne.s32.totalorder %s115, %s118
      %p127 = scmp.eq.s32.totalorder %s21, 1
      %p128 = por %p126, %p127
      %p129 = scmp.ne.s32.totalorder %s118, %s119
      %p130 = scmp.eq.s32.totalorder %s21, 0
      %p131 = por %p129, %p130
      %p132 = scmp.ne.s32.totalorder %s118, %s119
      %p133 = scmp.eq.s32.totalorder %s22, 1
      %p134 = por %p132, %p133
      %p136 = scmp.ne.s32.totalorder %s119, %s135
      %p137 = scmp.eq.s32.totalorder %s22, 0
      %p138 = por %p136, %p137
      %p139 = scmp.le.s32.totalorder 1, %s16
      %p140 = scmp.lt.s32.totalorder %s16, 3
      %p141 = pnand %p139, %p140
      %p142 = pneg %p141
      // Predicated region
      $region9: #{seprep_forward.1} parent=5 // pred_check
        _
      $region10: #{seprep_forward.1} parent=5 // pred_check_branch
        %144 = sbr.rel (%p141) target = $region12
      $region11: #{seprep_forward.1} parent=5 // pred_region
        %s145 = ssub.s32 %s16, 1
        // Predicated region
        $region13: #{seprep_forward.1} parent=11 // pred_check
          %p146 = pneg %p63
        $region14: #{seprep_forward.1} parent=11 // pred_check_branch
          %148 = sbr.rel (%p146) target = $region16
        $region15: #{seprep_forward.1} parent=11 // pred_region
          _
        $region16: #{seprep_forward.1} parent=11 // pred_fallthru
          _
        // Predicated region
        $region17: #{seprep_forward.1} parent=11 // pred_check
          %p149 = pneg %p84
        $region18: #{seprep_forward.1} parent=11 // pred_check_branch
          %151 = sbr.rel (%p149) target = $region20
        $region19: #{seprep_forward.1} parent=11 // pred_region
          _
        $region20: #{seprep_forward.1} parent=11 // pred_fallthru
          _
        // Predicated region
        $region21: #{seprep_forward.1} parent=11 // pred_check
          %p152 = pneg %p105
        $region22: #{seprep_forward.1} parent=11 // pred_check_branch
          %154 = sbr.rel (%p152) target = $region24
        $region23: #{seprep_forward.1} parent=11 // pred_region
          _
        $region24: #{seprep_forward.1} parent=11 // pred_fallthru
          _
      $region12: #{seprep_forward.1} parent=5 // pred_fallthru
        _
      %p155 = scmp.lt.s32.totalorder %s16, 2
      // Predicated region
      $region25: #{seprep_forward.1} parent=5 // pred_check
        %p156 = pneg %p155
      $region26: #{seprep_forward.1} parent=5 // pred_check_branch
        %158 = sbr.rel (%p156) target = $region28
      $region27: #{seprep_forward.1} parent=5 // pred_region
        // Predicated region
        $region29: #{seprep_forward.1} parent=27 // pred_check
          %p159 = pneg %p36
        $region30: #{seprep_forward.1} parent=27 // pred_check_branch
          %161 = sbr.rel (%p159) target = $region32
        $region31: #{seprep_forward.1} parent=27 // pred_region
          %s162 = sand.u32 %s26, 1
          %s163 = scalar_lea.sflag [#allocation4], %s162
          %s164 = sand.u32 %s26, 1
          %s165 = smul.addr %s164, 512
          %s166 = scalar_lea.vmem [#allocation3], %s165
          %s167 = smul.u32 2, %s16
          %s169 = ssub.s32 8192, 8192
          %170 = vsyncadd %s163, %s169
          %s171 = smul.addr %s167, 32
          %s172 = smul.addr %s171, 128
          %s173 = scalar_lea.hbm %s0, %s172
          %s174 = sshll.u32 %s166, 4
          %s175 = int_to_ptr.vmem [resolvable:$true] %s174
          %180 = dma.hbm_to_vmem [thread:$0]  %s173, 8192, %s175, %s163, 128, 128, 8
        $region32: #{seprep_forward.1} parent=27 // pred_fallthru
          _
      $region28: #{seprep_forward.1} parent=5 // pred_fallthru
        _
      %p181 = scmp.le.s32.totalorder 1, %s16
      %p182 = scmp.lt.s32.totalorder %s16, 3
      %p183 = pnand %p181, %p182
      %p184 = pneg %p183
      // Predicated region
      $region33: #{seprep_forward.1} parent=5 // pred_check
        _
      $region34: #{seprep_forward.1} parent=5 // pred_check_branch
        %186 = sbr.rel (%p183) target = $region36
      $region35: #{seprep_forward.1} parent=5 // pred_region
        %s187 = ssub.s32 %s16, 1
        %s188 = sand.u32 %s29, 1
        %s189 = scalar_lea.sflag [#allocation4], %s188
        %s190 = sand.u32 %s29, 1
        %s191 = smul.addr %s190, 512
        %s192 = scalar_lea.vmem [#allocation3], %s191
        // Predicated region
        $region37: #{seprep_forward.1} parent=35 // pred_check
          %p193 = pneg %p42
        $region38: #{seprep_forward.1} parent=35 // pred_check_branch
          %195 = sbr.rel (%p193) target = $region40
        $region39: #{seprep_forward.1} parent=35 // pred_region
          %196 = dma.done %s189, 8192
        $region40: #{seprep_forward.1} parent=35 // pred_fallthru
          _
        %s197 = sand.u32 %s29, 1
        %s198 = scalar_lea.sflag [#allocation4], %s197
        %s199 = sand.u32 %s29, 1
        %s200 = smul.addr %s199, 512
        %s201 = scalar_lea.vmem [#allocation3], %s200
        %p202 = pneg %p42
        %p203 = pneg %p39
        %p204 = pneg %p63
        %p205 = pneg %p60
        %p206 = pneg %p84
        %p207 = pneg %p81
        %p208 = pneg %p105
        %p209 = pneg %p102
        %p210 = pneg %p131
        %p211 = pneg %p128
        %s212 = sand.u32 %s118, 1
        %s213 = scalar_lea.sflag [#allocation5], %s212
        %s214 = sand.u32 %s118, 1
        %s215 = smul.addr %s214, 512
        %s216 = scalar_lea.vmem [#allocation6], %s215
        %s217 = smul.u32 2, %s21
        %s218 = smul.u32 2, %s21
        %v219 = vld [vmem:[%s192] sm:$0xff]
        %v220 = vld [vmem:[%s192 + $0x8] sm:$0xff]
        %v221 = vld [vmem:[%s192 + $0x10] sm:$0xff]
        %v222 = vld [vmem:[%s192 + $0x18] sm:$0xff]
        %v223 = vld [vmem:[%s192 + $0x20] sm:$0xff]
        %v224 = vld [vmem:[%s192 + $0x28] sm:$0xff]
        %v225 = vld [vmem:[%s192 + $0x30] sm:$0xff]
        %v226 = vld [vmem:[%s192 + $0x38] sm:$0xff]
        %v227 = vld [vmem:[%s192 + $0x40] sm:$0xff]
        %v228 = vld [vmem:[%s192 + $0x48] sm:$0xff]
        %v229 = vld [vmem:[%s192 + $0x50] sm:$0xff]
        %v230 = vld [vmem:[%s192 + $0x58] sm:$0xff]
        %v231 = vld [vmem:[%s192 + $0x60] sm:$0xff]
        %v232 = vld [vmem:[%s192 + $0x68] sm:$0xff]
        %v233 = vld [vmem:[%s192 + $0x70] sm:$0xff]
        %v234 = vld [vmem:[%s192 + $0x78] sm:$0xff]
        %v235 = vld [vmem:[%s192 + $0x80] sm:$0xff]
        %v236 = vld [vmem:[%s192 + $0x88] sm:$0xff]
        %v237 = vld [vmem:[%s192 + $0x90] sm:$0xff]
        %v238 = vld [vmem:[%s192 + $0x98] sm:$0xff]
        %v239 = vld [vmem:[%s192 + $0xa0] sm:$0xff]
        %v240 = vld [vmem:[%s192 + $0xa8] sm:$0xff]
        %v241 = vld [vmem:[%s192 + $0xb0] sm:$0xff]
        %v242 = vld [vmem:[%s192 + $0xb8] sm:$0xff]
        %v243 = vld [vmem:[%s192 + $0xc0] sm:$0xff]
        %v244 = vld [vmem:[%s192 + $0xc8] sm:$0xff]
        %v245 = vld [vmem:[%s192 + $0xd0] sm:$0xff]
        %v246 = vld [vmem:[%s192 + $0xd8] sm:$0xff]
        %v247 = vld [vmem:[%s192 + $0xe0] sm:$0xff]
        %v248 = vld [vmem:[%s192 + $0xe8] sm:$0xff]
        %v249 = vld [vmem:[%s192 + $0xf0] sm:$0xff]
        %v250 = vld [vmem:[%s192 + $0xf8] sm:$0xff]
        %v251 = vld [vmem:[%s192 + $0x100] sm:$0xff]
        %v252 = vld [vmem:[%s192 + $0x108] sm:$0xff]
        %v253 = vld [vmem:[%s192 + $0x110] sm:$0xff]
        %v254 = vld [vmem:[%s192 + $0x118] sm:$0xff]
        %v255 = vld [vmem:[%s192 + $0x120] sm:$0xff]
        %v256 = vld [vmem:[%s192 + $0x128] sm:$0xff]
        %v257 = vld [vmem:[%s192 + $0x130] sm:$0xff]
        %v258 = vld [vmem:[%s192 + $0x138] sm:$0xff]
        %v259 = vld [vmem:[%s192 + $0x140] sm:$0xff]
        %v260 = vld [vmem:[%s192 + $0x148] sm:$0xff]
        %v261 = vld [vmem:[%s192 + $0x150] sm:$0xff]
        %v262 = vld [vmem:[%s192 + $0x158] sm:$0xff]
        %v263 = vld [vmem:[%s192 + $0x160] sm:$0xff]
        %v264 = vld [vmem:[%s192 + $0x168] sm:$0xff]
        %v265 = vld [vmem:[%s192 + $0x170] sm:$0xff]
        %v266 = vld [vmem:[%s192 + $0x178] sm:$0xff]
        %v267 = vld [vmem:[%s192 + $0x180] sm:$0xff]
        %v268 = vld [vmem:[%s192 + $0x188] sm:$0xff]
        %v269 = vld [vmem:[%s192 + $0x190] sm:$0xff]
        %v270 = vld [vmem:[%s192 + $0x198] sm:$0xff]
        %v271 = vld [vmem:[%s192 + $0x1a0] sm:$0xff]
        %v272 = vld [vmem:[%s192 + $0x1a8] sm:$0xff]
        %v273 = vld [vmem:[%s192 + $0x1b0] sm:$0xff]
        %v274 = vld [vmem:[%s192 + $0x1b8] sm:$0xff]
        %v275 = vld [vmem:[%s192 + $0x1c0] sm:$0xff]
        %v276 = vld [vmem:[%s192 + $0x1c8] sm:$0xff]
        %v277 = vld [vmem:[%s192 + $0x1d0] sm:$0xff]
        %v278 = vld [vmem:[%s192 + $0x1d8] sm:$0xff]
        %v279 = vld [vmem:[%s192 + $0x1e0] sm:$0xff]
        %v280 = vld [vmem:[%s192 + $0x1e8] sm:$0xff]
        %v281 = vld [vmem:[%s192 + $0x1f0] sm:$0xff]
        %v282 = vld [vmem:[%s192 + $0x1f8] sm:$0xff]
        %v283 = vld [vmem:[%s1] sm:$0xff]
        %v284 = vld [vmem:[%s1 + $0x8] sm:$0xff]
        %v285 = vld [vmem:[%s1 + $0x10] sm:$0xff]
        %v286 = vld [vmem:[%s1 + $0x18] sm:$0xff]
        %vm287 = vcmask 261120
        %v289 = vsel %vm287, %v219, 0
        %v292 = vsel %vm287, %v220, 0
        %v295 = vsel %vm287, %v221, 0
        %v298 = vsel %vm287, %v222, 0
        %v301 = vsel %vm287, %v223, 0
        %v304 = vsel %vm287, %v224, 0
        %v307 = vsel %vm287, %v225, 0
        %v310 = vsel %vm287, %v226, 0
        %v313 = vsel %vm287, %v227, 0
        %v316 = vsel %vm287, %v228, 0
        %v319 = vsel %vm287, %v229, 0
        %v322 = vsel %vm287, %v230, 0
        %v325 = vsel %vm287, %v231, 0
        %v328 = vsel %vm287, %v232, 0
        %v331 = vsel %vm287, %v233, 0
        %v334 = vsel %vm287, %v234, 0
        %v337 = vsel %vm287, %v235, 0
        %v340 = vsel %vm287, %v236, 0
        %v343 = vsel %vm287, %v237, 0
        %v346 = vsel %vm287, %v238, 0
        %v349 = vsel %vm287, %v239, 0
        %v352 = vsel %vm287, %v240, 0
        %v355 = vsel %vm287, %v241, 0
        %v358 = vsel %vm287, %v242, 0
        %v361 = vsel %vm287, %v243, 0
        %v364 = vsel %vm287, %v244, 0
        %v367 = vsel %vm287, %v245, 0
        %v370 = vsel %vm287, %v246, 0
        %v373 = vsel %vm287, %v247, 0
        %v376 = vsel %vm287, %v248, 0
        %v379 = vsel %vm287, %v249, 0
        %v382 = vsel %vm287, %v250, 0
        %v385 = vsel %vm287, %v251, 0
        %v388 = vsel %vm287, %v252, 0
        %v391 = vsel %vm287, %v253, 0
        %v394 = vsel %vm287, %v254, 0
        %v397 = vsel %vm287, %v255, 0
        %v400 = vsel %vm287, %v256, 0
        %v403 = vsel %vm287, %v257, 0
        %v406 = vsel %vm287, %v258, 0
        %v409 = vsel %vm287, %v259, 0
        %v412 = vsel %vm287, %v260, 0
        %v415 = vsel %vm287, %v261, 0
        %v418 = vsel %vm287, %v262, 0
        %v421 = vsel %vm287, %v263, 0
        %v424 = vsel %vm287, %v264, 0
        %v427 = vsel %vm287, %v265, 0
        %v430 = vsel %vm287, %v266, 0
        %v433 = vsel %vm287, %v267, 0
        %v436 = vsel %vm287, %v268, 0
        %v439 = vsel %vm287, %v269, 0
        %v442 = vsel %vm287, %v270, 0
        %v445 = vsel %vm287, %v271, 0
        %v448 = vsel %vm287, %v272, 0
        %v451 = vsel %vm287, %v273, 0
        %v454 = vsel %vm287, %v274, 0
        %v457 = vsel %vm287, %v275, 0
        %v460 = vsel %vm287, %v276, 0
        %v463 = vsel %vm287, %v277, 0
        %v466 = vsel %vm287, %v278, 0
        %v469 = vsel %vm287, %v279, 0
        %v472 = vsel %vm287, %v280, 0
        %v475 = vsel %vm287, %v281, 0
        %v478 = vsel %vm287, %v282, 0
        %480 = vmatprep.subr.mxu0 0.0
        %481 = vmatpush1.msra.mxu0 0.0
        %482 = vmatprep.subr.mxu0 0.0
        %483 = vmatpush1.msra.mxu0 0.0
        %484 = vmatprep.subr.mxu0 0.0
        %485 = vmatpush1.msra.mxu0 0.0
        %486 = vmatprep.subr.mxu0 0.0
        %487 = vmatpush1.msra.mxu0 0.0
        %488 = vmatprep.subr.mxu0 0.0
        %489 = vmatpush1.msra.mxu0 0.0
        %490 = vmatprep.subr.mxu0 0.0
        %491 = vmatpush1.msra.mxu0 0.0
        %492 = vmatprep.subr.mxu0 0.0
        %493 = vmatpush1.msra.mxu0 0.0
        %494 = vmatprep.subr.mxu0 0.0
        %495 = vmatpush1.msra.mxu0 0.0
        %496 = vmatprep.subr.mxu0 0.0
        %497 = vmatpush1.msra.mxu0 0.0
        %498 = vmatprep.subr.mxu0 0.0
        %499 = vmatpush1.msra.mxu0 0.0
        %500 = vmatprep.subr.mxu0 0.0
        %501 = vmatpush1.msra.mxu0 0.0
        %502 = vmatprep.subr.mxu0 0.0
        %503 = vmatpush1.msra.mxu0 0.0
        %504 = vmatprep.subr.mxu0 0.0
        %505 = vmatpush1.msra.mxu0 %v286
        %506 = vmatprep.subr.mxu0 0.0
        %507 = vmatpush1.msra.mxu0 %v285
        %508 = vmatprep.subr.mxu0 0.0
        %509 = vmatpush1.msra.mxu0 %v284
        %510 = vmatprep.subr.mxu0 0.0
        %511 = vmatpush1.msra.mxu0 %v283
        %512 = vmatprep.subr.mxu0 0.0
        %513 = vmatpush2.msra.mxu0 0.0
        %514 = vmatprep.subr.mxu0 0.0
        %515 = vmatpush2.msra.mxu0 0.0
        %516 = vmatprep.subr.mxu0 0.0
        %517 = vmatpush2.msra.mxu0 0.0
        %518 = vmatprep.subr.mxu0 0.0
        %519 = vmatpush2.msra.mxu0 0.0
        %520 = vmatprep.subr.mxu0 0.0
        %521 = vmatpush2.msra.mxu0 0.0
        %522 = vmatprep.subr.mxu0 0.0
        %523 = vmatpush2.msra.mxu0 0.0
        %524 = vmatprep.subr.mxu0 0.0
        %525 = vmatpush2.msra.mxu0 0.0
        %526 = vmatprep.subr.mxu0 0.0
        %527 = vmatpush2.msra.mxu0 0.0
        %528 = vmatprep.subr.mxu0 0.0
        %529 = vmatpush2.msra.mxu0 0.0
        %530 = vmatprep.subr.mxu0 0.0
        %531 = vmatpush2.msra.mxu0 0.0
        %532 = vmatprep.subr.mxu0 0.0
        %533 = vmatpush2.msra.mxu0 0.0
        %534 = vmatprep.subr.mxu0 0.0
        %535 = vmatpush2.msra.mxu0 0.0
        %536 = vmatprep.subr.mxu0 0.0
        %537 = vmatpush2.msra.mxu0 0.0
        %538 = vmatprep.subr.mxu0 0.0
        %539 = vmatpush2.msra.mxu0 0.0
        %540 = vmatprep.subr.mxu0 0.0
        %541 = vmatpush2.msra.mxu0 0.0
        %542 = vmatprep.subr.mxu0 0.0
        %543 = vmatpush2.msra.mxu0 0.0
        %544 = vmatprep.mubr.f32.mxu0 0.0
        %545 = vmatmul.mubr.f32.gmra.mxu0 %v289
        %v546 = vpop.f32.mrf.mxu0
        %v547 = vadd.f32 0.0, %v546
        %v548 = vpop.f32.mrf.mxu0
        %549 = vmatprep.mubr.f32.mxu0 0.0
        %550 = vmatmul.mubr.f32.gmra.mxu0 %v292
        %v551 = vpop.f32.mrf.mxu0
        %v552 = vadd.f32 0.0, %v551
        %v553 = vpop.f32.mrf.mxu0
        %554 = vmatprep.mubr.f32.mxu0 0.0
        %555 = vmatmul.mubr.f32.gmra.mxu0 %v295
        %v556 = vpop.f32.mrf.mxu0
        %v557 = vadd.f32 0.0, %v556
        %v558 = vpop.f32.mrf.mxu0
        %559 = vmatprep.mubr.f32.mxu0 0.0
        %560 = vmatmul.mubr.f32.gmra.mxu0 %v298
        %v561 = vpop.f32.mrf.mxu0
        %v562 = vadd.f32 0.0, %v561
        %v563 = vpop.f32.mrf.mxu0
        %564 = vmatprep.mubr.f32.mxu0 0.0
        %565 = vmatmul.mubr.f32.gmra.mxu0 %v301
        %v566 = vpop.f32.mrf.mxu0
        %v567 = vadd.f32 0.0, %v566
        %v568 = vpop.f32.mrf.mxu0
        %569 = vmatprep.mubr.f32.mxu0 0.0
        %570 = vmatmul.mubr.f32.gmra.mxu0 %v304
        %v571 = vpop.f32.mrf.mxu0
        %v572 = vadd.f32 0.0, %v571
        %v573 = vpop.f32.mrf.mxu0
        %574 = vmatprep.mubr.f32.mxu0 0.0
        %575 = vmatmul.mubr.f32.gmra.mxu0 %v307
        %v576 = vpop.f32.mrf.mxu0
        %v577 = vadd.f32 0.0, %v576
        %v578 = vpop.f32.mrf.mxu0
        %579 = vmatprep.mubr.f32.mxu0 0.0
        %580 = vmatmul.mubr.f32.gmra.mxu0 %v310
        %v581 = vpop.f32.mrf.mxu0
        %v582 = vadd.f32 0.0, %v581
        %v583 = vpop.f32.mrf.mxu0
        %584 = vmatprep.mubr.f32.mxu0 0.0
        %585 = vmatmul.mubr.f32.gmra.mxu0 %v313
        %v586 = vpop.f32.mrf.mxu0
        %v587 = vadd.f32 0.0, %v586
        %v588 = vpop.f32.mrf.mxu0
        %589 = vmatprep.mubr.f32.mxu0 0.0
        %590 = vmatmul.mubr.f32.gmra.mxu0 %v316
        %v591 = vpop.f32.mrf.mxu0
        %v592 = vadd.f32 0.0, %v591
        %v593 = vpop.f32.mrf.mxu0
        %594 = vmatprep.mubr.f32.mxu0 0.0
        %595 = vmatmul.mubr.f32.gmra.mxu0 %v319
        %v596 = vpop.f32.mrf.mxu0
        %v597 = vadd.f32 0.0, %v596
        %v598 = vpop.f32.mrf.mxu0
        %599 = vmatprep.mubr.f32.mxu0 0.0
        %600 = vmatmul.mubr.f32.gmra.mxu0 %v322
        %v601 = vpop.f32.mrf.mxu0
        %v602 = vadd.f32 0.0, %v601
        %v603 = vpop.f32.mrf.mxu0
        %604 = vmatprep.mubr.f32.mxu0 0.0
        %605 = vmatmul.mubr.f32.gmra.mxu0 %v325
        %v606 = vpop.f32.mrf.mxu0
        %v607 = vadd.f32 0.0, %v606
        %v608 = vpop.f32.mrf.mxu0
        %609 = vmatprep.mubr.f32.mxu0 0.0
        %610 = vmatmul.mubr.f32.gmra.mxu0 %v328
        %v611 = vpop.f32.mrf.mxu0
        %v612 = vadd.f32 0.0, %v611
        %v613 = vpop.f32.mrf.mxu0
        %614 = vmatprep.mubr.f32.mxu0 0.0
        %615 = vmatmul.mubr.f32.gmra.mxu0 %v331
        %v616 = vpop.f32.mrf.mxu0
        %v617 = vadd.f32 0.0, %v616
        %v618 = vpop.f32.mrf.mxu0
        %619 = vmatprep.mubr.f32.mxu0 0.0
        %620 = vmatmul.mubr.f32.gmra.mxu0 %v334
        %v621 = vpop.f32.mrf.mxu0
        %v622 = vadd.f32 0.0, %v621
        %v623 = vpop.f32.mrf.mxu0
        %624 = vmatprep.mubr.f32.mxu0 0.0
        %625 = vmatmul.mubr.f32.gmra.mxu0 %v337
        %v626 = vpop.f32.mrf.mxu0
        %v627 = vadd.f32 0.0, %v626
        %v628 = vpop.f32.mrf.mxu0
        %629 = vmatprep.mubr.f32.mxu0 0.0
        %630 = vmatmul.mubr.f32.gmra.mxu0 %v340
        %v631 = vpop.f32.mrf.mxu0
        %v632 = vadd.f32 0.0, %v631
        %v633 = vpop.f32.mrf.mxu0
        %634 = vmatprep.mubr.f32.mxu0 0.0
        %635 = vmatmul.mubr.f32.gmra.mxu0 %v343
        %v636 = vpop.f32.mrf.mxu0
        %v637 = vadd.f32 0.0, %v636
        %v638 = vpop.f32.mrf.mxu0
        %639 = vmatprep.mubr.f32.mxu0 0.0
        %640 = vmatmul.mubr.f32.gmra.mxu0 %v346
        %v641 = vpop.f32.mrf.mxu0
        %v642 = vadd.f32 0.0, %v641
        %v643 = vpop.f32.mrf.mxu0
        %644 = vmatprep.mubr.f32.mxu0 0.0
        %645 = vmatmul.mubr.f32.gmra.mxu0 %v349
        %v646 = vpop.f32.mrf.mxu0
        %v647 = vadd.f32 0.0, %v646
        %v648 = vpop.f32.mrf.mxu0
        %649 = vmatprep.mubr.f32.mxu0 0.0
        %650 = vmatmul.mubr.f32.gmra.mxu0 %v352
        %v651 = vpop.f32.mrf.mxu0
        %v652 = vadd.f32 0.0, %v651
        %v653 = vpop.f32.mrf.mxu0
        %654 = vmatprep.mubr.f32.mxu0 0.0
        %655 = vmatmul.mubr.f32.gmra.mxu0 %v355
        %v656 = vpop.f32.mrf.mxu0
        %v657 = vadd.f32 0.0, %v656
        %v658 = vpop.f32.mrf.mxu0
        %659 = vmatprep.mubr.f32.mxu0 0.0
        %660 = vmatmul.mubr.f32.gmra.mxu0 %v358
        %v661 = vpop.f32.mrf.mxu0
        %v662 = vadd.f32 0.0, %v661
        %v663 = vpop.f32.mrf.mxu0
        %664 = vmatprep.mubr.f32.mxu0 0.0
        %665 = vmatmul.mubr.f32.gmra.mxu0 %v361
        %v666 = vpop.f32.mrf.mxu0
        %v667 = vadd.f32 0.0, %v666
        %v668 = vpop.f32.mrf.mxu0
        %669 = vmatprep.mubr.f32.mxu0 0.0
        %670 = vmatmul.mubr.f32.gmra.mxu0 %v364
        %v671 = vpop.f32.mrf.mxu0
        %v672 = vadd.f32 0.0, %v671
        %v673 = vpop.f32.mrf.mxu0
        %674 = vmatprep.mubr.f32.mxu0 0.0
        %675 = vmatmul.mubr.f32.gmra.mxu0 %v367
        %v676 = vpop.f32.mrf.mxu0
        %v677 = vadd.f32 0.0, %v676
        %v678 = vpop.f32.mrf.mxu0
        %679 = vmatprep.mubr.f32.mxu0 0.0
        %680 = vmatmul.mubr.f32.gmra.mxu0 %v370
        %v681 = vpop.f32.mrf.mxu0
        %v682 = vadd.f32 0.0, %v681
        %v683 = vpop.f32.mrf.mxu0
        %684 = vmatprep.mubr.f32.mxu0 0.0
        %685 = vmatmul.mubr.f32.gmra.mxu0 %v373
        %v686 = vpop.f32.mrf.mxu0
        %v687 = vadd.f32 0.0, %v686
        %v688 = vpop.f32.mrf.mxu0
        %689 = vmatprep.mubr.f32.mxu0 0.0
        %690 = vmatmul.mubr.f32.gmra.mxu0 %v376
        %v691 = vpop.f32.mrf.mxu0
        %v692 = vadd.f32 0.0, %v691
        %v693 = vpop.f32.mrf.mxu0
        %694 = vmatprep.mubr.f32.mxu0 0.0
        %695 = vmatmul.mubr.f32.gmra.mxu0 %v379
        %v696 = vpop.f32.mrf.mxu0
        %v697 = vadd.f32 0.0, %v696
        %v698 = vpop.f32.mrf.mxu0
        %699 = vmatprep.mubr.f32.mxu0 0.0
        %700 = vmatmul.mubr.f32.gmra.mxu0 %v382
        %v701 = vpop.f32.mrf.mxu0
        %v702 = vadd.f32 0.0, %v701
        %v703 = vpop.f32.mrf.mxu0
        %704 = vmatprep.mubr.f32.mxu0 0.0
        %705 = vmatmul.mubr.f32.gmra.mxu0 %v385
        %v706 = vpop.f32.mrf.mxu0
        %v707 = vadd.f32 0.0, %v706
        %v708 = vpop.f32.mrf.mxu0
        %709 = vmatprep.mubr.f32.mxu0 0.0
        %710 = vmatmul.mubr.f32.gmra.mxu0 %v388
        %v711 = vpop.f32.mrf.mxu0
        %v712 = vadd.f32 0.0, %v711
        %v713 = vpop.f32.mrf.mxu0
        %714 = vmatprep.mubr.f32.mxu0 0.0
        %715 = vmatmul.mubr.f32.gmra.mxu0 %v391
        %v716 = vpop.f32.mrf.mxu0
        %v717 = vadd.f32 0.0, %v716
        %v718 = vpop.f32.mrf.mxu0
        %719 = vmatprep.mubr.f32.mxu0 0.0
        %720 = vmatmul.mubr.f32.gmra.mxu0 %v394
        %v721 = vpop.f32.mrf.mxu0
        %v722 = vadd.f32 0.0, %v721
        %v723 = vpop.f32.mrf.mxu0
        %724 = vmatprep.mubr.f32.mxu0 0.0
        %725 = vmatmul.mubr.f32.gmra.mxu0 %v397
        %v726 = vpop.f32.mrf.mxu0
        %v727 = vadd.f32 0.0, %v726
        %v728 = vpop.f32.mrf.mxu0
        %729 = vmatprep.mubr.f32.mxu0 0.0
        %730 = vmatmul.mubr.f32.gmra.mxu0 %v400
        %v731 = vpop.f32.mrf.mxu0
        %v732 = vadd.f32 0.0, %v731
        %v733 = vpop.f32.mrf.mxu0
        %734 = vmatprep.mubr.f32.mxu0 0.0
        %735 = vmatmul.mubr.f32.gmra.mxu0 %v403
        %v736 = vpop.f32.mrf.mxu0
        %v737 = vadd.f32 0.0, %v736
        %v738 = vpop.f32.mrf.mxu0
        %739 = vmatprep.mubr.f32.mxu0 0.0
        %740 = vmatmul.mubr.f32.gmra.mxu0 %v406
        %v741 = vpop.f32.mrf.mxu0
        %v742 = vadd.f32 0.0, %v741
        %v743 = vpop.f32.mrf.mxu0
        %744 = vmatprep.mubr.f32.mxu0 0.0
        %745 = vmatmul.mubr.f32.gmra.mxu0 %v409
        %v746 = vpop.f32.mrf.mxu0
        %v747 = vadd.f32 0.0, %v746
        %v748 = vpop.f32.mrf.mxu0
        %749 = vmatprep.mubr.f32.mxu0 0.0
        %750 = vmatmul.mubr.f32.gmra.mxu0 %v412
        %v751 = vpop.f32.mrf.mxu0
        %v752 = vadd.f32 0.0, %v751
        %v753 = vpop.f32.mrf.mxu0
        %754 = vmatprep.mubr.f32.mxu0 0.0
        %755 = vmatmul.mubr.f32.gmra.mxu0 %v415
        %v756 = vpop.f32.mrf.mxu0
        %v757 = vadd.f32 0.0, %v756
        %v758 = vpop.f32.mrf.mxu0
        %759 = vmatprep.mubr.f32.mxu0 0.0
        %760 = vmatmul.mubr.f32.gmra.mxu0 %v418
        %v761 = vpop.f32.mrf.mxu0
        %v762 = vadd.f32 0.0, %v761
        %v763 = vpop.f32.mrf.mxu0
        %764 = vmatprep.mubr.f32.mxu0 0.0
        %765 = vmatmul.mubr.f32.gmra.mxu0 %v421
        %v766 = vpop.f32.mrf.mxu0
        %v767 = vadd.f32 0.0, %v766
        %v768 = vpop.f32.mrf.mxu0
        %769 = vmatprep.mubr.f32.mxu0 0.0
        %770 = vmatmul.mubr.f32.gmra.mxu0 %v424
        %v771 = vpop.f32.mrf.mxu0
        %v772 = vadd.f32 0.0, %v771
        %v773 = vpop.f32.mrf.mxu0
        %774 = vmatprep.mubr.f32.mxu0 0.0
        %775 = vmatmul.mubr.f32.gmra.mxu0 %v427
        %v776 = vpop.f32.mrf.mxu0
        %v777 = vadd.f32 0.0, %v776
        %v778 = vpop.f32.mrf.mxu0
        %779 = vmatprep.mubr.f32.mxu0 0.0
        %780 = vmatmul.mubr.f32.gmra.mxu0 %v430
        %v781 = vpop.f32.mrf.mxu0
        %v782 = vadd.f32 0.0, %v781
        %v783 = vpop.f32.mrf.mxu0
        %784 = vmatprep.mubr.f32.mxu0 0.0
        %785 = vmatmul.mubr.f32.gmra.mxu0 %v433
        %v786 = vpop.f32.mrf.mxu0
        %v787 = vadd.f32 0.0, %v786
        %v788 = vpop.f32.mrf.mxu0
        %789 = vmatprep.mubr.f32.mxu0 0.0
        %790 = vmatmul.mubr.f32.gmra.mxu0 %v436
        %v791 = vpop.f32.mrf.mxu0
        %v792 = vadd.f32 0.0, %v791
        %v793 = vpop.f32.mrf.mxu0
        %794 = vmatprep.mubr.f32.mxu0 0.0
        %795 = vmatmul.mubr.f32.gmra.mxu0 %v439
        %v796 = vpop.f32.mrf.mxu0
        %v797 = vadd.f32 0.0, %v796
        %v798 = vpop.f32.mrf.mxu0
        %799 = vmatprep.mubr.f32.mxu0 0.0
        %800 = vmatmul.mubr.f32.gmra.mxu0 %v442
        %v801 = vpop.f32.mrf.mxu0
        %v802 = vadd.f32 0.0, %v801
        %v803 = vpop.f32.mrf.mxu0
        %804 = vmatprep.mubr.f32.mxu0 0.0
        %805 = vmatmul.mubr.f32.gmra.mxu0 %v445
        %v806 = vpop.f32.mrf.mxu0
        %v807 = vadd.f32 0.0, %v806
        %v808 = vpop.f32.mrf.mxu0
        %809 = vmatprep.mubr.f32.mxu0 0.0
        %810 = vmatmul.mubr.f32.gmra.mxu0 %v448
        %v811 = vpop.f32.mrf.mxu0
        %v812 = vadd.f32 0.0, %v811
        %v813 = vpop.f32.mrf.mxu0
        %814 = vmatprep.mubr.f32.mxu0 0.0
        %815 = vmatmul.mubr.f32.gmra.mxu0 %v451
        %v816 = vpop.f32.mrf.mxu0
        %v817 = vadd.f32 0.0, %v816
        %v818 = vpop.f32.mrf.mxu0
        %819 = vmatprep.mubr.f32.mxu0 0.0
        %820 = vmatmul.mubr.f32.gmra.mxu0 %v454
        %v821 = vpop.f32.mrf.mxu0
        %v822 = vadd.f32 0.0, %v821
        %v823 = vpop.f32.mrf.mxu0
        %824 = vmatprep.mubr.f32.mxu0 0.0
        %825 = vmatmul.mubr.f32.gmra.mxu0 %v457
        %v826 = vpop.f32.mrf.mxu0
        %v827 = vadd.f32 0.0, %v826
        %v828 = vpop.f32.mrf.mxu0
        %829 = vmatprep.mubr.f32.mxu0 0.0
        %830 = vmatmul.mubr.f32.gmra.mxu0 %v460
        %v831 = vpop.f32.mrf.mxu0
        %v832 = vadd.f32 0.0, %v831
        %v833 = vpop.f32.mrf.mxu0
        %834 = vmatprep.mubr.f32.mxu0 0.0
        %835 = vmatmul.mubr.f32.gmra.mxu0 %v463
        %v836 = vpop.f32.mrf.mxu0
        %v837 = vadd.f32 0.0, %v836
        %v838 = vpop.f32.mrf.mxu0
        %839 = vmatprep.mubr.f32.mxu0 0.0
        %840 = vmatmul.mubr.f32.gmra.mxu0 %v466
        %v841 = vpop.f32.mrf.mxu0
        %v842 = vadd.f32 0.0, %v841
        %v843 = vpop.f32.mrf.mxu0
        %844 = vmatprep.mubr.f32.mxu0 0.0
        %845 = vmatmul.mubr.f32.gmra.mxu0 %v469
        %v846 = vpop.f32.mrf.mxu0
        %v847 = vadd.f32 0.0, %v846
        %v848 = vpop.f32.mrf.mxu0
        %849 = vmatprep.mubr.f32.mxu0 0.0
        %850 = vmatmul.mubr.f32.gmra.mxu0 %v472
        %v851 = vpop.f32.mrf.mxu0
        %v852 = vadd.f32 0.0, %v851
        %v853 = vpop.f32.mrf.mxu0
        %854 = vmatprep.mubr.f32.mxu0 0.0
        %855 = vmatmul.mubr.f32.gmra.mxu0 %v475
        %v856 = vpop.f32.mrf.mxu0
        %v857 = vadd.f32 0.0, %v856
        %v858 = vpop.f32.mrf.mxu0
        %859 = vmatprep.mubr.f32.mxu0 0.0
        %860 = vmatmul.mubr.f32.gmra.mxu0 %v478
        %v861 = vpop.f32.mrf.mxu0
        %v862 = vadd.f32 0.0, %v861
        %v863 = vpop.f32.mrf.mxu0
        %864 = vdwg.mxu0
        %865 = vst [vmem:[#allocation2] sm:$0xff] 0.0
        %866 = vst [vmem:[#allocation2 + $0x8] sm:$0xff] 0.0
        %867 = vst [vmem:[#allocation2 + $0x120] sm:$0xff] 0.0
        %868 = vst [vmem:[#allocation2 + $0x128] sm:$0xff] 0.0
        %s869 = scalar_lea.vmem [#allocation2], 272
        %870 = vst [vmem:[%s869] sm:$0xff] 0.0
        %871 = vst [vmem:[%s869 + $0x8] sm:$0xff] 0.0
        %872 = vst [vmem:[%s869 + $0x120] sm:$0xff] 0.0
        %873 = vst [vmem:[%s869 + $0x128] sm:$0xff] 0.0
        %s874 = scalar_lea.vmem [#allocation2], 16
        %875 = vst [vmem:[%s874] sm:$0xff] %v547
        %876 = vst [vmem:[%s874 + $0x8] sm:$0xff] %v552
        %877 = vst [vmem:[%s874 + $0x10] sm:$0xff] %v557
        %878 = vst [vmem:[%s874 + $0x18] sm:$0xff] %v562
        %879 = vst [vmem:[%s874 + $0x20] sm:$0xff] %v567
        %880 = vst [vmem:[%s874 + $0x28] sm:$0xff] %v572
        %881 = vst [vmem:[%s874 + $0x30] sm:$0xff] %v577
        %882 = vst [vmem:[%s874 + $0x38] sm:$0xff] %v582
        %883 = vst [vmem:[%s874 + $0x40] sm:$0xff] %v587
        %884 = vst [vmem:[%s874 + $0x48] sm:$0xff] %v592
        %885 = vst [vmem:[%s874 + $0x50] sm:$0xff] %v597
        %886 = vst [vmem:[%s874 + $0x58] sm:$0xff] %v602
        %887 = vst [vmem:[%s874 + $0x60] sm:$0xff] %v607
        %888 = vst [vmem:[%s874 + $0x68] sm:$0xff] %v612
        %889 = vst [vmem:[%s874 + $0x70] sm:$0xff] %v617
        %890 = vst [vmem:[%s874 + $0x78] sm:$0xff] %v622
        %891 = vst [vmem:[%s874 + $0x80] sm:$0xff] %v627
        %892 = vst [vmem:[%s874 + $0x88] sm:$0xff] %v632
        %893 = vst [vmem:[%s874 + $0x90] sm:$0xff] %v637
        %894 = vst [vmem:[%s874 + $0x98] sm:$0xff] %v642
        %895 = vst [vmem:[%s874 + $0xa0] sm:$0xff] %v647
        %896 = vst [vmem:[%s874 + $0xa8] sm:$0xff] %v652
        %897 = vst [vmem:[%s874 + $0xb0] sm:$0xff] %v657
        %898 = vst [vmem:[%s874 + $0xb8] sm:$0xff] %v662
        %899 = vst [vmem:[%s874 + $0xc0] sm:$0xff] %v667
        %900 = vst [vmem:[%s874 + $0xc8] sm:$0xff] %v672
        %901 = vst [vmem:[%s874 + $0xd0] sm:$0xff] %v677
        %902 = vst [vmem:[%s874 + $0xd8] sm:$0xff] %v682
        %903 = vst [vmem:[%s874 + $0xe0] sm:$0xff] %v687
        %904 = vst [vmem:[%s874 + $0xe8] sm:$0xff] %v692
        %905 = vst [vmem:[%s874 + $0xf0] sm:$0xff] %v697
        %906 = vst [vmem:[%s874 + $0xf8] sm:$0xff] %v702
        %907 = vst [vmem:[%s874 + $0x120] sm:$0xff] %v707
        %908 = vst [vmem:[%s874 + $0x128] sm:$0xff] %v712
        %909 = vst [vmem:[%s874 + $0x130] sm:$0xff] %v717
        %910 = vst [vmem:[%s874 + $0x138] sm:$0xff] %v722
        %911 = vst [vmem:[%s874 + $0x140] sm:$0xff] %v727
        %912 = vst [vmem:[%s874 + $0x148] sm:$0xff] %v732
        %913 = vst [vmem:[%s874 + $0x150] sm:$0xff] %v737
        %914 = vst [vmem:[%s874 + $0x158] sm:$0xff] %v742
        %915 = vst [vmem:[%s874 + $0x160] sm:$0xff] %v747
        %916 = vst [vmem:[%s874 + $0x168] sm:$0xff] %v752
        %917 = vst [vmem:[%s874 + $0x170] sm:$0xff] %v757
        %918 = vst [vmem:[%s874 + $0x178] sm:$0xff] %v762
        %919 = vst [vmem:[%s874 + $0x180] sm:$0xff] %v767
        %920 = vst [vmem:[%s874 + $0x188] sm:$0xff] %v772
        %921 = vst [vmem:[%s874 + $0x190] sm:$0xff] %v777
        %922 = vst [vmem:[%s874 + $0x198] sm:$0xff] %v782
        %923 = vst [vmem:[%s874 + $0x1a0] sm:$0xff] %v787
        %924 = vst [vmem:[%s874 + $0x1a8] sm:$0xff] %v792
        %925 = vst [vmem:[%s874 + $0x1b0] sm:$0xff] %v797
        %926 = vst [vmem:[%s874 + $0x1b8] sm:$0xff] %v802
        %927 = vst [vmem:[%s874 + $0x1c0] sm:$0xff] %v807
        %928 = vst [vmem:[%s874 + $0x1c8] sm:$0xff] %v812
        %929 = vst [vmem:[%s874 + $0x1d0] sm:$0xff] %v817
        %930 = vst [vmem:[%s874 + $0x1d8] sm:$0xff] %v822
        %931 = vst [vmem:[%s874 + $0x1e0] sm:$0xff] %v827
        %932 = vst [vmem:[%s874 + $0x1e8] sm:$0xff] %v832
        %933 = vst [vmem:[%s874 + $0x1f0] sm:$0xff] %v837
        %934 = vst [vmem:[%s874 + $0x1f8] sm:$0xff] %v842
        %935 = vst [vmem:[%s874 + $0x200] sm:$0xff] %v847
        %936 = vst [vmem:[%s874 + $0x208] sm:$0xff] %v852
        %937 = vst [vmem:[%s874 + $0x210] sm:$0xff] %v857
        %938 = vst [vmem:[%s874 + $0x218] sm:$0xff] %v862
        %v939 = vld [vmem:[%s2] sm:$0xff]
        %v940 = vld [vmem:[%s2 + $0x8] sm:$0xff]
        %v941 = vld [vmem:[#allocation2] sm:$0xff]
        %v942 = vld [vmem:[#allocation2 + $0x8] sm:$0xff]
        %v943 = vld [vmem:[#allocation2 + $0x10] sm:$0xff]
        %v944 = vld [vmem:[#allocation2 + $0x18] sm:$0xff]
        %v945 = vld [vmem:[#allocation2 + $0x20] sm:$0xff]
        %v946 = vld [vmem:[#allocation2 + $0x28] sm:$0xff]
        %v947 = vld [vmem:[#allocation2 + $0x30] sm:$0xff]
        %v948 = vld [vmem:[#allocation2 + $0x38] sm:$0xff]
        %v949 = vld [vmem:[#allocation2 + $0x40] sm:$0xff]
        %v950 = vld [vmem:[#allocation2 + $0x48] sm:$0xff]
        %v951 = vld [vmem:[#allocation2 + $0x50] sm:$0xff]
        %v952 = vld [vmem:[#allocation2 + $0x58] sm:$0xff]
        %v953 = vld [vmem:[#allocation2 + $0x60] sm:$0xff]
        %v954 = vld [vmem:[#allocation2 + $0x68] sm:$0xff]
        %v955 = vld [vmem:[#allocation2 + $0x70] sm:$0xff]
        %v956 = vld [vmem:[#allocation2 + $0x78] sm:$0xff]
        %vm973 = vcmask 1040384
        %v974 = vrot.slane %v941, 7
        %v975 = vrot.slane %v942, 7
        %v976 = vsel %vm973, %v974, %v975
        %v977 = vrot.slane %v943, 7
        %v978 = vrot.slane %v944, 7
        %v979 = vsel %vm973, %v977, %v978
        %v980 = vrot.slane %v945, 7
        %v981 = vrot.slane %v946, 7
        %v982 = vsel %vm973, %v980, %v981
        %v983 = vrot.slane %v947, 7
        %v984 = vrot.slane %v948, 7
        %v985 = vsel %vm973, %v983, %v984
        %v986 = vrot.slane %v949, 7
        %v987 = vrot.slane %v950, 7
        %v988 = vsel %vm973, %v986, %v987
        %v989 = vrot.slane %v951, 7
        %v990 = vrot.slane %v952, 7
        %v991 = vsel %vm973, %v989, %v990
        %v992 = vrot.slane %v953, 7
        %v993 = vrot.slane %v954, 7
        %v994 = vsel %vm973, %v992, %v993
        %v995 = vrot.slane %v955, 7
        %v996 = vrot.slane %v956, 7
        %v997 = vsel %vm973, %v995, %v996
        %v1014 = vsel %vm973, 0.0, %v974
        %v1015 = vsel %vm973, 0.0, %v977
        %v1016 = vsel %vm973, 0.0, %v980
        %v1017 = vsel %vm973, 0.0, %v983
        %v1018 = vsel %vm973, 0.0, %v986
        %v1019 = vsel %vm973, 0.0, %v989
        %v1020 = vsel %vm973, 0.0, %v992
        %v1021 = vsel %vm973, 0.0, %v995
        %v1022 = vld [vmem:[%s3] sm:$0xff]
        %v1023 = vld [vmem:[%s3 + $0x8] sm:$0xff]
        %v1024 = vmul.f32 %v1014, %v1022
        %v1025 = vmul.f32 %v976, %v1023
        %v1026 = vmul.f32 %v1015, %v1022
        %v1027 = vmul.f32 %v979, %v1023
        %v1028 = vmul.f32 %v1016, %v1022
        %v1029 = vmul.f32 %v982, %v1023
        %v1030 = vmul.f32 %v1017, %v1022
        %v1031 = vmul.f32 %v985, %v1023
        %v1032 = vmul.f32 %v1018, %v1022
        %v1033 = vmul.f32 %v988, %v1023
        %v1034 = vmul.f32 %v1019, %v1022
        %v1035 = vmul.f32 %v991, %v1023
        %v1036 = vmul.f32 %v1020, %v1022
        %v1037 = vmul.f32 %v994, %v1023
        %v1038 = vmul.f32 %v1021, %v1022
        %v1039 = vmul.f32 %v997, %v1023
        %s1040 = scalar_lea.vmem %s3, 16
        %v1041 = vld [vmem:[%s1040] sm:$0xff]
        %v1042 = vld [vmem:[%s1040 + $0x8] sm:$0xff]
        %v1043 = vmul.f32 %v941, %v1041
        %v1044 = vmul.f32 %v942, %v1042
        %v1045 = vmul.f32 %v943, %v1041
        %v1046 = vmul.f32 %v944, %v1042
        %v1047 = vmul.f32 %v945, %v1041
        %v1048 = vmul.f32 %v946, %v1042
        %v1049 = vmul.f32 %v947, %v1041
        %v1050 = vmul.f32 %v948, %v1042
        %v1051 = vmul.f32 %v949, %v1041
        %v1052 = vmul.f32 %v950, %v1042
        %v1053 = vmul.f32 %v951, %v1041
        %v1054 = vmul.f32 %v952, %v1042
        %v1055 = vmul.f32 %v953, %v1041
        %v1056 = vmul.f32 %v954, %v1042
        %v1057 = vmul.f32 %v955, %v1041
        %v1058 = vmul.f32 %v956, %v1042
        %v1059 = vadd.f32 %v1024, %v1043
        %v1060 = vadd.f32 %v1025, %v1044
        %v1061 = vadd.f32 %v1026, %v1045
        %v1062 = vadd.f32 %v1027, %v1046
        %v1063 = vadd.f32 %v1028, %v1047
        %v1064 = vadd.f32 %v1029, %v1048
        %v1065 = vadd.f32 %v1030, %v1049
        %v1066 = vadd.f32 %v1031, %v1050
        %v1067 = vadd.f32 %v1032, %v1051
        %v1068 = vadd.f32 %v1033, %v1052
        %v1069 = vadd.f32 %v1034, %v1053
        %v1070 = vadd.f32 %v1035, %v1054
        %v1071 = vadd.f32 %v1036, %v1055
        %v1072 = vadd.f32 %v1037, %v1056
        %v1073 = vadd.f32 %v1038, %v1057
        %v1074 = vadd.f32 %v1039, %v1058
        %vm1075 = vcmask 1046528
        %v1076 = vrot.slane %v941, 1
        %v1077 = vrot.slane %v942, 1
        %v1078 = vsel %vm1075, %v1076, %v1077
        %v1079 = vrot.slane %v943, 1
        %v1080 = vrot.slane %v944, 1
        %v1081 = vsel %vm1075, %v1079, %v1080
        %v1082 = vrot.slane %v945, 1
        %v1083 = vrot.slane %v946, 1
        %v1084 = vsel %vm1075, %v1082, %v1083
        %v1085 = vrot.slane %v947, 1
        %v1086 = vrot.slane %v948, 1
        %v1087 = vsel %vm1075, %v1085, %v1086
        %v1088 = vrot.slane %v949, 1
        %v1089 = vrot.slane %v950, 1
        %v1090 = vsel %vm1075, %v1088, %v1089
        %v1091 = vrot.slane %v951, 1
        %v1092 = vrot.slane %v952, 1
        %v1093 = vsel %vm1075, %v1091, %v1092
        %v1094 = vrot.slane %v953, 1
        %v1095 = vrot.slane %v954, 1
        %v1096 = vsel %vm1075, %v1094, %v1095
        %v1097 = vrot.slane %v955, 1
        %v1098 = vrot.slane %v956, 1
        %v1099 = vsel %vm1075, %v1097, %v1098
        %v1116 = vsel %vm1075, %v1077, 0.0
        %v1117 = vsel %vm1075, %v1080, 0.0
        %v1118 = vsel %vm1075, %v1083, 0.0
        %v1119 = vsel %vm1075, %v1086, 0.0
        %v1120 = vsel %vm1075, %v1089, 0.0
        %v1121 = vsel %vm1075, %v1092, 0.0
        %v1122 = vsel %vm1075, %v1095, 0.0
        %v1123 = vsel %vm1075, %v1098, 0.0
        %s1124 = scalar_lea.vmem %s3, 32
        %v1125 = vld [vmem:[%s1124] sm:$0xff]
        %v1126 = vld [vmem:[%s1124 + $0x8] sm:$0xff]
        %v1127 = vmul.f32 %v1078, %v1125
        %v1128 = vmul.f32 %v1116, %v1126
        %v1129 = vmul.f32 %v1081, %v1125
        %v1130 = vmul.f32 %v1117, %v1126
        %v1131 = vmul.f32 %v1084, %v1125
        %v1132 = vmul.f32 %v1118, %v1126
        %v1133 = vmul.f32 %v1087, %v1125
        %v1134 = vmul.f32 %v1119, %v1126
        %v1135 = vmul.f32 %v1090, %v1125
        %v1136 = vmul.f32 %v1120, %v1126
        %v1137 = vmul.f32 %v1093, %v1125
        %v1138 = vmul.f32 %v1121, %v1126
        %v1139 = vmul.f32 %v1096, %v1125
        %v1140 = vmul.f32 %v1122, %v1126
        %v1141 = vmul.f32 %v1099, %v1125
        %v1142 = vmul.f32 %v1123, %v1126
        %v1143 = vadd.f32 %v1059, %v1127
        %v1144 = vadd.f32 %v1060, %v1128
        %v1145 = vadd.f32 %v1061, %v1129
        %v1146 = vadd.f32 %v1062, %v1130
        %v1147 = vadd.f32 %v1063, %v1131
        %v1148 = vadd.f32 %v1064, %v1132
        %v1149 = vadd.f32 %v1065, %v1133
        %v1150 = vadd.f32 %v1066, %v1134
        %v1151 = vadd.f32 %v1067, %v1135
        %v1152 = vadd.f32 %v1068, %v1136
        %v1153 = vadd.f32 %v1069, %v1137
        %v1154 = vadd.f32 %v1070, %v1138
        %v1155 = vadd.f32 %v1071, %v1139
        %v1156 = vadd.f32 %v1072, %v1140
        %v1157 = vadd.f32 %v1073, %v1141
        %v1158 = vadd.f32 %v1074, %v1142
        %v1159 = vld [vmem:[%s874] sm:$0xff]
        %v1160 = vld [vmem:[%s874 + $0x8] sm:$0xff]
        %v1161 = vld [vmem:[%s874 + $0x10] sm:$0xff]
        %v1162 = vld [vmem:[%s874 + $0x18] sm:$0xff]
        %v1163 = vld [vmem:[%s874 + $0x20] sm:$0xff]
        %v1164 = vld [vmem:[%s874 + $0x28] sm:$0xff]
        %v1165 = vld [vmem:[%s874 + $0x30] sm:$0xff]
        %v1166 = vld [vmem:[%s874 + $0x38] sm:$0xff]
        %v1167 = vld [vmem:[%s874 + $0x40] sm:$0xff]
        %v1168 = vld [vmem:[%s874 + $0x48] sm:$0xff]
        %v1169 = vld [vmem:[%s874 + $0x50] sm:$0xff]
        %v1170 = vld [vmem:[%s874 + $0x58] sm:$0xff]
        %v1171 = vld [vmem:[%s874 + $0x60] sm:$0xff]
        %v1172 = vld [vmem:[%s874 + $0x68] sm:$0xff]
        %v1173 = vld [vmem:[%s874 + $0x70] sm:$0xff]
        %v1174 = vld [vmem:[%s874 + $0x78] sm:$0xff]
        %v1191 = vrot.slane %v1159, 7
        %v1192 = vrot.slane %v1160, 7
        %v1193 = vsel %vm973, %v1191, %v1192
        %v1194 = vrot.slane %v1161, 7
        %v1195 = vrot.slane %v1162, 7
        %v1196 = vsel %vm973, %v1194, %v1195
        %v1197 = vrot.slane %v1163, 7
        %v1198 = vrot.slane %v1164, 7
        %v1199 = vsel %vm973, %v1197, %v1198
        %v1200 = vrot.slane %v1165, 7
        %v1201 = vrot.slane %v1166, 7
        %v1202 = vsel %vm973, %v1200, %v1201
        %v1203 = vrot.slane %v1167, 7
        %v1204 = vrot.slane %v1168, 7
        %v1205 = vsel %vm973, %v1203, %v1204
        %v1206 = vrot.slane %v1169, 7
        %v1207 = vrot.slane %v1170, 7
        %v1208 = vsel %vm973, %v1206, %v1207
        %v1209 = vrot.slane %v1171, 7
        %v1210 = vrot.slane %v1172, 7
        %v1211 = vsel %vm973, %v1209, %v1210
        %v1212 = vrot.slane %v1173, 7
        %v1213 = vrot.slane %v1174, 7
        %v1214 = vsel %vm973, %v1212, %v1213
        %v1231 = vsel %vm973, 0.0, %v1191
        %v1232 = vsel %vm973, 0.0, %v1194
        %v1233 = vsel %vm973, 0.0, %v1197
        %v1234 = vsel %vm973, 0.0, %v1200
        %v1235 = vsel %vm973, 0.0, %v1203
        %v1236 = vsel %vm973, 0.0, %v1206
        %v1237 = vsel %vm973, 0.0, %v1209
        %v1238 = vsel %vm973, 0.0, %v1212
        %s1239 = scalar_lea.vmem %s3, 48
        %v1240 = vld [vmem:[%s1239] sm:$0xff]
        %v1241 = vld [vmem:[%s1239 + $0x8] sm:$0xff]
        %v1242 = vmul.f32 %v1231, %v1240
        %v1243 = vmul.f32 %v1193, %v1241
        %v1244 = vmul.f32 %v1232, %v1240
        %v1245 = vmul.f32 %v1196, %v1241
        %v1246 = vmul.f32 %v1233, %v1240
        %v1247 = vmul.f32 %v1199, %v1241
        %v1248 = vmul.f32 %v1234, %v1240
        %v1249 = vmul.f32 %v1202, %v1241
        %v1250 = vmul.f32 %v1235, %v1240
        %v1251 = vmul.f32 %v1205, %v1241
        %v1252 = vmul.f32 %v1236, %v1240
        %v1253 = vmul.f32 %v1208, %v1241
        %v1254 = vmul.f32 %v1237, %v1240
        %v1255 = vmul.f32 %v1211, %v1241
        %v1256 = vmul.f32 %v1238, %v1240
        %v1257 = vmul.f32 %v1214, %v1241
        %v1258 = vadd.f32 %v1143, %v1242
        %v1259 = vadd.f32 %v1144, %v1243
        %v1260 = vadd.f32 %v1145, %v1244
        %v1261 = vadd.f32 %v1146, %v1245
        %v1262 = vadd.f32 %v1147, %v1246
        %v1263 = vadd.f32 %v1148, %v1247
        %v1264 = vadd.f32 %v1149, %v1248
        %v1265 = vadd.f32 %v1150, %v1249
        %v1266 = vadd.f32 %v1151, %v1250
        %v1267 = vadd.f32 %v1152, %v1251
        %v1268 = vadd.f32 %v1153, %v1252
        %v1269 = vadd.f32 %v1154, %v1253
        %v1270 = vadd.f32 %v1155, %v1254
        %v1271 = vadd.f32 %v1156, %v1255
        %v1272 = vadd.f32 %v1157, %v1256
        %v1273 = vadd.f32 %v1158, %v1257
        %s1274 = scalar_lea.vmem %s3, 64
        %v1275 = vld [vmem:[%s1274] sm:$0xff]
        %v1276 = vld [vmem:[%s1274 + $0x8] sm:$0xff]
        %v1277 = vmul.f32 %v1159, %v1275
        %v1278 = vmul.f32 %v1160, %v1276
        %v1279 = vmul.f32 %v1161, %v1275
        %v1280 = vmul.f32 %v1162, %v1276
        %v1281 = vmul.f32 %v1163, %v1275
        %v1282 = vmul.f32 %v1164, %v1276
        %v1283 = vmul.f32 %v1165, %v1275
        %v1284 = vmul.f32 %v1166, %v1276
        %v1285 = vmul.f32 %v1167, %v1275
        %v1286 = vmul.f32 %v1168, %v1276
        %v1287 = vmul.f32 %v1169, %v1275
        %v1288 = vmul.f32 %v1170, %v1276
        %v1289 = vmul.f32 %v1171, %v1275
        %v1290 = vmul.f32 %v1172, %v1276
        %v1291 = vmul.f32 %v1173, %v1275
        %v1292 = vmul.f32 %v1174, %v1276
        %v1293 = vadd.f32 %v1258, %v1277
        %v1294 = vadd.f32 %v1259, %v1278
        %v1295 = vadd.f32 %v1260, %v1279
        %v1296 = vadd.f32 %v1261, %v1280
        %v1297 = vadd.f32 %v1262, %v1281
        %v1298 = vadd.f32 %v1263, %v1282
        %v1299 = vadd.f32 %v1264, %v1283
        %v1300 = vadd.f32 %v1265, %v1284
        %v1301 = vadd.f32 %v1266, %v1285
        %v1302 = vadd.f32 %v1267, %v1286
        %v1303 = vadd.f32 %v1268, %v1287
        %v1304 = vadd.f32 %v1269, %v1288
        %v1305 = vadd.f32 %v1270, %v1289
        %v1306 = vadd.f32 %v1271, %v1290
        %v1307 = vadd.f32 %v1272, %v1291
        %v1308 = vadd.f32 %v1273, %v1292
        %v1309 = vrot.slane %v1159, 1
        %v1310 = vrot.slane %v1160, 1
        %v1311 = vsel %vm1075, %v1309, %v1310
        %v1312 = vrot.slane %v1161, 1
        %v1313 = vrot.slane %v1162, 1
        %v1314 = vsel %vm1075, %v1312, %v1313
        %v1315 = vrot.slane %v1163, 1
        %v1316 = vrot.slane %v1164, 1
        %v1317 = vsel %vm1075, %v1315, %v1316
        %v1318 = vrot.slane %v1165, 1
        %v1319 = vrot.slane %v1166, 1
        %v1320 = vsel %vm1075, %v1318, %v1319
        %v1321 = vrot.slane %v1167, 1
        %v1322 = vrot.slane %v1168, 1
        %v1323 = vsel %vm1075, %v1321, %v1322
        %v1324 = vrot.slane %v1169, 1
        %v1325 = vrot.slane %v1170, 1
        %v1326 = vsel %vm1075, %v1324, %v1325
        %v1327 = vrot.slane %v1171, 1
        %v1328 = vrot.slane %v1172, 1
        %v1329 = vsel %vm1075, %v1327, %v1328
        %v1330 = vrot.slane %v1173, 1
        %v1331 = vrot.slane %v1174, 1
        %v1332 = vsel %vm1075, %v1330, %v1331
        %v1349 = vsel %vm1075, %v1310, 0.0
        %v1350 = vsel %vm1075, %v1313, 0.0
        %v1351 = vsel %vm1075, %v1316, 0.0
        %v1352 = vsel %vm1075, %v1319, 0.0
        %v1353 = vsel %vm1075, %v1322, 0.0
        %v1354 = vsel %vm1075, %v1325, 0.0
        %v1355 = vsel %vm1075, %v1328, 0.0
        %v1356 = vsel %vm1075, %v1331, 0.0
        %s1357 = scalar_lea.vmem %s3, 80
        %v1358 = vld [vmem:[%s1357] sm:$0xff]
        %v1359 = vld [vmem:[%s1357 + $0x8] sm:$0xff]
        %v1360 = vmul.f32 %v1311, %v1358
        %v1361 = vmul.f32 %v1349, %v1359
        %v1362 = vmul.f32 %v1314, %v1358
        %v1363 = vmul.f32 %v1350, %v1359
        %v1364 = vmul.f32 %v1317, %v1358
        %v1365 = vmul.f32 %v1351, %v1359
        %v1366 = vmul.f32 %v1320, %v1358
        %v1367 = vmul.f32 %v1352, %v1359
        %v1368 = vmul.f32 %v1323, %v1358
        %v1369 = vmul.f32 %v1353, %v1359
        %v1370 = vmul.f32 %v1326, %v1358
        %v1371 = vmul.f32 %v1354, %v1359
        %v1372 = vmul.f32 %v1329, %v1358
        %v1373 = vmul.f32 %v1355, %v1359
        %v1374 = vmul.f32 %v1332, %v1358
        %v1375 = vmul.f32 %v1356, %v1359
        %v1376 = vadd.f32 %v1293, %v1360
        %v1377 = vadd.f32 %v1294, %v1361
        %v1378 = vadd.f32 %v1295, %v1362
        %v1379 = vadd.f32 %v1296, %v1363
        %v1380 = vadd.f32 %v1297, %v1364
        %v1381 = vadd.f32 %v1298, %v1365
        %v1382 = vadd.f32 %v1299, %v1366
        %v1383 = vadd.f32 %v1300, %v1367
        %v1384 = vadd.f32 %v1301, %v1368
        %v1385 = vadd.f32 %v1302, %v1369
        %v1386 = vadd.f32 %v1303, %v1370
        %v1387 = vadd.f32 %v1304, %v1371
        %v1388 = vadd.f32 %v1305, %v1372
        %v1389 = vadd.f32 %v1306, %v1373
        %v1390 = vadd.f32 %v1307, %v1374
        %v1391 = vadd.f32 %v1308, %v1375
        %s1392 = scalar_lea.vmem [#allocation2], 32
        %v1393 = vld [vmem:[%s1392] sm:$0xff]
        %v1394 = vld [vmem:[%s1392 + $0x8] sm:$0xff]
        %v1395 = vld [vmem:[%s1392 + $0x10] sm:$0xff]
        %v1396 = vld [vmem:[%s1392 + $0x18] sm:$0xff]
        %v1397 = vld [vmem:[%s1392 + $0x20] sm:$0xff]
        %v1398 = vld [vmem:[%s1392 + $0x28] sm:$0xff]
        %v1399 = vld [vmem:[%s1392 + $0x30] sm:$0xff]
        %v1400 = vld [vmem:[%s1392 + $0x38] sm:$0xff]
        %v1401 = vld [vmem:[%s1392 + $0x40] sm:$0xff]
        %v1402 = vld [vmem:[%s1392 + $0x48] sm:$0xff]
        %v1403 = vld [vmem:[%s1392 + $0x50] sm:$0xff]
        %v1404 = vld [vmem:[%s1392 + $0x58] sm:$0xff]
        %v1405 = vld [vmem:[%s1392 + $0x60] sm:$0xff]
        %v1406 = vld [vmem:[%s1392 + $0x68] sm:$0xff]
        %v1407 = vld [vmem:[%s1392 + $0x70] sm:$0xff]
        %v1408 = vld [vmem:[%s1392 + $0x78] sm:$0xff]
        %v1425 = vrot.slane %v1393, 7
        %v1426 = vrot.slane %v1394, 7
        %v1427 = vsel %vm973, %v1425, %v1426
        %v1428 = vrot.slane %v1395, 7
        %v1429 = vrot.slane %v1396, 7
        %v1430 = vsel %vm973, %v1428, %v1429
        %v1431 = vrot.slane %v1397, 7
        %v1432 = vrot.slane %v1398, 7
        %v1433 = vsel %vm973, %v1431, %v1432
        %v1434 = vrot.slane %v1399, 7
        %v1435 = vrot.slane %v1400, 7
        %v1436 = vsel %vm973, %v1434, %v1435
        %v1437 = vrot.slane %v1401, 7
        %v1438 = vrot.slane %v1402, 7
        %v1439 = vsel %vm973, %v1437, %v1438
        %v1440 = vrot.slane %v1403, 7
        %v1441 = vrot.slane %v1404, 7
        %v1442 = vsel %vm973, %v1440, %v1441
        %v1443 = vrot.slane %v1405, 7
        %v1444 = vrot.slane %v1406, 7
        %v1445 = vsel %vm973, %v1443, %v1444
        %v1446 = vrot.slane %v1407, 7
        %v1447 = vrot.slane %v1408, 7
        %v1448 = vsel %vm973, %v1446, %v1447
        %v1465 = vsel %vm973, 0.0, %v1425
        %v1466 = vsel %vm973, 0.0, %v1428
        %v1467 = vsel %vm973, 0.0, %v1431
        %v1468 = vsel %vm973, 0.0, %v1434
        %v1469 = vsel %vm973, 0.0, %v1437
        %v1470 = vsel %vm973, 0.0, %v1440
        %v1471 = vsel %vm973, 0.0, %v1443
        %v1472 = vsel %vm973, 0.0, %v1446
        %s1473 = scalar_lea.vmem %s3, 96
        %v1474 = vld [vmem:[%s1473] sm:$0xff]
        %v1475 = vld [vmem:[%s1473 + $0x8] sm:$0xff]
        %v1476 = vmul.f32 %v1465, %v1474
        %v1477 = vmul.f32 %v1427, %v1475
        %v1478 = vmul.f32 %v1466, %v1474
        %v1479 = vmul.f32 %v1430, %v1475
        %v1480 = vmul.f32 %v1467, %v1474
        %v1481 = vmul.f32 %v1433, %v1475
        %v1482 = vmul.f32 %v1468, %v1474
        %v1483 = vmul.f32 %v1436, %v1475
        %v1484 = vmul.f32 %v1469, %v1474
        %v1485 = vmul.f32 %v1439, %v1475
        %v1486 = vmul.f32 %v1470, %v1474
        %v1487 = vmul.f32 %v1442, %v1475
        %v1488 = vmul.f32 %v1471, %v1474
        %v1489 = vmul.f32 %v1445, %v1475
        %v1490 = vmul.f32 %v1472, %v1474
        %v1491 = vmul.f32 %v1448, %v1475
        %v1492 = vadd.f32 %v1376, %v1476
        %v1493 = vadd.f32 %v1377, %v1477
        %v1494 = vadd.f32 %v1378, %v1478
        %v1495 = vadd.f32 %v1379, %v1479
        %v1496 = vadd.f32 %v1380, %v1480
        %v1497 = vadd.f32 %v1381, %v1481
        %v1498 = vadd.f32 %v1382, %v1482
        %v1499 = vadd.f32 %v1383, %v1483
        %v1500 = vadd.f32 %v1384, %v1484
        %v1501 = vadd.f32 %v1385, %v1485
        %v1502 = vadd.f32 %v1386, %v1486
        %v1503 = vadd.f32 %v1387, %v1487
        %v1504 = vadd.f32 %v1388, %v1488
        %v1505 = vadd.f32 %v1389, %v1489
        %v1506 = vadd.f32 %v1390, %v1490
        %v1507 = vadd.f32 %v1391, %v1491
        %s1508 = scalar_lea.vmem %s3, 112
        %v1509 = vld [vmem:[%s1508] sm:$0xff]
        %v1510 = vld [vmem:[%s1508 + $0x8] sm:$0xff]
        %v1511 = vmul.f32 %v1393, %v1509
        %v1512 = vmul.f32 %v1394, %v1510
        %v1513 = vmul.f32 %v1395, %v1509
        %v1514 = vmul.f32 %v1396, %v1510
        %v1515 = vmul.f32 %v1397, %v1509
        %v1516 = vmul.f32 %v1398, %v1510
        %v1517 = vmul.f32 %v1399, %v1509
        %v1518 = vmul.f32 %v1400, %v1510
        %v1519 = vmul.f32 %v1401, %v1509
        %v1520 = vmul.f32 %v1402, %v1510
        %v1521 = vmul.f32 %v1403, %v1509
        %v1522 = vmul.f32 %v1404, %v1510
        %v1523 = vmul.f32 %v1405, %v1509
        %v1524 = vmul.f32 %v1406, %v1510
        %v1525 = vmul.f32 %v1407, %v1509
        %v1526 = vmul.f32 %v1408, %v1510
        %v1527 = vadd.f32 %v1492, %v1511
        %v1528 = vadd.f32 %v1493, %v1512
        %v1529 = vadd.f32 %v1494, %v1513
        %v1530 = vadd.f32 %v1495, %v1514
        %v1531 = vadd.f32 %v1496, %v1515
        %v1532 = vadd.f32 %v1497, %v1516
        %v1533 = vadd.f32 %v1498, %v1517
        %v1534 = vadd.f32 %v1499, %v1518
        %v1535 = vadd.f32 %v1500, %v1519
        %v1536 = vadd.f32 %v1501, %v1520
        %v1537 = vadd.f32 %v1502, %v1521
        %v1538 = vadd.f32 %v1503, %v1522
        %v1539 = vadd.f32 %v1504, %v1523
        %v1540 = vadd.f32 %v1505, %v1524
        %v1541 = vadd.f32 %v1506, %v1525
        %v1542 = vadd.f32 %v1507, %v1526
        %v1543 = vrot.slane %v1393, 1
        %v1544 = vrot.slane %v1394, 1
        %v1545 = vsel %vm1075, %v1543, %v1544
        %v1546 = vrot.slane %v1395, 1
        %v1547 = vrot.slane %v1396, 1
        %v1548 = vsel %vm1075, %v1546, %v1547
        %v1549 = vrot.slane %v1397, 1
        %v1550 = vrot.slane %v1398, 1
        %v1551 = vsel %vm1075, %v1549, %v1550
        %v1552 = vrot.slane %v1399, 1
        %v1553 = vrot.slane %v1400, 1
        %v1554 = vsel %vm1075, %v1552, %v1553
        %v1555 = vrot.slane %v1401, 1
        %v1556 = vrot.slane %v1402, 1
        %v1557 = vsel %vm1075, %v1555, %v1556
        %v1558 = vrot.slane %v1403, 1
        %v1559 = vrot.slane %v1404, 1
        %v1560 = vsel %vm1075, %v1558, %v1559
        %v1561 = vrot.slane %v1405, 1
        %v1562 = vrot.slane %v1406, 1
        %v1563 = vsel %vm1075, %v1561, %v1562
        %v1564 = vrot.slane %v1407, 1
        %v1565 = vrot.slane %v1408, 1
        %v1566 = vsel %vm1075, %v1564, %v1565
        %v1583 = vsel %vm1075, %v1544, 0.0
        %v1584 = vsel %vm1075, %v1547, 0.0
        %v1585 = vsel %vm1075, %v1550, 0.0
        %v1586 = vsel %vm1075, %v1553, 0.0
        %v1587 = vsel %vm1075, %v1556, 0.0
        %v1588 = vsel %vm1075, %v1559, 0.0
        %v1589 = vsel %vm1075, %v1562, 0.0
        %v1590 = vsel %vm1075, %v1565, 0.0
        %s1591 = scalar_lea.vmem %s3, 128
        %v1592 = vld [vmem:[%s1591] sm:$0xff]
        %v1593 = vld [vmem:[%s1591 + $0x8] sm:$0xff]
        %v1594 = vmul.f32 %v1545, %v1592
        %v1595 = vmul.f32 %v1583, %v1593
        %v1596 = vmul.f32 %v1548, %v1592
        %v1597 = vmul.f32 %v1584, %v1593
        %v1598 = vmul.f32 %v1551, %v1592
        %v1599 = vmul.f32 %v1585, %v1593
        %v1600 = vmul.f32 %v1554, %v1592
        %v1601 = vmul.f32 %v1586, %v1593
        %v1602 = vmul.f32 %v1557, %v1592
        %v1603 = vmul.f32 %v1587, %v1593
        %v1604 = vmul.f32 %v1560, %v1592
        %v1605 = vmul.f32 %v1588, %v1593
        %v1606 = vmul.f32 %v1563, %v1592
        %v1607 = vmul.f32 %v1589, %v1593
        %v1608 = vmul.f32 %v1566, %v1592
        %v1609 = vmul.f32 %v1590, %v1593
        %v1610 = vadd.f32 %v1527, %v1594
        %v1611 = vadd.f32 %v1528, %v1595
        %v1612 = vadd.f32 %v1529, %v1596
        %v1613 = vadd.f32 %v1530, %v1597
        %v1614 = vadd.f32 %v1531, %v1598
        %v1615 = vadd.f32 %v1532, %v1599
        %v1616 = vadd.f32 %v1533, %v1600
        %v1617 = vadd.f32 %v1534, %v1601
        %v1618 = vadd.f32 %v1535, %v1602
        %v1619 = vadd.f32 %v1536, %v1603
        %v1620 = vadd.f32 %v1537, %v1604
        %v1621 = vadd.f32 %v1538, %v1605
        %v1622 = vadd.f32 %v1539, %v1606
        %v1623 = vadd.f32 %v1540, %v1607
        %v1624 = vadd.f32 %v1541, %v1608
        %v1625 = vadd.f32 %v1542, %v1609
        %v1626 = vadd.f32 %v1610, %v939
        %v1627 = vadd.f32 %v1611, %v940
        %v1628 = vadd.f32 %v1612, %v939
        %v1629 = vadd.f32 %v1613, %v940
        %v1630 = vadd.f32 %v1614, %v939
        %v1631 = vadd.f32 %v1615, %v940
        %v1632 = vadd.f32 %v1616, %v939
        %v1633 = vadd.f32 %v1617, %v940
        %v1634 = vadd.f32 %v1618, %v939
        %v1635 = vadd.f32 %v1619, %v940
        %v1636 = vadd.f32 %v1620, %v939
        %v1637 = vadd.f32 %v1621, %v940
        %v1638 = vadd.f32 %v1622, %v939
        %v1639 = vadd.f32 %v1623, %v940
        %v1640 = vadd.f32 %v1624, %v939
        %v1641 = vadd.f32 %v1625, %v940
        %1642 = vst [vmem:[%s216] sm:$0xff] %v1626
        %1643 = vst [vmem:[%s216 + $0x8] sm:$0xff] %v1627
        %1644 = vst [vmem:[%s216 + $0x10] sm:$0xff] %v1628
        %1645 = vst [vmem:[%s216 + $0x18] sm:$0xff] %v1629
        %1646 = vst [vmem:[%s216 + $0x20] sm:$0xff] %v1630
        %1647 = vst [vmem:[%s216 + $0x28] sm:$0xff] %v1631
        %1648 = vst [vmem:[%s216 + $0x30] sm:$0xff] %v1632
        %1649 = vst [vmem:[%s216 + $0x38] sm:$0xff] %v1633
        %1650 = vst [vmem:[%s216 + $0x40] sm:$0xff] %v1634
        %1651 = vst [vmem:[%s216 + $0x48] sm:$0xff] %v1635
        %1652 = vst [vmem:[%s216 + $0x50] sm:$0xff] %v1636
        %1653 = vst [vmem:[%s216 + $0x58] sm:$0xff] %v1637
        %1654 = vst [vmem:[%s216 + $0x60] sm:$0xff] %v1638
        %1655 = vst [vmem:[%s216 + $0x68] sm:$0xff] %v1639
        %1656 = vst [vmem:[%s216 + $0x70] sm:$0xff] %v1640
        %1657 = vst [vmem:[%s216 + $0x78] sm:$0xff] %v1641
        %s1658 = scalar_lea.vmem [#allocation2], 128
        %v1659 = vld [vmem:[%s1658] sm:$0xff]
        %v1660 = vld [vmem:[%s1658 + $0x8] sm:$0xff]
        %v1661 = vld [vmem:[%s1658 + $0x10] sm:$0xff]
        %v1662 = vld [vmem:[%s1658 + $0x18] sm:$0xff]
        %v1663 = vld [vmem:[%s1658 + $0x20] sm:$0xff]
        %v1664 = vld [vmem:[%s1658 + $0x28] sm:$0xff]
        %v1665 = vld [vmem:[%s1658 + $0x30] sm:$0xff]
        %v1666 = vld [vmem:[%s1658 + $0x38] sm:$0xff]
        %v1667 = vld [vmem:[%s1658 + $0x40] sm:$0xff]
        %v1668 = vld [vmem:[%s1658 + $0x48] sm:$0xff]
        %v1669 = vld [vmem:[%s1658 + $0x50] sm:$0xff]
        %v1670 = vld [vmem:[%s1658 + $0x58] sm:$0xff]
        %v1671 = vld [vmem:[%s1658 + $0x60] sm:$0xff]
        %v1672 = vld [vmem:[%s1658 + $0x68] sm:$0xff]
        %v1673 = vld [vmem:[%s1658 + $0x70] sm:$0xff]
        %v1674 = vld [vmem:[%s1658 + $0x78] sm:$0xff]
        %v1691 = vrot.slane %v1659, 7
        %v1692 = vrot.slane %v1660, 7
        %v1693 = vsel %vm973, %v1691, %v1692
        %v1694 = vrot.slane %v1661, 7
        %v1695 = vrot.slane %v1662, 7
        %v1696 = vsel %vm973, %v1694, %v1695
        %v1697 = vrot.slane %v1663, 7
        %v1698 = vrot.slane %v1664, 7
        %v1699 = vsel %vm973, %v1697, %v1698
        %v1700 = vrot.slane %v1665, 7
        %v1701 = vrot.slane %v1666, 7
        %v1702 = vsel %vm973, %v1700, %v1701
        %v1703 = vrot.slane %v1667, 7
        %v1704 = vrot.slane %v1668, 7
        %v1705 = vsel %vm973, %v1703, %v1704
        %v1706 = vrot.slane %v1669, 7
        %v1707 = vrot.slane %v1670, 7
        %v1708 = vsel %vm973, %v1706, %v1707
        %v1709 = vrot.slane %v1671, 7
        %v1710 = vrot.slane %v1672, 7
        %v1711 = vsel %vm973, %v1709, %v1710
        %v1712 = vrot.slane %v1673, 7
        %v1713 = vrot.slane %v1674, 7
        %v1714 = vsel %vm973, %v1712, %v1713
        %v1731 = vsel %vm973, 0.0, %v1691
        %v1732 = vsel %vm973, 0.0, %v1694
        %v1733 = vsel %vm973, 0.0, %v1697
        %v1734 = vsel %vm973, 0.0, %v1700
        %v1735 = vsel %vm973, 0.0, %v1703
        %v1736 = vsel %vm973, 0.0, %v1706
        %v1737 = vsel %vm973, 0.0, %v1709
        %v1738 = vsel %vm973, 0.0, %v1712
        %v1739 = vld [vmem:[%s3] sm:$0xff]
        %v1740 = vld [vmem:[%s3 + $0x8] sm:$0xff]
        %v1741 = vmul.f32 %v1731, %v1739
        %v1742 = vmul.f32 %v1693, %v1740
        %v1743 = vmul.f32 %v1732, %v1739
        %v1744 = vmul.f32 %v1696, %v1740
        %v1745 = vmul.f32 %v1733, %v1739
        %v1746 = vmul.f32 %v1699, %v1740
        %v1747 = vmul.f32 %v1734, %v1739
        %v1748 = vmul.f32 %v1702, %v1740
        %v1749 = vmul.f32 %v1735, %v1739
        %v1750 = vmul.f32 %v1705, %v1740
        %v1751 = vmul.f32 %v1736, %v1739
        %v1752 = vmul.f32 %v1708, %v1740
        %v1753 = vmul.f32 %v1737, %v1739
        %v1754 = vmul.f32 %v1711, %v1740
        %v1755 = vmul.f32 %v1738, %v1739
        %v1756 = vmul.f32 %v1714, %v1740
        %v1757 = vld [vmem:[%s1040] sm:$0xff]
        %v1758 = vld [vmem:[%s1040 + $0x8] sm:$0xff]
        %v1759 = vmul.f32 %v1659, %v1757
        %v1760 = vmul.f32 %v1660, %v1758
        %v1761 = vmul.f32 %v1661, %v1757
        %v1762 = vmul.f32 %v1662, %v1758
        %v1763 = vmul.f32 %v1663, %v1757
        %v1764 = vmul.f32 %v1664, %v1758
        %v1765 = vmul.f32 %v1665, %v1757
        %v1766 = vmul.f32 %v1666, %v1758
        %v1767 = vmul.f32 %v1667, %v1757
        %v1768 = vmul.f32 %v1668, %v1758
        %v1769 = vmul.f32 %v1669, %v1757
        %v1770 = vmul.f32 %v1670, %v1758
        %v1771 = vmul.f32 %v1671, %v1757
        %v1772 = vmul.f32 %v1672, %v1758
        %v1773 = vmul.f32 %v1673, %v1757
        %v1774 = vmul.f32 %v1674, %v1758
        %v1775 = vadd.f32 %v1741, %v1759
        %v1776 = vadd.f32 %v1742, %v1760
        %v1777 = vadd.f32 %v1743, %v1761
        %v1778 = vadd.f32 %v1744, %v1762
        %v1779 = vadd.f32 %v1745, %v1763
        %v1780 = vadd.f32 %v1746, %v1764
        %v1781 = vadd.f32 %v1747, %v1765
        %v1782 = vadd.f32 %v1748, %v1766
        %v1783 = vadd.f32 %v1749, %v1767
        %v1784 = vadd.f32 %v1750, %v1768
        %v1785 = vadd.f32 %v1751, %v1769
        %v1786 = vadd.f32 %v1752, %v1770
        %v1787 = vadd.f32 %v1753, %v1771
        %v1788 = vadd.f32 %v1754, %v1772
        %v1789 = vadd.f32 %v1755, %v1773
        %v1790 = vadd.f32 %v1756, %v1774
        %v1791 = vrot.slane %v1659, 1
        %v1792 = vrot.slane %v1660, 1
        %v1793 = vsel %vm1075, %v1791, %v1792
        %v1794 = vrot.slane %v1661, 1
        %v1795 = vrot.slane %v1662, 1
        %v1796 = vsel %vm1075, %v1794, %v1795
        %v1797 = vrot.slane %v1663, 1
        %v1798 = vrot.slane %v1664, 1
        %v1799 = vsel %vm1075, %v1797, %v1798
        %v1800 = vrot.slane %v1665, 1
        %v1801 = vrot.slane %v1666, 1
        %v1802 = vsel %vm1075, %v1800, %v1801
        %v1803 = vrot.slane %v1667, 1
        %v1804 = vrot.slane %v1668, 1
        %v1805 = vsel %vm1075, %v1803, %v1804
        %v1806 = vrot.slane %v1669, 1
        %v1807 = vrot.slane %v1670, 1
        %v1808 = vsel %vm1075, %v1806, %v1807
        %v1809 = vrot.slane %v1671, 1
        %v1810 = vrot.slane %v1672, 1
        %v1811 = vsel %vm1075, %v1809, %v1810
        %v1812 = vrot.slane %v1673, 1
        %v1813 = vrot.slane %v1674, 1
        %v1814 = vsel %vm1075, %v1812, %v1813
        %v1831 = vsel %vm1075, %v1792, 0.0
        %v1832 = vsel %vm1075, %v1795, 0.0
        %v1833 = vsel %vm1075, %v1798, 0.0
        %v1834 = vsel %vm1075, %v1801, 0.0
        %v1835 = vsel %vm1075, %v1804, 0.0
        %v1836 = vsel %vm1075, %v1807, 0.0
        %v1837 = vsel %vm1075, %v1810, 0.0
        %v1838 = vsel %vm1075, %v1813, 0.0
        %v1839 = vld [vmem:[%s1124] sm:$0xff]
        %v1840 = vld [vmem:[%s1124 + $0x8] sm:$0xff]
        %v1841 = vmul.f32 %v1793, %v1839
        %v1842 = vmul.f32 %v1831, %v1840
        %v1843 = vmul.f32 %v1796, %v1839
        %v1844 = vmul.f32 %v1832, %v1840
        %v1845 = vmul.f32 %v1799, %v1839
        %v1846 = vmul.f32 %v1833, %v1840
        %v1847 = vmul.f32 %v1802, %v1839
        %v1848 = vmul.f32 %v1834, %v1840
        %v1849 = vmul.f32 %v1805, %v1839
        %v1850 = vmul.f32 %v1835, %v1840
        %v1851 = vmul.f32 %v1808, %v1839
        %v1852 = vmul.f32 %v1836, %v1840
        %v1853 = vmul.f32 %v1811, %v1839
        %v1854 = vmul.f32 %v1837, %v1840
        %v1855 = vmul.f32 %v1814, %v1839
        %v1856 = vmul.f32 %v1838, %v1840
        %v1857 = vadd.f32 %v1775, %v1841
        %v1858 = vadd.f32 %v1776, %v1842
        %v1859 = vadd.f32 %v1777, %v1843
        %v1860 = vadd.f32 %v1778, %v1844
        %v1861 = vadd.f32 %v1779, %v1845
        %v1862 = vadd.f32 %v1780, %v1846
        %v1863 = vadd.f32 %v1781, %v1847
        %v1864 = vadd.f32 %v1782, %v1848
        %v1865 = vadd.f32 %v1783, %v1849
        %v1866 = vadd.f32 %v1784, %v1850
        %v1867 = vadd.f32 %v1785, %v1851
        %v1868 = vadd.f32 %v1786, %v1852
        %v1869 = vadd.f32 %v1787, %v1853
        %v1870 = vadd.f32 %v1788, %v1854
        %v1871 = vadd.f32 %v1789, %v1855
        %v1872 = vadd.f32 %v1790, %v1856
        %s1873 = scalar_lea.vmem [#allocation2], 144
        %v1874 = vld [vmem:[%s1873] sm:$0xff]
        %v1875 = vld [vmem:[%s1873 + $0x8] sm:$0xff]
        %v1876 = vld [vmem:[%s1873 + $0x10] sm:$0xff]
        %v1877 = vld [vmem:[%s1873 + $0x18] sm:$0xff]
        %v1878 = vld [vmem:[%s1873 + $0x20] sm:$0xff]
        %v1879 = vld [vmem:[%s1873 + $0x28] sm:$0xff]
        %v1880 = vld [vmem:[%s1873 + $0x30] sm:$0xff]
        %v1881 = vld [vmem:[%s1873 + $0x38] sm:$0xff]
        %v1882 = vld [vmem:[%s1873 + $0x40] sm:$0xff]
        %v1883 = vld [vmem:[%s1873 + $0x48] sm:$0xff]
        %v1884 = vld [vmem:[%s1873 + $0x50] sm:$0xff]
        %v1885 = vld [vmem:[%s1873 + $0x58] sm:$0xff]
        %v1886 = vld [vmem:[%s1873 + $0x60] sm:$0xff]
        %v1887 = vld [vmem:[%s1873 + $0x68] sm:$0xff]
        %v1888 = vld [vmem:[%s1873 + $0x70] sm:$0xff]
        %v1889 = vld [vmem:[%s1873 + $0x78] sm:$0xff]
        %v1906 = vrot.slane %v1874, 7
        %v1907 = vrot.slane %v1875, 7
        %v1908 = vsel %vm973, %v1906, %v1907
        %v1909 = vrot.slane %v1876, 7
        %v1910 = vrot.slane %v1877, 7
        %v1911 = vsel %vm973, %v1909, %v1910
        %v1912 = vrot.slane %v1878, 7
        %v1913 = vrot.slane %v1879, 7
        %v1914 = vsel %vm973, %v1912, %v1913
        %v1915 = vrot.slane %v1880, 7
        %v1916 = vrot.slane %v1881, 7
        %v1917 = vsel %vm973, %v1915, %v1916
        %v1918 = vrot.slane %v1882, 7
        %v1919 = vrot.slane %v1883, 7
        %v1920 = vsel %vm973, %v1918, %v1919
        %v1921 = vrot.slane %v1884, 7
        %v1922 = vrot.slane %v1885, 7
        %v1923 = vsel %vm973, %v1921, %v1922
        %v1924 = vrot.slane %v1886, 7
        %v1925 = vrot.slane %v1887, 7
        %v1926 = vsel %vm973, %v1924, %v1925
        %v1927 = vrot.slane %v1888, 7
        %v1928 = vrot.slane %v1889, 7
        %v1929 = vsel %vm973, %v1927, %v1928
        %v1946 = vsel %vm973, 0.0, %v1906
        %v1947 = vsel %vm973, 0.0, %v1909
        %v1948 = vsel %vm973, 0.0, %v1912
        %v1949 = vsel %vm973, 0.0, %v1915
        %v1950 = vsel %vm973, 0.0, %v1918
        %v1951 = vsel %vm973, 0.0, %v1921
        %v1952 = vsel %vm973, 0.0, %v1924
        %v1953 = vsel %vm973, 0.0, %v1927
        %v1954 = vld [vmem:[%s1239] sm:$0xff]
        %v1955 = vld [vmem:[%s1239 + $0x8] sm:$0xff]
        %v1956 = vmul.f32 %v1946, %v1954
        %v1957 = vmul.f32 %v1908, %v1955
        %v1958 = vmul.f32 %v1947, %v1954
        %v1959 = vmul.f32 %v1911, %v1955
        %v1960 = vmul.f32 %v1948, %v1954
        %v1961 = vmul.f32 %v1914, %v1955
        %v1962 = vmul.f32 %v1949, %v1954
        %v1963 = vmul.f32 %v1917, %v1955
        %v1964 = vmul.f32 %v1950, %v1954
        %v1965 = vmul.f32 %v1920, %v1955
        %v1966 = vmul.f32 %v1951, %v1954
        %v1967 = vmul.f32 %v1923, %v1955
        %v1968 = vmul.f32 %v1952, %v1954
        %v1969 = vmul.f32 %v1926, %v1955
        %v1970 = vmul.f32 %v1953, %v1954
        %v1971 = vmul.f32 %v1929, %v1955
        %v1972 = vadd.f32 %v1857, %v1956
        %v1973 = vadd.f32 %v1858, %v1957
        %v1974 = vadd.f32 %v1859, %v1958
        %v1975 = vadd.f32 %v1860, %v1959
        %v1976 = vadd.f32 %v1861, %v1960
        %v1977 = vadd.f32 %v1862, %v1961
        %v1978 = vadd.f32 %v1863, %v1962
        %v1979 = vadd.f32 %v1864, %v1963
        %v1980 = vadd.f32 %v1865, %v1964
        %v1981 = vadd.f32 %v1866, %v1965
        %v1982 = vadd.f32 %v1867, %v1966
        %v1983 = vadd.f32 %v1868, %v1967
        %v1984 = vadd.f32 %v1869, %v1968
        %v1985 = vadd.f32 %v1870, %v1969
        %v1986 = vadd.f32 %v1871, %v1970
        %v1987 = vadd.f32 %v1872, %v1971
        %v1988 = vld [vmem:[%s1274] sm:$0xff]
        %v1989 = vld [vmem:[%s1274 + $0x8] sm:$0xff]
        %v1990 = vmul.f32 %v1874, %v1988
        %v1991 = vmul.f32 %v1875, %v1989
        %v1992 = vmul.f32 %v1876, %v1988
        %v1993 = vmul.f32 %v1877, %v1989
        %v1994 = vmul.f32 %v1878, %v1988
        %v1995 = vmul.f32 %v1879, %v1989
        %v1996 = vmul.f32 %v1880, %v1988
        %v1997 = vmul.f32 %v1881, %v1989
        %v1998 = vmul.f32 %v1882, %v1988
        %v1999 = vmul.f32 %v1883, %v1989
        %v2000 = vmul.f32 %v1884, %v1988
        %v2001 = vmul.f32 %v1885, %v1989
        %v2002 = vmul.f32 %v1886, %v1988
        %v2003 = vmul.f32 %v1887, %v1989
        %v2004 = vmul.f32 %v1888, %v1988
        %v2005 = vmul.f32 %v1889, %v1989
        %v2006 = vadd.f32 %v1972, %v1990
        %v2007 = vadd.f32 %v1973, %v1991
        %v2008 = vadd.f32 %v1974, %v1992
        %v2009 = vadd.f32 %v1975, %v1993
        %v2010 = vadd.f32 %v1976, %v1994
        %v2011 = vadd.f32 %v1977, %v1995
        %v2012 = vadd.f32 %v1978, %v1996
        %v2013 = vadd.f32 %v1979, %v1997
        %v2014 = vadd.f32 %v1980, %v1998
        %v2015 = vadd.f32 %v1981, %v1999
        %v2016 = vadd.f32 %v1982, %v2000
        %v2017 = vadd.f32 %v1983, %v2001
        %v2018 = vadd.f32 %v1984, %v2002
        %v2019 = vadd.f32 %v1985, %v2003
        %v2020 = vadd.f32 %v1986, %v2004
        %v2021 = vadd.f32 %v1987, %v2005
        %v2022 = vrot.slane %v1874, 1
        %v2023 = vrot.slane %v1875, 1
        %v2024 = vsel %vm1075, %v2022, %v2023
        %v2025 = vrot.slane %v1876, 1
        %v2026 = vrot.slane %v1877, 1
        %v2027 = vsel %vm1075, %v2025, %v2026
        %v2028 = vrot.slane %v1878, 1
        %v2029 = vrot.slane %v1879, 1
        %v2030 = vsel %vm1075, %v2028, %v2029
        %v2031 = vrot.slane %v1880, 1
        %v2032 = vrot.slane %v1881, 1
        %v2033 = vsel %vm1075, %v2031, %v2032
        %v2034 = vrot.slane %v1882, 1
        %v2035 = vrot.slane %v1883, 1
        %v2036 = vsel %vm1075, %v2034, %v2035
        %v2037 = vrot.slane %v1884, 1
        %v2038 = vrot.slane %v1885, 1
        %v2039 = vsel %vm1075, %v2037, %v2038
        %v2040 = vrot.slane %v1886, 1
        %v2041 = vrot.slane %v1887, 1
        %v2042 = vsel %vm1075, %v2040, %v2041
        %v2043 = vrot.slane %v1888, 1
        %v2044 = vrot.slane %v1889, 1
        %v2045 = vsel %vm1075, %v2043, %v2044
        %v2062 = vsel %vm1075, %v2023, 0.0
        %v2063 = vsel %vm1075, %v2026, 0.0
        %v2064 = vsel %vm1075, %v2029, 0.0
        %v2065 = vsel %vm1075, %v2032, 0.0
        %v2066 = vsel %vm1075, %v2035, 0.0
        %v2067 = vsel %vm1075, %v2038, 0.0
        %v2068 = vsel %vm1075, %v2041, 0.0
        %v2069 = vsel %vm1075, %v2044, 0.0
        %v2070 = vld [vmem:[%s1357] sm:$0xff]
        %v2071 = vld [vmem:[%s1357 + $0x8] sm:$0xff]
        %v2072 = vmul.f32 %v2024, %v2070
        %v2073 = vmul.f32 %v2062, %v2071
        %v2074 = vmul.f32 %v2027, %v2070
        %v2075 = vmul.f32 %v2063, %v2071
        %v2076 = vmul.f32 %v2030, %v2070
        %v2077 = vmul.f32 %v2064, %v2071
        %v2078 = vmul.f32 %v2033, %v2070
        %v2079 = vmul.f32 %v2065, %v2071
        %v2080 = vmul.f32 %v2036, %v2070
        %v2081 = vmul.f32 %v2066, %v2071
        %v2082 = vmul.f32 %v2039, %v2070
        %v2083 = vmul.f32 %v2067, %v2071
        %v2084 = vmul.f32 %v2042, %v2070
        %v2085 = vmul.f32 %v2068, %v2071
        %v2086 = vmul.f32 %v2045, %v2070
        %v2087 = vmul.f32 %v2069, %v2071
        %v2088 = vadd.f32 %v2006, %v2072
        %v2089 = vadd.f32 %v2007, %v2073
        %v2090 = vadd.f32 %v2008, %v2074
        %v2091 = vadd.f32 %v2009, %v2075
        %v2092 = vadd.f32 %v2010, %v2076
        %v2093 = vadd.f32 %v2011, %v2077
        %v2094 = vadd.f32 %v2012, %v2078
        %v2095 = vadd.f32 %v2013, %v2079
        %v2096 = vadd.f32 %v2014, %v2080
        %v2097 = vadd.f32 %v2015, %v2081
        %v2098 = vadd.f32 %v2016, %v2082
        %v2099 = vadd.f32 %v2017, %v2083
        %v2100 = vadd.f32 %v2018, %v2084
        %v2101 = vadd.f32 %v2019, %v2085
        %v2102 = vadd.f32 %v2020, %v2086
        %v2103 = vadd.f32 %v2021, %v2087
        %s2104 = scalar_lea.vmem [#allocation2], 160
        %v2105 = vld [vmem:[%s2104] sm:$0xff]
        %v2106 = vld [vmem:[%s2104 + $0x8] sm:$0xff]
        %v2107 = vld [vmem:[%s2104 + $0x10] sm:$0xff]
        %v2108 = vld [vmem:[%s2104 + $0x18] sm:$0xff]
        %v2109 = vld [vmem:[%s2104 + $0x20] sm:$0xff]
        %v2110 = vld [vmem:[%s2104 + $0x28] sm:$0xff]
        %v2111 = vld [vmem:[%s2104 + $0x30] sm:$0xff]
        %v2112 = vld [vmem:[%s2104 + $0x38] sm:$0xff]
        %v2113 = vld [vmem:[%s2104 + $0x40] sm:$0xff]
        %v2114 = vld [vmem:[%s2104 + $0x48] sm:$0xff]
        %v2115 = vld [vmem:[%s2104 + $0x50] sm:$0xff]
        %v2116 = vld [vmem:[%s2104 + $0x58] sm:$0xff]
        %v2117 = vld [vmem:[%s2104 + $0x60] sm:$0xff]
        %v2118 = vld [vmem:[%s2104 + $0x68] sm:$0xff]
        %v2119 = vld [vmem:[%s2104 + $0x70] sm:$0xff]
        %v2120 = vld [vmem:[%s2104 + $0x78] sm:$0xff]
        %v2137 = vrot.slane %v2105, 7
        %v2138 = vrot.slane %v2106, 7
        %v2139 = vsel %vm973, %v2137, %v2138
        %v2140 = vrot.slane %v2107, 7
        %v2141 = vrot.slane %v2108, 7
        %v2142 = vsel %vm973, %v2140, %v2141
        %v2143 = vrot.slane %v2109, 7
        %v2144 = vrot.slane %v2110, 7
        %v2145 = vsel %vm973, %v2143, %v2144
        %v2146 = vrot.slane %v2111, 7
        %v2147 = vrot.slane %v2112, 7
        %v2148 = vsel %vm973, %v2146, %v2147
        %v2149 = vrot.slane %v2113, 7
        %v2150 = vrot.slane %v2114, 7
        %v2151 = vsel %vm973, %v2149, %v2150
        %v2152 = vrot.slane %v2115, 7
        %v2153 = vrot.slane %v2116, 7
        %v2154 = vsel %vm973, %v2152, %v2153
        %v2155 = vrot.slane %v2117, 7
        %v2156 = vrot.slane %v2118, 7
        %v2157 = vsel %vm973, %v2155, %v2156
        %v2158 = vrot.slane %v2119, 7
        %v2159 = vrot.slane %v2120, 7
        %v2160 = vsel %vm973, %v2158, %v2159
        %v2177 = vsel %vm973, 0.0, %v2137
        %v2178 = vsel %vm973, 0.0, %v2140
        %v2179 = vsel %vm973, 0.0, %v2143
        %v2180 = vsel %vm973, 0.0, %v2146
        %v2181 = vsel %vm973, 0.0, %v2149
        %v2182 = vsel %vm973, 0.0, %v2152
        %v2183 = vsel %vm973, 0.0, %v2155
        %v2184 = vsel %vm973, 0.0, %v2158
        %v2185 = vld [vmem:[%s1473] sm:$0xff]
        %v2186 = vld [vmem:[%s1473 + $0x8] sm:$0xff]
        %v2187 = vmul.f32 %v2177, %v2185
        %v2188 = vmul.f32 %v2139, %v2186
        %v2189 = vmul.f32 %v2178, %v2185
        %v2190 = vmul.f32 %v2142, %v2186
        %v2191 = vmul.f32 %v2179, %v2185
        %v2192 = vmul.f32 %v2145, %v2186
        %v2193 = vmul.f32 %v2180, %v2185
        %v2194 = vmul.f32 %v2148, %v2186
        %v2195 = vmul.f32 %v2181, %v2185
        %v2196 = vmul.f32 %v2151, %v2186
        %v2197 = vmul.f32 %v2182, %v2185
        %v2198 = vmul.f32 %v2154, %v2186
        %v2199 = vmul.f32 %v2183, %v2185
        %v2200 = vmul.f32 %v2157, %v2186
        %v2201 = vmul.f32 %v2184, %v2185
        %v2202 = vmul.f32 %v2160, %v2186
        %v2203 = vadd.f32 %v2088, %v2187
        %v2204 = vadd.f32 %v2089, %v2188
        %v2205 = vadd.f32 %v2090, %v2189
        %v2206 = vadd.f32 %v2091, %v2190
        %v2207 = vadd.f32 %v2092, %v2191
        %v2208 = vadd.f32 %v2093, %v2192
        %v2209 = vadd.f32 %v2094, %v2193
        %v2210 = vadd.f32 %v2095, %v2194
        %v2211 = vadd.f32 %v2096, %v2195
        %v2212 = vadd.f32 %v2097, %v2196
        %v2213 = vadd.f32 %v2098, %v2197
        %v2214 = vadd.f32 %v2099, %v2198
        %v2215 = vadd.f32 %v2100, %v2199
        %v2216 = vadd.f32 %v2101, %v2200
        %v2217 = vadd.f32 %v2102, %v2201
        %v2218 = vadd.f32 %v2103, %v2202
        %v2219 = vld [vmem:[%s1508] sm:$0xff]
        %v2220 = vld [vmem:[%s1508 + $0x8] sm:$0xff]
        %v2221 = vmul.f32 %v2105, %v2219
        %v2222 = vmul.f32 %v2106, %v2220
        %v2223 = vmul.f32 %v2107, %v2219
        %v2224 = vmul.f32 %v2108, %v2220
        %v2225 = vmul.f32 %v2109, %v2219
        %v2226 = vmul.f32 %v2110, %v2220
        %v2227 = vmul.f32 %v2111, %v2219
        %v2228 = vmul.f32 %v2112, %v2220
        %v2229 = vmul.f32 %v2113, %v2219
        %v2230 = vmul.f32 %v2114, %v2220
        %v2231 = vmul.f32 %v2115, %v2219
        %v2232 = vmul.f32 %v2116, %v2220
        %v2233 = vmul.f32 %v2117, %v2219
        %v2234 = vmul.f32 %v2118, %v2220
        %v2235 = vmul.f32 %v2119, %v2219
        %v2236 = vmul.f32 %v2120, %v2220
        %v2237 = vadd.f32 %v2203, %v2221
        %v2238 = vadd.f32 %v2204, %v2222
        %v2239 = vadd.f32 %v2205, %v2223
        %v2240 = vadd.f32 %v2206, %v2224
        %v2241 = vadd.f32 %v2207, %v2225
        %v2242 = vadd.f32 %v2208, %v2226
        %v2243 = vadd.f32 %v2209, %v2227
        %v2244 = vadd.f32 %v2210, %v2228
        %v2245 = vadd.f32 %v2211, %v2229
        %v2246 = vadd.f32 %v2212, %v2230
        %v2247 = vadd.f32 %v2213, %v2231
        %v2248 = vadd.f32 %v2214, %v2232
        %v2249 = vadd.f32 %v2215, %v2233
        %v2250 = vadd.f32 %v2216, %v2234
        %v2251 = vadd.f32 %v2217, %v2235
        %v2252 = vadd.f32 %v2218, %v2236
        %v2253 = vrot.slane %v2105, 1
        %v2254 = vrot.slane %v2106, 1
        %v2255 = vsel %vm1075, %v2253, %v2254
        %v2256 = vrot.slane %v2107, 1
        %v2257 = vrot.slane %v2108, 1
        %v2258 = vsel %vm1075, %v2256, %v2257
        %v2259 = vrot.slane %v2109, 1
        %v2260 = vrot.slane %v2110, 1
        %v2261 = vsel %vm1075, %v2259, %v2260
        %v2262 = vrot.slane %v2111, 1
        %v2263 = vrot.slane %v2112, 1
        %v2264 = vsel %vm1075, %v2262, %v2263
        %v2265 = vrot.slane %v2113, 1
        %v2266 = vrot.slane %v2114, 1
        %v2267 = vsel %vm1075, %v2265, %v2266
        %v2268 = vrot.slane %v2115, 1
        %v2269 = vrot.slane %v2116, 1
        %v2270 = vsel %vm1075, %v2268, %v2269
        %v2271 = vrot.slane %v2117, 1
        %v2272 = vrot.slane %v2118, 1
        %v2273 = vsel %vm1075, %v2271, %v2272
        %v2274 = vrot.slane %v2119, 1
        %v2275 = vrot.slane %v2120, 1
        %v2276 = vsel %vm1075, %v2274, %v2275
        %v2293 = vsel %vm1075, %v2254, 0.0
        %v2294 = vsel %vm1075, %v2257, 0.0
        %v2295 = vsel %vm1075, %v2260, 0.0
        %v2296 = vsel %vm1075, %v2263, 0.0
        %v2297 = vsel %vm1075, %v2266, 0.0
        %v2298 = vsel %vm1075, %v2269, 0.0
        %v2299 = vsel %vm1075, %v2272, 0.0
        %v2300 = vsel %vm1075, %v2275, 0.0
        %v2301 = vld [vmem:[%s1591] sm:$0xff]
        %v2302 = vld [vmem:[%s1591 + $0x8] sm:$0xff]
        %v2303 = vmul.f32 %v2255, %v2301
        %v2304 = vmul.f32 %v2293, %v2302
        %v2305 = vmul.f32 %v2258, %v2301
        %v2306 = vmul.f32 %v2294, %v2302
        %v2307 = vmul.f32 %v2261, %v2301
        %v2308 = vmul.f32 %v2295, %v2302
        %v2309 = vmul.f32 %v2264, %v2301
        %v2310 = vmul.f32 %v2296, %v2302
        %v2311 = vmul.f32 %v2267, %v2301
        %v2312 = vmul.f32 %v2297, %v2302
        %v2313 = vmul.f32 %v2270, %v2301
        %v2314 = vmul.f32 %v2298, %v2302
        %v2315 = vmul.f32 %v2273, %v2301
        %v2316 = vmul.f32 %v2299, %v2302
        %v2317 = vmul.f32 %v2276, %v2301
        %v2318 = vmul.f32 %v2300, %v2302
        %v2319 = vadd.f32 %v2237, %v2303
        %v2320 = vadd.f32 %v2238, %v2304
        %v2321 = vadd.f32 %v2239, %v2305
        %v2322 = vadd.f32 %v2240, %v2306
        %v2323 = vadd.f32 %v2241, %v2307
        %v2324 = vadd.f32 %v2242, %v2308
        %v2325 = vadd.f32 %v2243, %v2309
        %v2326 = vadd.f32 %v2244, %v2310
        %v2327 = vadd.f32 %v2245, %v2311
        %v2328 = vadd.f32 %v2246, %v2312
        %v2329 = vadd.f32 %v2247, %v2313
        %v2330 = vadd.f32 %v2248, %v2314
        %v2331 = vadd.f32 %v2249, %v2315
        %v2332 = vadd.f32 %v2250, %v2316
        %v2333 = vadd.f32 %v2251, %v2317
        %v2334 = vadd.f32 %v2252, %v2318
        %v2335 = vadd.f32 %v2319, %v939
        %v2336 = vadd.f32 %v2320, %v940
        %v2337 = vadd.f32 %v2321, %v939
        %v2338 = vadd.f32 %v2322, %v940
        %v2339 = vadd.f32 %v2323, %v939
        %v2340 = vadd.f32 %v2324, %v940
        %v2341 = vadd.f32 %v2325, %v939
        %v2342 = vadd.f32 %v2326, %v940
        %v2343 = vadd.f32 %v2327, %v939
        %v2344 = vadd.f32 %v2328, %v940
        %v2345 = vadd.f32 %v2329, %v939
        %v2346 = vadd.f32 %v2330, %v940
        %v2347 = vadd.f32 %v2331, %v939
        %v2348 = vadd.f32 %v2332, %v940
        %v2349 = vadd.f32 %v2333, %v939
        %v2350 = vadd.f32 %v2334, %v940
        %s2351 = scalar_lea.vmem %s216, 128 [#allocation6]
        %2352 = vst [vmem:[%s2351] sm:$0xff] %v2335
        %2353 = vst [vmem:[%s2351 + $0x8] sm:$0xff] %v2336
        %2354 = vst [vmem:[%s2351 + $0x10] sm:$0xff] %v2337
        %2355 = vst [vmem:[%s2351 + $0x18] sm:$0xff] %v2338
        %2356 = vst [vmem:[%s2351 + $0x20] sm:$0xff] %v2339
        %2357 = vst [vmem:[%s2351 + $0x28] sm:$0xff] %v2340
        %2358 = vst [vmem:[%s2351 + $0x30] sm:$0xff] %v2341
        %2359 = vst [vmem:[%s2351 + $0x38] sm:$0xff] %v2342
        %2360 = vst [vmem:[%s2351 + $0x40] sm:$0xff] %v2343
        %2361 = vst [vmem:[%s2351 + $0x48] sm:$0xff] %v2344
        %2362 = vst [vmem:[%s2351 + $0x50] sm:$0xff] %v2345
        %2363 = vst [vmem:[%s2351 + $0x58] sm:$0xff] %v2346
        %2364 = vst [vmem:[%s2351 + $0x60] sm:$0xff] %v2347
        %2365 = vst [vmem:[%s2351 + $0x68] sm:$0xff] %v2348
        %2366 = vst [vmem:[%s2351 + $0x70] sm:$0xff] %v2349
        %2367 = vst [vmem:[%s2351 + $0x78] sm:$0xff] %v2350
        %s2368 = scalar_lea.vmem [#allocation2], 288
        %v2369 = vld [vmem:[%s2368] sm:$0xff]
        %v2370 = vld [vmem:[%s2368 + $0x8] sm:$0xff]
        %v2371 = vld [vmem:[%s2368 + $0x10] sm:$0xff]
        %v2372 = vld [vmem:[%s2368 + $0x18] sm:$0xff]
        %v2373 = vld [vmem:[%s2368 + $0x20] sm:$0xff]
        %v2374 = vld [vmem:[%s2368 + $0x28] sm:$0xff]
        %v2375 = vld [vmem:[%s2368 + $0x30] sm:$0xff]
        %v2376 = vld [vmem:[%s2368 + $0x38] sm:$0xff]
        %v2377 = vld [vmem:[%s2368 + $0x40] sm:$0xff]
        %v2378 = vld [vmem:[%s2368 + $0x48] sm:$0xff]
        %v2379 = vld [vmem:[%s2368 + $0x50] sm:$0xff]
        %v2380 = vld [vmem:[%s2368 + $0x58] sm:$0xff]
        %v2381 = vld [vmem:[%s2368 + $0x60] sm:$0xff]
        %v2382 = vld [vmem:[%s2368 + $0x68] sm:$0xff]
        %v2383 = vld [vmem:[%s2368 + $0x70] sm:$0xff]
        %v2384 = vld [vmem:[%s2368 + $0x78] sm:$0xff]
        %v2401 = vrot.slane %v2369, 7
        %v2402 = vrot.slane %v2370, 7
        %v2403 = vsel %vm973, %v2401, %v2402
        %v2404 = vrot.slane %v2371, 7
        %v2405 = vrot.slane %v2372, 7
        %v2406 = vsel %vm973, %v2404, %v2405
        %v2407 = vrot.slane %v2373, 7
        %v2408 = vrot.slane %v2374, 7
        %v2409 = vsel %vm973, %v2407, %v2408
        %v2410 = vrot.slane %v2375, 7
        %v2411 = vrot.slane %v2376, 7
        %v2412 = vsel %vm973, %v2410, %v2411
        %v2413 = vrot.slane %v2377, 7
        %v2414 = vrot.slane %v2378, 7
        %v2415 = vsel %vm973, %v2413, %v2414
        %v2416 = vrot.slane %v2379, 7
        %v2417 = vrot.slane %v2380, 7
        %v2418 = vsel %vm973, %v2416, %v2417
        %v2419 = vrot.slane %v2381, 7
        %v2420 = vrot.slane %v2382, 7
        %v2421 = vsel %vm973, %v2419, %v2420
        %v2422 = vrot.slane %v2383, 7
        %v2423 = vrot.slane %v2384, 7
        %v2424 = vsel %vm973, %v2422, %v2423
        %v2441 = vsel %vm973, 0.0, %v2401
        %v2442 = vsel %vm973, 0.0, %v2404
        %v2443 = vsel %vm973, 0.0, %v2407
        %v2444 = vsel %vm973, 0.0, %v2410
        %v2445 = vsel %vm973, 0.0, %v2413
        %v2446 = vsel %vm973, 0.0, %v2416
        %v2447 = vsel %vm973, 0.0, %v2419
        %v2448 = vsel %vm973, 0.0, %v2422
        %v2449 = vld [vmem:[%s3] sm:$0xff]
        %v2450 = vld [vmem:[%s3 + $0x8] sm:$0xff]
        %v2451 = vmul.f32 %v2441, %v2449
        %v2452 = vmul.f32 %v2403, %v2450
        %v2453 = vmul.f32 %v2442, %v2449
        %v2454 = vmul.f32 %v2406, %v2450
        %v2455 = vmul.f32 %v2443, %v2449
        %v2456 = vmul.f32 %v2409, %v2450
        %v2457 = vmul.f32 %v2444, %v2449
        %v2458 = vmul.f32 %v2412, %v2450
        %v2459 = vmul.f32 %v2445, %v2449
        %v2460 = vmul.f32 %v2415, %v2450
        %v2461 = vmul.f32 %v2446, %v2449
        %v2462 = vmul.f32 %v2418, %v2450
        %v2463 = vmul.f32 %v2447, %v2449
        %v2464 = vmul.f32 %v2421, %v2450
        %v2465 = vmul.f32 %v2448, %v2449
        %v2466 = vmul.f32 %v2424, %v2450
        %v2467 = vld [vmem:[%s1040] sm:$0xff]
        %v2468 = vld [vmem:[%s1040 + $0x8] sm:$0xff]
        %v2469 = vmul.f32 %v2369, %v2467
        %v2470 = vmul.f32 %v2370, %v2468
        %v2471 = vmul.f32 %v2371, %v2467
        %v2472 = vmul.f32 %v2372, %v2468
        %v2473 = vmul.f32 %v2373, %v2467
        %v2474 = vmul.f32 %v2374, %v2468
        %v2475 = vmul.f32 %v2375, %v2467
        %v2476 = vmul.f32 %v2376, %v2468
        %v2477 = vmul.f32 %v2377, %v2467
        %v2478 = vmul.f32 %v2378, %v2468
        %v2479 = vmul.f32 %v2379, %v2467
        %v2480 = vmul.f32 %v2380, %v2468
        %v2481 = vmul.f32 %v2381, %v2467
        %v2482 = vmul.f32 %v2382, %v2468
        %v2483 = vmul.f32 %v2383, %v2467
        %v2484 = vmul.f32 %v2384, %v2468
        %v2485 = vadd.f32 %v2451, %v2469
        %v2486 = vadd.f32 %v2452, %v2470
        %v2487 = vadd.f32 %v2453, %v2471
        %v2488 = vadd.f32 %v2454, %v2472
        %v2489 = vadd.f32 %v2455, %v2473
        %v2490 = vadd.f32 %v2456, %v2474
        %v2491 = vadd.f32 %v2457, %v2475
        %v2492 = vadd.f32 %v2458, %v2476
        %v2493 = vadd.f32 %v2459, %v2477
        %v2494 = vadd.f32 %v2460, %v2478
        %v2495 = vadd.f32 %v2461, %v2479
        %v2496 = vadd.f32 %v2462, %v2480
        %v2497 = vadd.f32 %v2463, %v2481
        %v2498 = vadd.f32 %v2464, %v2482
        %v2499 = vadd.f32 %v2465, %v2483
        %v2500 = vadd.f32 %v2466, %v2484
        %v2501 = vrot.slane %v2369, 1
        %v2502 = vrot.slane %v2370, 1
        %v2503 = vsel %vm1075, %v2501, %v2502
        %v2504 = vrot.slane %v2371, 1
        %v2505 = vrot.slane %v2372, 1
        %v2506 = vsel %vm1075, %v2504, %v2505
        %v2507 = vrot.slane %v2373, 1
        %v2508 = vrot.slane %v2374, 1
        %v2509 = vsel %vm1075, %v2507, %v2508
        %v2510 = vrot.slane %v2375, 1
        %v2511 = vrot.slane %v2376, 1
        %v2512 = vsel %vm1075, %v2510, %v2511
        %v2513 = vrot.slane %v2377, 1
        %v2514 = vrot.slane %v2378, 1
        %v2515 = vsel %vm1075, %v2513, %v2514
        %v2516 = vrot.slane %v2379, 1
        %v2517 = vrot.slane %v2380, 1
        %v2518 = vsel %vm1075, %v2516, %v2517
        %v2519 = vrot.slane %v2381, 1
        %v2520 = vrot.slane %v2382, 1
        %v2521 = vsel %vm1075, %v2519, %v2520
        %v2522 = vrot.slane %v2383, 1
        %v2523 = vrot.slane %v2384, 1
        %v2524 = vsel %vm1075, %v2522, %v2523
        %v2541 = vsel %vm1075, %v2502, 0.0
        %v2542 = vsel %vm1075, %v2505, 0.0
        %v2543 = vsel %vm1075, %v2508, 0.0
        %v2544 = vsel %vm1075, %v2511, 0.0
        %v2545 = vsel %vm1075, %v2514, 0.0
        %v2546 = vsel %vm1075, %v2517, 0.0
        %v2547 = vsel %vm1075, %v2520, 0.0
        %v2548 = vsel %vm1075, %v2523, 0.0
        %v2549 = vld [vmem:[%s1124] sm:$0xff]
        %v2550 = vld [vmem:[%s1124 + $0x8] sm:$0xff]
        %v2551 = vmul.f32 %v2503, %v2549
        %v2552 = vmul.f32 %v2541, %v2550
        %v2553 = vmul.f32 %v2506, %v2549
        %v2554 = vmul.f32 %v2542, %v2550
        %v2555 = vmul.f32 %v2509, %v2549
        %v2556 = vmul.f32 %v2543, %v2550
        %v2557 = vmul.f32 %v2512, %v2549
        %v2558 = vmul.f32 %v2544, %v2550
        %v2559 = vmul.f32 %v2515, %v2549
        %v2560 = vmul.f32 %v2545, %v2550
        %v2561 = vmul.f32 %v2518, %v2549
        %v2562 = vmul.f32 %v2546, %v2550
        %v2563 = vmul.f32 %v2521, %v2549
        %v2564 = vmul.f32 %v2547, %v2550
        %v2565 = vmul.f32 %v2524, %v2549
        %v2566 = vmul.f32 %v2548, %v2550
        %v2567 = vadd.f32 %v2485, %v2551
        %v2568 = vadd.f32 %v2486, %v2552
        %v2569 = vadd.f32 %v2487, %v2553
        %v2570 = vadd.f32 %v2488, %v2554
        %v2571 = vadd.f32 %v2489, %v2555
        %v2572 = vadd.f32 %v2490, %v2556
        %v2573 = vadd.f32 %v2491, %v2557
        %v2574 = vadd.f32 %v2492, %v2558
        %v2575 = vadd.f32 %v2493, %v2559
        %v2576 = vadd.f32 %v2494, %v2560
        %v2577 = vadd.f32 %v2495, %v2561
        %v2578 = vadd.f32 %v2496, %v2562
        %v2579 = vadd.f32 %v2497, %v2563
        %v2580 = vadd.f32 %v2498, %v2564
        %v2581 = vadd.f32 %v2499, %v2565
        %v2582 = vadd.f32 %v2500, %v2566
        %s2583 = scalar_lea.vmem [#allocation2], 304
        %v2584 = vld [vmem:[%s2583] sm:$0xff]
        %v2585 = vld [vmem:[%s2583 + $0x8] sm:$0xff]
        %v2586 = vld [vmem:[%s2583 + $0x10] sm:$0xff]
        %v2587 = vld [vmem:[%s2583 + $0x18] sm:$0xff]
        %v2588 = vld [vmem:[%s2583 + $0x20] sm:$0xff]
        %v2589 = vld [vmem:[%s2583 + $0x28] sm:$0xff]
        %v2590 = vld [vmem:[%s2583 + $0x30] sm:$0xff]
        %v2591 = vld [vmem:[%s2583 + $0x38] sm:$0xff]
        %v2592 = vld [vmem:[%s2583 + $0x40] sm:$0xff]
        %v2593 = vld [vmem:[%s2583 + $0x48] sm:$0xff]
        %v2594 = vld [vmem:[%s2583 + $0x50] sm:$0xff]
        %v2595 = vld [vmem:[%s2583 + $0x58] sm:$0xff]
        %v2596 = vld [vmem:[%s2583 + $0x60] sm:$0xff]
        %v2597 = vld [vmem:[%s2583 + $0x68] sm:$0xff]
        %v2598 = vld [vmem:[%s2583 + $0x70] sm:$0xff]
        %v2599 = vld [vmem:[%s2583 + $0x78] sm:$0xff]
        %v2616 = vrot.slane %v2584, 7
        %v2617 = vrot.slane %v2585, 7
        %v2618 = vsel %vm973, %v2616, %v2617
        %v2619 = vrot.slane %v2586, 7
        %v2620 = vrot.slane %v2587, 7
        %v2621 = vsel %vm973, %v2619, %v2620
        %v2622 = vrot.slane %v2588, 7
        %v2623 = vrot.slane %v2589, 7
        %v2624 = vsel %vm973, %v2622, %v2623
        %v2625 = vrot.slane %v2590, 7
        %v2626 = vrot.slane %v2591, 7
        %v2627 = vsel %vm973, %v2625, %v2626
        %v2628 = vrot.slane %v2592, 7
        %v2629 = vrot.slane %v2593, 7
        %v2630 = vsel %vm973, %v2628, %v2629
        %v2631 = vrot.slane %v2594, 7
        %v2632 = vrot.slane %v2595, 7
        %v2633 = vsel %vm973, %v2631, %v2632
        %v2634 = vrot.slane %v2596, 7
        %v2635 = vrot.slane %v2597, 7
        %v2636 = vsel %vm973, %v2634, %v2635
        %v2637 = vrot.slane %v2598, 7
        %v2638 = vrot.slane %v2599, 7
        %v2639 = vsel %vm973, %v2637, %v2638
        %v2656 = vsel %vm973, 0.0, %v2616
        %v2657 = vsel %vm973, 0.0, %v2619
        %v2658 = vsel %vm973, 0.0, %v2622
        %v2659 = vsel %vm973, 0.0, %v2625
        %v2660 = vsel %vm973, 0.0, %v2628
        %v2661 = vsel %vm973, 0.0, %v2631
        %v2662 = vsel %vm973, 0.0, %v2634
        %v2663 = vsel %vm973, 0.0, %v2637
        %v2664 = vld [vmem:[%s1239] sm:$0xff]
        %v2665 = vld [vmem:[%s1239 + $0x8] sm:$0xff]
        %v2666 = vmul.f32 %v2656, %v2664
        %v2667 = vmul.f32 %v2618, %v2665
        %v2668 = vmul.f32 %v2657, %v2664
        %v2669 = vmul.f32 %v2621, %v2665
        %v2670 = vmul.f32 %v2658, %v2664
        %v2671 = vmul.f32 %v2624, %v2665
        %v2672 = vmul.f32 %v2659, %v2664
        %v2673 = vmul.f32 %v2627, %v2665
        %v2674 = vmul.f32 %v2660, %v2664
        %v2675 = vmul.f32 %v2630, %v2665
        %v2676 = vmul.f32 %v2661, %v2664
        %v2677 = vmul.f32 %v2633, %v2665
        %v2678 = vmul.f32 %v2662, %v2664
        %v2679 = vmul.f32 %v2636, %v2665
        %v2680 = vmul.f32 %v2663, %v2664
        %v2681 = vmul.f32 %v2639, %v2665
        %v2682 = vadd.f32 %v2567, %v2666
        %v2683 = vadd.f32 %v2568, %v2667
        %v2684 = vadd.f32 %v2569, %v2668
        %v2685 = vadd.f32 %v2570, %v2669
        %v2686 = vadd.f32 %v2571, %v2670
        %v2687 = vadd.f32 %v2572, %v2671
        %v2688 = vadd.f32 %v2573, %v2672
        %v2689 = vadd.f32 %v2574, %v2673
        %v2690 = vadd.f32 %v2575, %v2674
        %v2691 = vadd.f32 %v2576, %v2675
        %v2692 = vadd.f32 %v2577, %v2676
        %v2693 = vadd.f32 %v2578, %v2677
        %v2694 = vadd.f32 %v2579, %v2678
        %v2695 = vadd.f32 %v2580, %v2679
        %v2696 = vadd.f32 %v2581, %v2680
        %v2697 = vadd.f32 %v2582, %v2681
        %v2698 = vld [vmem:[%s1274] sm:$0xff]
        %v2699 = vld [vmem:[%s1274 + $0x8] sm:$0xff]
        %v2700 = vmul.f32 %v2584, %v2698
        %v2701 = vmul.f32 %v2585, %v2699
        %v2702 = vmul.f32 %v2586, %v2698
        %v2703 = vmul.f32 %v2587, %v2699
        %v2704 = vmul.f32 %v2588, %v2698
        %v2705 = vmul.f32 %v2589, %v2699
        %v2706 = vmul.f32 %v2590, %v2698
        %v2707 = vmul.f32 %v2591, %v2699
        %v2708 = vmul.f32 %v2592, %v2698
        %v2709 = vmul.f32 %v2593, %v2699
        %v2710 = vmul.f32 %v2594, %v2698
        %v2711 = vmul.f32 %v2595, %v2699
        %v2712 = vmul.f32 %v2596, %v2698
        %v2713 = vmul.f32 %v2597, %v2699
        %v2714 = vmul.f32 %v2598, %v2698
        %v2715 = vmul.f32 %v2599, %v2699
        %v2716 = vadd.f32 %v2682, %v2700
        %v2717 = vadd.f32 %v2683, %v2701
        %v2718 = vadd.f32 %v2684, %v2702
        %v2719 = vadd.f32 %v2685, %v2703
        %v2720 = vadd.f32 %v2686, %v2704
        %v2721 = vadd.f32 %v2687, %v2705
        %v2722 = vadd.f32 %v2688, %v2706
        %v2723 = vadd.f32 %v2689, %v2707
        %v2724 = vadd.f32 %v2690, %v2708
        %v2725 = vadd.f32 %v2691, %v2709
        %v2726 = vadd.f32 %v2692, %v2710
        %v2727 = vadd.f32 %v2693, %v2711
        %v2728 = vadd.f32 %v2694, %v2712
        %v2729 = vadd.f32 %v2695, %v2713
        %v2730 = vadd.f32 %v2696, %v2714
        %v2731 = vadd.f32 %v2697, %v2715
        %v2732 = vrot.slane %v2584, 1
        %v2733 = vrot.slane %v2585, 1
        %v2734 = vsel %vm1075, %v2732, %v2733
        %v2735 = vrot.slane %v2586, 1
        %v2736 = vrot.slane %v2587, 1
        %v2737 = vsel %vm1075, %v2735, %v2736
        %v2738 = vrot.slane %v2588, 1
        %v2739 = vrot.slane %v2589, 1
        %v2740 = vsel %vm1075, %v2738, %v2739
        %v2741 = vrot.slane %v2590, 1
        %v2742 = vrot.slane %v2591, 1
        %v2743 = vsel %vm1075, %v2741, %v2742
        %v2744 = vrot.slane %v2592, 1
        %v2745 = vrot.slane %v2593, 1
        %v2746 = vsel %vm1075, %v2744, %v2745
        %v2747 = vrot.slane %v2594, 1
        %v2748 = vrot.slane %v2595, 1
        %v2749 = vsel %vm1075, %v2747, %v2748
        %v2750 = vrot.slane %v2596, 1
        %v2751 = vrot.slane %v2597, 1
        %v2752 = vsel %vm1075, %v2750, %v2751
        %v2753 = vrot.slane %v2598, 1
        %v2754 = vrot.slane %v2599, 1
        %v2755 = vsel %vm1075, %v2753, %v2754
        %v2772 = vsel %vm1075, %v2733, 0.0
        %v2773 = vsel %vm1075, %v2736, 0.0
        %v2774 = vsel %vm1075, %v2739, 0.0
        %v2775 = vsel %vm1075, %v2742, 0.0
        %v2776 = vsel %vm1075, %v2745, 0.0
        %v2777 = vsel %vm1075, %v2748, 0.0
        %v2778 = vsel %vm1075, %v2751, 0.0
        %v2779 = vsel %vm1075, %v2754, 0.0
        %v2780 = vld [vmem:[%s1357] sm:$0xff]
        %v2781 = vld [vmem:[%s1357 + $0x8] sm:$0xff]
        %v2782 = vmul.f32 %v2734, %v2780
        %v2783 = vmul.f32 %v2772, %v2781
        %v2784 = vmul.f32 %v2737, %v2780
        %v2785 = vmul.f32 %v2773, %v2781
        %v2786 = vmul.f32 %v2740, %v2780
        %v2787 = vmul.f32 %v2774, %v2781
        %v2788 = vmul.f32 %v2743, %v2780
        %v2789 = vmul.f32 %v2775, %v2781
        %v2790 = vmul.f32 %v2746, %v2780
        %v2791 = vmul.f32 %v2776, %v2781
        %v2792 = vmul.f32 %v2749, %v2780
        %v2793 = vmul.f32 %v2777, %v2781
        %v2794 = vmul.f32 %v2752, %v2780
        %v2795 = vmul.f32 %v2778, %v2781
        %v2796 = vmul.f32 %v2755, %v2780
        %v2797 = vmul.f32 %v2779, %v2781
        %v2798 = vadd.f32 %v2716, %v2782
        %v2799 = vadd.f32 %v2717, %v2783
        %v2800 = vadd.f32 %v2718, %v2784
        %v2801 = vadd.f32 %v2719, %v2785
        %v2802 = vadd.f32 %v2720, %v2786
        %v2803 = vadd.f32 %v2721, %v2787
        %v2804 = vadd.f32 %v2722, %v2788
        %v2805 = vadd.f32 %v2723, %v2789
        %v2806 = vadd.f32 %v2724, %v2790
        %v2807 = vadd.f32 %v2725, %v2791
        %v2808 = vadd.f32 %v2726, %v2792
        %v2809 = vadd.f32 %v2727, %v2793
        %v2810 = vadd.f32 %v2728, %v2794
        %v2811 = vadd.f32 %v2729, %v2795
        %v2812 = vadd.f32 %v2730, %v2796
        %v2813 = vadd.f32 %v2731, %v2797
        %s2814 = scalar_lea.vmem [#allocation2], 320
        %v2815 = vld [vmem:[%s2814] sm:$0xff]
        %v2816 = vld [vmem:[%s2814 + $0x8] sm:$0xff]
        %v2817 = vld [vmem:[%s2814 + $0x10] sm:$0xff]
        %v2818 = vld [vmem:[%s2814 + $0x18] sm:$0xff]
        %v2819 = vld [vmem:[%s2814 + $0x20] sm:$0xff]
        %v2820 = vld [vmem:[%s2814 + $0x28] sm:$0xff]
        %v2821 = vld [vmem:[%s2814 + $0x30] sm:$0xff]
        %v2822 = vld [vmem:[%s2814 + $0x38] sm:$0xff]
        %v2823 = vld [vmem:[%s2814 + $0x40] sm:$0xff]
        %v2824 = vld [vmem:[%s2814 + $0x48] sm:$0xff]
        %v2825 = vld [vmem:[%s2814 + $0x50] sm:$0xff]
        %v2826 = vld [vmem:[%s2814 + $0x58] sm:$0xff]
        %v2827 = vld [vmem:[%s2814 + $0x60] sm:$0xff]
        %v2828 = vld [vmem:[%s2814 + $0x68] sm:$0xff]
        %v2829 = vld [vmem:[%s2814 + $0x70] sm:$0xff]
        %v2830 = vld [vmem:[%s2814 + $0x78] sm:$0xff]
        %v2847 = vrot.slane %v2815, 7
        %v2848 = vrot.slane %v2816, 7
        %v2849 = vsel %vm973, %v2847, %v2848
        %v2850 = vrot.slane %v2817, 7
        %v2851 = vrot.slane %v2818, 7
        %v2852 = vsel %vm973, %v2850, %v2851
        %v2853 = vrot.slane %v2819, 7
        %v2854 = vrot.slane %v2820, 7
        %v2855 = vsel %vm973, %v2853, %v2854
        %v2856 = vrot.slane %v2821, 7
        %v2857 = vrot.slane %v2822, 7
        %v2858 = vsel %vm973, %v2856, %v2857
        %v2859 = vrot.slane %v2823, 7
        %v2860 = vrot.slane %v2824, 7
        %v2861 = vsel %vm973, %v2859, %v2860
        %v2862 = vrot.slane %v2825, 7
        %v2863 = vrot.slane %v2826, 7
        %v2864 = vsel %vm973, %v2862, %v2863
        %v2865 = vrot.slane %v2827, 7
        %v2866 = vrot.slane %v2828, 7
        %v2867 = vsel %vm973, %v2865, %v2866
        %v2868 = vrot.slane %v2829, 7
        %v2869 = vrot.slane %v2830, 7
        %v2870 = vsel %vm973, %v2868, %v2869
        %v2887 = vsel %vm973, 0.0, %v2847
        %v2888 = vsel %vm973, 0.0, %v2850
        %v2889 = vsel %vm973, 0.0, %v2853
        %v2890 = vsel %vm973, 0.0, %v2856
        %v2891 = vsel %vm973, 0.0, %v2859
        %v2892 = vsel %vm973, 0.0, %v2862
        %v2893 = vsel %vm973, 0.0, %v2865
        %v2894 = vsel %vm973, 0.0, %v2868
        %v2895 = vld [vmem:[%s1473] sm:$0xff]
        %v2896 = vld [vmem:[%s1473 + $0x8] sm:$0xff]
        %v2897 = vmul.f32 %v2887, %v2895
        %v2898 = vmul.f32 %v2849, %v2896
        %v2899 = vmul.f32 %v2888, %v2895
        %v2900 = vmul.f32 %v2852, %v2896
        %v2901 = vmul.f32 %v2889, %v2895
        %v2902 = vmul.f32 %v2855, %v2896
        %v2903 = vmul.f32 %v2890, %v2895
        %v2904 = vmul.f32 %v2858, %v2896
        %v2905 = vmul.f32 %v2891, %v2895
        %v2906 = vmul.f32 %v2861, %v2896
        %v2907 = vmul.f32 %v2892, %v2895
        %v2908 = vmul.f32 %v2864, %v2896
        %v2909 = vmul.f32 %v2893, %v2895
        %v2910 = vmul.f32 %v2867, %v2896
        %v2911 = vmul.f32 %v2894, %v2895
        %v2912 = vmul.f32 %v2870, %v2896
        %v2913 = vadd.f32 %v2798, %v2897
        %v2914 = vadd.f32 %v2799, %v2898
        %v2915 = vadd.f32 %v2800, %v2899
        %v2916 = vadd.f32 %v2801, %v2900
        %v2917 = vadd.f32 %v2802, %v2901
        %v2918 = vadd.f32 %v2803, %v2902
        %v2919 = vadd.f32 %v2804, %v2903
        %v2920 = vadd.f32 %v2805, %v2904
        %v2921 = vadd.f32 %v2806, %v2905
        %v2922 = vadd.f32 %v2807, %v2906
        %v2923 = vadd.f32 %v2808, %v2907
        %v2924 = vadd.f32 %v2809, %v2908
        %v2925 = vadd.f32 %v2810, %v2909
        %v2926 = vadd.f32 %v2811, %v2910
        %v2927 = vadd.f32 %v2812, %v2911
        %v2928 = vadd.f32 %v2813, %v2912
        %v2929 = vld [vmem:[%s1508] sm:$0xff]
        %v2930 = vld [vmem:[%s1508 + $0x8] sm:$0xff]
        %v2931 = vmul.f32 %v2815, %v2929
        %v2932 = vmul.f32 %v2816, %v2930
        %v2933 = vmul.f32 %v2817, %v2929
        %v2934 = vmul.f32 %v2818, %v2930
        %v2935 = vmul.f32 %v2819, %v2929
        %v2936 = vmul.f32 %v2820, %v2930
        %v2937 = vmul.f32 %v2821, %v2929
        %v2938 = vmul.f32 %v2822, %v2930
        %v2939 = vmul.f32 %v2823, %v2929
        %v2940 = vmul.f32 %v2824, %v2930
        %v2941 = vmul.f32 %v2825, %v2929
        %v2942 = vmul.f32 %v2826, %v2930
        %v2943 = vmul.f32 %v2827, %v2929
        %v2944 = vmul.f32 %v2828, %v2930
        %v2945 = vmul.f32 %v2829, %v2929
        %v2946 = vmul.f32 %v2830, %v2930
        %v2947 = vadd.f32 %v2913, %v2931
        %v2948 = vadd.f32 %v2914, %v2932
        %v2949 = vadd.f32 %v2915, %v2933
        %v2950 = vadd.f32 %v2916, %v2934
        %v2951 = vadd.f32 %v2917, %v2935
        %v2952 = vadd.f32 %v2918, %v2936
        %v2953 = vadd.f32 %v2919, %v2937
        %v2954 = vadd.f32 %v2920, %v2938
        %v2955 = vadd.f32 %v2921, %v2939
        %v2956 = vadd.f32 %v2922, %v2940
        %v2957 = vadd.f32 %v2923, %v2941
        %v2958 = vadd.f32 %v2924, %v2942
        %v2959 = vadd.f32 %v2925, %v2943
        %v2960 = vadd.f32 %v2926, %v2944
        %v2961 = vadd.f32 %v2927, %v2945
        %v2962 = vadd.f32 %v2928, %v2946
        %v2963 = vrot.slane %v2815, 1
        %v2964 = vrot.slane %v2816, 1
        %v2965 = vsel %vm1075, %v2963, %v2964
        %v2966 = vrot.slane %v2817, 1
        %v2967 = vrot.slane %v2818, 1
        %v2968 = vsel %vm1075, %v2966, %v2967
        %v2969 = vrot.slane %v2819, 1
        %v2970 = vrot.slane %v2820, 1
        %v2971 = vsel %vm1075, %v2969, %v2970
        %v2972 = vrot.slane %v2821, 1
        %v2973 = vrot.slane %v2822, 1
        %v2974 = vsel %vm1075, %v2972, %v2973
        %v2975 = vrot.slane %v2823, 1
        %v2976 = vrot.slane %v2824, 1
        %v2977 = vsel %vm1075, %v2975, %v2976
        %v2978 = vrot.slane %v2825, 1
        %v2979 = vrot.slane %v2826, 1
        %v2980 = vsel %vm1075, %v2978, %v2979
        %v2981 = vrot.slane %v2827, 1
        %v2982 = vrot.slane %v2828, 1
        %v2983 = vsel %vm1075, %v2981, %v2982
        %v2984 = vrot.slane %v2829, 1
        %v2985 = vrot.slane %v2830, 1
        %v2986 = vsel %vm1075, %v2984, %v2985
        %v3003 = vsel %vm1075, %v2964, 0.0
        %v3004 = vsel %vm1075, %v2967, 0.0
        %v3005 = vsel %vm1075, %v2970, 0.0
        %v3006 = vsel %vm1075, %v2973, 0.0
        %v3007 = vsel %vm1075, %v2976, 0.0
        %v3008 = vsel %vm1075, %v2979, 0.0
        %v3009 = vsel %vm1075, %v2982, 0.0
        %v3010 = vsel %vm1075, %v2985, 0.0
        %v3011 = vld [vmem:[%s1591] sm:$0xff]
        %v3012 = vld [vmem:[%s1591 + $0x8] sm:$0xff]
        %v3013 = vmul.f32 %v2965, %v3011
        %v3014 = vmul.f32 %v3003, %v3012
        %v3015 = vmul.f32 %v2968, %v3011
        %v3016 = vmul.f32 %v3004, %v3012
        %v3017 = vmul.f32 %v2971, %v3011
        %v3018 = vmul.f32 %v3005, %v3012
        %v3019 = vmul.f32 %v2974, %v3011
        %v3020 = vmul.f32 %v3006, %v3012
        %v3021 = vmul.f32 %v2977, %v3011
        %v3022 = vmul.f32 %v3007, %v3012
        %v3023 = vmul.f32 %v2980, %v3011
        %v3024 = vmul.f32 %v3008, %v3012
        %v3025 = vmul.f32 %v2983, %v3011
        %v3026 = vmul.f32 %v3009, %v3012
        %v3027 = vmul.f32 %v2986, %v3011
        %v3028 = vmul.f32 %v3010, %v3012
        %v3029 = vadd.f32 %v2947, %v3013
        %v3030 = vadd.f32 %v2948, %v3014
        %v3031 = vadd.f32 %v2949, %v3015
        %v3032 = vadd.f32 %v2950, %v3016
        %v3033 = vadd.f32 %v2951, %v3017
        %v3034 = vadd.f32 %v2952, %v3018
        %v3035 = vadd.f32 %v2953, %v3019
        %v3036 = vadd.f32 %v2954, %v3020
        %v3037 = vadd.f32 %v2955, %v3021
        %v3038 = vadd.f32 %v2956, %v3022
        %v3039 = vadd.f32 %v2957, %v3023
        %v3040 = vadd.f32 %v2958, %v3024
        %v3041 = vadd.f32 %v2959, %v3025
        %v3042 = vadd.f32 %v2960, %v3026
        %v3043 = vadd.f32 %v2961, %v3027
        %v3044 = vadd.f32 %v2962, %v3028
        %v3045 = vadd.f32 %v3029, %v939
        %v3046 = vadd.f32 %v3030, %v940
        %v3047 = vadd.f32 %v3031, %v939
        %v3048 = vadd.f32 %v3032, %v940
        %v3049 = vadd.f32 %v3033, %v939
        %v3050 = vadd.f32 %v3034, %v940
        %v3051 = vadd.f32 %v3035, %v939
        %v3052 = vadd.f32 %v3036, %v940
        %v3053 = vadd.f32 %v3037, %v939
        %v3054 = vadd.f32 %v3038, %v940
        %v3055 = vadd.f32 %v3039, %v939
        %v3056 = vadd.f32 %v3040, %v940
        %v3057 = vadd.f32 %v3041, %v939
        %v3058 = vadd.f32 %v3042, %v940
        %v3059 = vadd.f32 %v3043, %v939
        %v3060 = vadd.f32 %v3044, %v940
        %s3061 = scalar_lea.vmem %s216, 256 [#allocation6]
        %3062 = vst [vmem:[%s3061] sm:$0xff] %v3045
        %3063 = vst [vmem:[%s3061 + $0x8] sm:$0xff] %v3046
        %3064 = vst [vmem:[%s3061 + $0x10] sm:$0xff] %v3047
        %3065 = vst [vmem:[%s3061 + $0x18] sm:$0xff] %v3048
        %3066 = vst [vmem:[%s3061 + $0x20] sm:$0xff] %v3049
        %3067 = vst [vmem:[%s3061 + $0x28] sm:$0xff] %v3050
        %3068 = vst [vmem:[%s3061 + $0x30] sm:$0xff] %v3051
        %3069 = vst [vmem:[%s3061 + $0x38] sm:$0xff] %v3052
        %3070 = vst [vmem:[%s3061 + $0x40] sm:$0xff] %v3053
        %3071 = vst [vmem:[%s3061 + $0x48] sm:$0xff] %v3054
        %3072 = vst [vmem:[%s3061 + $0x50] sm:$0xff] %v3055
        %3073 = vst [vmem:[%s3061 + $0x58] sm:$0xff] %v3056
        %3074 = vst [vmem:[%s3061 + $0x60] sm:$0xff] %v3057
        %3075 = vst [vmem:[%s3061 + $0x68] sm:$0xff] %v3058
        %3076 = vst [vmem:[%s3061 + $0x70] sm:$0xff] %v3059
        %3077 = vst [vmem:[%s3061 + $0x78] sm:$0xff] %v3060
        %s3078 = scalar_lea.vmem [#allocation2], 416
        %v3079 = vld [vmem:[%s3078] sm:$0xff]
        %v3080 = vld [vmem:[%s3078 + $0x8] sm:$0xff]
        %v3081 = vld [vmem:[%s3078 + $0x10] sm:$0xff]
        %v3082 = vld [vmem:[%s3078 + $0x18] sm:$0xff]
        %v3083 = vld [vmem:[%s3078 + $0x20] sm:$0xff]
        %v3084 = vld [vmem:[%s3078 + $0x28] sm:$0xff]
        %v3085 = vld [vmem:[%s3078 + $0x30] sm:$0xff]
        %v3086 = vld [vmem:[%s3078 + $0x38] sm:$0xff]
        %v3087 = vld [vmem:[%s3078 + $0x40] sm:$0xff]
        %v3088 = vld [vmem:[%s3078 + $0x48] sm:$0xff]
        %v3089 = vld [vmem:[%s3078 + $0x50] sm:$0xff]
        %v3090 = vld [vmem:[%s3078 + $0x58] sm:$0xff]
        %v3091 = vld [vmem:[%s3078 + $0x60] sm:$0xff]
        %v3092 = vld [vmem:[%s3078 + $0x68] sm:$0xff]
        %v3093 = vld [vmem:[%s3078 + $0x70] sm:$0xff]
        %v3094 = vld [vmem:[%s3078 + $0x78] sm:$0xff]
        %v3111 = vrot.slane %v3079, 7
        %v3112 = vrot.slane %v3080, 7
        %v3113 = vsel %vm973, %v3111, %v3112
        %v3114 = vrot.slane %v3081, 7
        %v3115 = vrot.slane %v3082, 7
        %v3116 = vsel %vm973, %v3114, %v3115
        %v3117 = vrot.slane %v3083, 7
        %v3118 = vrot.slane %v3084, 7
        %v3119 = vsel %vm973, %v3117, %v3118
        %v3120 = vrot.slane %v3085, 7
        %v3121 = vrot.slane %v3086, 7
        %v3122 = vsel %vm973, %v3120, %v3121
        %v3123 = vrot.slane %v3087, 7
        %v3124 = vrot.slane %v3088, 7
        %v3125 = vsel %vm973, %v3123, %v3124
        %v3126 = vrot.slane %v3089, 7
        %v3127 = vrot.slane %v3090, 7
        %v3128 = vsel %vm973, %v3126, %v3127
        %v3129 = vrot.slane %v3091, 7
        %v3130 = vrot.slane %v3092, 7
        %v3131 = vsel %vm973, %v3129, %v3130
        %v3132 = vrot.slane %v3093, 7
        %v3133 = vrot.slane %v3094, 7
        %v3134 = vsel %vm973, %v3132, %v3133
        %v3151 = vsel %vm973, 0.0, %v3111
        %v3152 = vsel %vm973, 0.0, %v3114
        %v3153 = vsel %vm973, 0.0, %v3117
        %v3154 = vsel %vm973, 0.0, %v3120
        %v3155 = vsel %vm973, 0.0, %v3123
        %v3156 = vsel %vm973, 0.0, %v3126
        %v3157 = vsel %vm973, 0.0, %v3129
        %v3158 = vsel %vm973, 0.0, %v3132
        %v3159 = vld [vmem:[%s3] sm:$0xff]
        %v3160 = vld [vmem:[%s3 + $0x8] sm:$0xff]
        %v3161 = vmul.f32 %v3151, %v3159
        %v3162 = vmul.f32 %v3113, %v3160
        %v3163 = vmul.f32 %v3152, %v3159
        %v3164 = vmul.f32 %v3116, %v3160
        %v3165 = vmul.f32 %v3153, %v3159
        %v3166 = vmul.f32 %v3119, %v3160
        %v3167 = vmul.f32 %v3154, %v3159
        %v3168 = vmul.f32 %v3122, %v3160
        %v3169 = vmul.f32 %v3155, %v3159
        %v3170 = vmul.f32 %v3125, %v3160
        %v3171 = vmul.f32 %v3156, %v3159
        %v3172 = vmul.f32 %v3128, %v3160
        %v3173 = vmul.f32 %v3157, %v3159
        %v3174 = vmul.f32 %v3131, %v3160
        %v3175 = vmul.f32 %v3158, %v3159
        %v3176 = vmul.f32 %v3134, %v3160
        %v3177 = vld [vmem:[%s1040] sm:$0xff]
        %v3178 = vld [vmem:[%s1040 + $0x8] sm:$0xff]
        %v3179 = vmul.f32 %v3079, %v3177
        %v3180 = vmul.f32 %v3080, %v3178
        %v3181 = vmul.f32 %v3081, %v3177
        %v3182 = vmul.f32 %v3082, %v3178
        %v3183 = vmul.f32 %v3083, %v3177
        %v3184 = vmul.f32 %v3084, %v3178
        %v3185 = vmul.f32 %v3085, %v3177
        %v3186 = vmul.f32 %v3086, %v3178
        %v3187 = vmul.f32 %v3087, %v3177
        %v3188 = vmul.f32 %v3088, %v3178
        %v3189 = vmul.f32 %v3089, %v3177
        %v3190 = vmul.f32 %v3090, %v3178
        %v3191 = vmul.f32 %v3091, %v3177
        %v3192 = vmul.f32 %v3092, %v3178
        %v3193 = vmul.f32 %v3093, %v3177
        %v3194 = vmul.f32 %v3094, %v3178
        %v3195 = vadd.f32 %v3161, %v3179
        %v3196 = vadd.f32 %v3162, %v3180
        %v3197 = vadd.f32 %v3163, %v3181
        %v3198 = vadd.f32 %v3164, %v3182
        %v3199 = vadd.f32 %v3165, %v3183
        %v3200 = vadd.f32 %v3166, %v3184
        %v3201 = vadd.f32 %v3167, %v3185
        %v3202 = vadd.f32 %v3168, %v3186
        %v3203 = vadd.f32 %v3169, %v3187
        %v3204 = vadd.f32 %v3170, %v3188
        %v3205 = vadd.f32 %v3171, %v3189
        %v3206 = vadd.f32 %v3172, %v3190
        %v3207 = vadd.f32 %v3173, %v3191
        %v3208 = vadd.f32 %v3174, %v3192
        %v3209 = vadd.f32 %v3175, %v3193
        %v3210 = vadd.f32 %v3176, %v3194
        %v3211 = vrot.slane %v3079, 1
        %v3212 = vrot.slane %v3080, 1
        %v3213 = vsel %vm1075, %v3211, %v3212
        %v3214 = vrot.slane %v3081, 1
        %v3215 = vrot.slane %v3082, 1
        %v3216 = vsel %vm1075, %v3214, %v3215
        %v3217 = vrot.slane %v3083, 1
        %v3218 = vrot.slane %v3084, 1
        %v3219 = vsel %vm1075, %v3217, %v3218
        %v3220 = vrot.slane %v3085, 1
        %v3221 = vrot.slane %v3086, 1
        %v3222 = vsel %vm1075, %v3220, %v3221
        %v3223 = vrot.slane %v3087, 1
        %v3224 = vrot.slane %v3088, 1
        %v3225 = vsel %vm1075, %v3223, %v3224
        %v3226 = vrot.slane %v3089, 1
        %v3227 = vrot.slane %v3090, 1
        %v3228 = vsel %vm1075, %v3226, %v3227
        %v3229 = vrot.slane %v3091, 1
        %v3230 = vrot.slane %v3092, 1
        %v3231 = vsel %vm1075, %v3229, %v3230
        %v3232 = vrot.slane %v3093, 1
        %v3233 = vrot.slane %v3094, 1
        %v3234 = vsel %vm1075, %v3232, %v3233
        %v3251 = vsel %vm1075, %v3212, 0.0
        %v3252 = vsel %vm1075, %v3215, 0.0
        %v3253 = vsel %vm1075, %v3218, 0.0
        %v3254 = vsel %vm1075, %v3221, 0.0
        %v3255 = vsel %vm1075, %v3224, 0.0
        %v3256 = vsel %vm1075, %v3227, 0.0
        %v3257 = vsel %vm1075, %v3230, 0.0
        %v3258 = vsel %vm1075, %v3233, 0.0
        %v3259 = vld [vmem:[%s1124] sm:$0xff]
        %v3260 = vld [vmem:[%s1124 + $0x8] sm:$0xff]
        %v3261 = vmul.f32 %v3213, %v3259
        %v3262 = vmul.f32 %v3251, %v3260
        %v3263 = vmul.f32 %v3216, %v3259
        %v3264 = vmul.f32 %v3252, %v3260
        %v3265 = vmul.f32 %v3219, %v3259
        %v3266 = vmul.f32 %v3253, %v3260
        %v3267 = vmul.f32 %v3222, %v3259
        %v3268 = vmul.f32 %v3254, %v3260
        %v3269 = vmul.f32 %v3225, %v3259
        %v3270 = vmul.f32 %v3255, %v3260
        %v3271 = vmul.f32 %v3228, %v3259
        %v3272 = vmul.f32 %v3256, %v3260
        %v3273 = vmul.f32 %v3231, %v3259
        %v3274 = vmul.f32 %v3257, %v3260
        %v3275 = vmul.f32 %v3234, %v3259
        %v3276 = vmul.f32 %v3258, %v3260
        %v3277 = vadd.f32 %v3195, %v3261
        %v3278 = vadd.f32 %v3196, %v3262
        %v3279 = vadd.f32 %v3197, %v3263
        %v3280 = vadd.f32 %v3198, %v3264
        %v3281 = vadd.f32 %v3199, %v3265
        %v3282 = vadd.f32 %v3200, %v3266
        %v3283 = vadd.f32 %v3201, %v3267
        %v3284 = vadd.f32 %v3202, %v3268
        %v3285 = vadd.f32 %v3203, %v3269
        %v3286 = vadd.f32 %v3204, %v3270
        %v3287 = vadd.f32 %v3205, %v3271
        %v3288 = vadd.f32 %v3206, %v3272
        %v3289 = vadd.f32 %v3207, %v3273
        %v3290 = vadd.f32 %v3208, %v3274
        %v3291 = vadd.f32 %v3209, %v3275
        %v3292 = vadd.f32 %v3210, %v3276
        %s3293 = scalar_lea.vmem [#allocation2], 432
        %v3294 = vld [vmem:[%s3293] sm:$0xff]
        %v3295 = vld [vmem:[%s3293 + $0x8] sm:$0xff]
        %v3296 = vld [vmem:[%s3293 + $0x10] sm:$0xff]
        %v3297 = vld [vmem:[%s3293 + $0x18] sm:$0xff]
        %v3298 = vld [vmem:[%s3293 + $0x20] sm:$0xff]
        %v3299 = vld [vmem:[%s3293 + $0x28] sm:$0xff]
        %v3300 = vld [vmem:[%s3293 + $0x30] sm:$0xff]
        %v3301 = vld [vmem:[%s3293 + $0x38] sm:$0xff]
        %v3302 = vld [vmem:[%s3293 + $0x40] sm:$0xff]
        %v3303 = vld [vmem:[%s3293 + $0x48] sm:$0xff]
        %v3304 = vld [vmem:[%s3293 + $0x50] sm:$0xff]
        %v3305 = vld [vmem:[%s3293 + $0x58] sm:$0xff]
        %v3306 = vld [vmem:[%s3293 + $0x60] sm:$0xff]
        %v3307 = vld [vmem:[%s3293 + $0x68] sm:$0xff]
        %v3308 = vld [vmem:[%s3293 + $0x70] sm:$0xff]
        %v3309 = vld [vmem:[%s3293 + $0x78] sm:$0xff]
        %v3326 = vrot.slane %v3294, 7
        %v3327 = vrot.slane %v3295, 7
        %v3328 = vsel %vm973, %v3326, %v3327
        %v3329 = vrot.slane %v3296, 7
        %v3330 = vrot.slane %v3297, 7
        %v3331 = vsel %vm973, %v3329, %v3330
        %v3332 = vrot.slane %v3298, 7
        %v3333 = vrot.slane %v3299, 7
        %v3334 = vsel %vm973, %v3332, %v3333
        %v3335 = vrot.slane %v3300, 7
        %v3336 = vrot.slane %v3301, 7
        %v3337 = vsel %vm973, %v3335, %v3336
        %v3338 = vrot.slane %v3302, 7
        %v3339 = vrot.slane %v3303, 7
        %v3340 = vsel %vm973, %v3338, %v3339
        %v3341 = vrot.slane %v3304, 7
        %v3342 = vrot.slane %v3305, 7
        %v3343 = vsel %vm973, %v3341, %v3342
        %v3344 = vrot.slane %v3306, 7
        %v3345 = vrot.slane %v3307, 7
        %v3346 = vsel %vm973, %v3344, %v3345
        %v3347 = vrot.slane %v3308, 7
        %v3348 = vrot.slane %v3309, 7
        %v3349 = vsel %vm973, %v3347, %v3348
        %v3366 = vsel %vm973, 0.0, %v3326
        %v3367 = vsel %vm973, 0.0, %v3329
        %v3368 = vsel %vm973, 0.0, %v3332
        %v3369 = vsel %vm973, 0.0, %v3335
        %v3370 = vsel %vm973, 0.0, %v3338
        %v3371 = vsel %vm973, 0.0, %v3341
        %v3372 = vsel %vm973, 0.0, %v3344
        %v3373 = vsel %vm973, 0.0, %v3347
        %v3374 = vld [vmem:[%s1239] sm:$0xff]
        %v3375 = vld [vmem:[%s1239 + $0x8] sm:$0xff]
        %v3376 = vmul.f32 %v3366, %v3374
        %v3377 = vmul.f32 %v3328, %v3375
        %v3378 = vmul.f32 %v3367, %v3374
        %v3379 = vmul.f32 %v3331, %v3375
        %v3380 = vmul.f32 %v3368, %v3374
        %v3381 = vmul.f32 %v3334, %v3375
        %v3382 = vmul.f32 %v3369, %v3374
        %v3383 = vmul.f32 %v3337, %v3375
        %v3384 = vmul.f32 %v3370, %v3374
        %v3385 = vmul.f32 %v3340, %v3375
        %v3386 = vmul.f32 %v3371, %v3374
        %v3387 = vmul.f32 %v3343, %v3375
        %v3388 = vmul.f32 %v3372, %v3374
        %v3389 = vmul.f32 %v3346, %v3375
        %v3390 = vmul.f32 %v3373, %v3374
        %v3391 = vmul.f32 %v3349, %v3375
        %v3392 = vadd.f32 %v3277, %v3376
        %v3393 = vadd.f32 %v3278, %v3377
        %v3394 = vadd.f32 %v3279, %v3378
        %v3395 = vadd.f32 %v3280, %v3379
        %v3396 = vadd.f32 %v3281, %v3380
        %v3397 = vadd.f32 %v3282, %v3381
        %v3398 = vadd.f32 %v3283, %v3382
        %v3399 = vadd.f32 %v3284, %v3383
        %v3400 = vadd.f32 %v3285, %v3384
        %v3401 = vadd.f32 %v3286, %v3385
        %v3402 = vadd.f32 %v3287, %v3386
        %v3403 = vadd.f32 %v3288, %v3387
        %v3404 = vadd.f32 %v3289, %v3388
        %v3405 = vadd.f32 %v3290, %v3389
        %v3406 = vadd.f32 %v3291, %v3390
        %v3407 = vadd.f32 %v3292, %v3391
        %v3408 = vld [vmem:[%s1274] sm:$0xff]
        %v3409 = vld [vmem:[%s1274 + $0x8] sm:$0xff]
        %v3410 = vmul.f32 %v3294, %v3408
        %v3411 = vmul.f32 %v3295, %v3409
        %v3412 = vmul.f32 %v3296, %v3408
        %v3413 = vmul.f32 %v3297, %v3409
        %v3414 = vmul.f32 %v3298, %v3408
        %v3415 = vmul.f32 %v3299, %v3409
        %v3416 = vmul.f32 %v3300, %v3408
        %v3417 = vmul.f32 %v3301, %v3409
        %v3418 = vmul.f32 %v3302, %v3408
        %v3419 = vmul.f32 %v3303, %v3409
        %v3420 = vmul.f32 %v3304, %v3408
        %v3421 = vmul.f32 %v3305, %v3409
        %v3422 = vmul.f32 %v3306, %v3408
        %v3423 = vmul.f32 %v3307, %v3409
        %v3424 = vmul.f32 %v3308, %v3408
        %v3425 = vmul.f32 %v3309, %v3409
        %v3426 = vadd.f32 %v3392, %v3410
        %v3427 = vadd.f32 %v3393, %v3411
        %v3428 = vadd.f32 %v3394, %v3412
        %v3429 = vadd.f32 %v3395, %v3413
        %v3430 = vadd.f32 %v3396, %v3414
        %v3431 = vadd.f32 %v3397, %v3415
        %v3432 = vadd.f32 %v3398, %v3416
        %v3433 = vadd.f32 %v3399, %v3417
        %v3434 = vadd.f32 %v3400, %v3418
        %v3435 = vadd.f32 %v3401, %v3419
        %v3436 = vadd.f32 %v3402, %v3420
        %v3437 = vadd.f32 %v3403, %v3421
        %v3438 = vadd.f32 %v3404, %v3422
        %v3439 = vadd.f32 %v3405, %v3423
        %v3440 = vadd.f32 %v3406, %v3424
        %v3441 = vadd.f32 %v3407, %v3425
        %v3442 = vrot.slane %v3294, 1
        %v3443 = vrot.slane %v3295, 1
        %v3444 = vsel %vm1075, %v3442, %v3443
        %v3445 = vrot.slane %v3296, 1
        %v3446 = vrot.slane %v3297, 1
        %v3447 = vsel %vm1075, %v3445, %v3446
        %v3448 = vrot.slane %v3298, 1
        %v3449 = vrot.slane %v3299, 1
        %v3450 = vsel %vm1075, %v3448, %v3449
        %v3451 = vrot.slane %v3300, 1
        %v3452 = vrot.slane %v3301, 1
        %v3453 = vsel %vm1075, %v3451, %v3452
        %v3454 = vrot.slane %v3302, 1
        %v3455 = vrot.slane %v3303, 1
        %v3456 = vsel %vm1075, %v3454, %v3455
        %v3457 = vrot.slane %v3304, 1
        %v3458 = vrot.slane %v3305, 1
        %v3459 = vsel %vm1075, %v3457, %v3458
        %v3460 = vrot.slane %v3306, 1
        %v3461 = vrot.slane %v3307, 1
        %v3462 = vsel %vm1075, %v3460, %v3461
        %v3463 = vrot.slane %v3308, 1
        %v3464 = vrot.slane %v3309, 1
        %v3465 = vsel %vm1075, %v3463, %v3464
        %v3482 = vsel %vm1075, %v3443, 0.0
        %v3483 = vsel %vm1075, %v3446, 0.0
        %v3484 = vsel %vm1075, %v3449, 0.0
        %v3485 = vsel %vm1075, %v3452, 0.0
        %v3486 = vsel %vm1075, %v3455, 0.0
        %v3487 = vsel %vm1075, %v3458, 0.0
        %v3488 = vsel %vm1075, %v3461, 0.0
        %v3489 = vsel %vm1075, %v3464, 0.0
        %v3490 = vld [vmem:[%s1357] sm:$0xff]
        %v3491 = vld [vmem:[%s1357 + $0x8] sm:$0xff]
        %v3492 = vmul.f32 %v3444, %v3490
        %v3493 = vmul.f32 %v3482, %v3491
        %v3494 = vmul.f32 %v3447, %v3490
        %v3495 = vmul.f32 %v3483, %v3491
        %v3496 = vmul.f32 %v3450, %v3490
        %v3497 = vmul.f32 %v3484, %v3491
        %v3498 = vmul.f32 %v3453, %v3490
        %v3499 = vmul.f32 %v3485, %v3491
        %v3500 = vmul.f32 %v3456, %v3490
        %v3501 = vmul.f32 %v3486, %v3491
        %v3502 = vmul.f32 %v3459, %v3490
        %v3503 = vmul.f32 %v3487, %v3491
        %v3504 = vmul.f32 %v3462, %v3490
        %v3505 = vmul.f32 %v3488, %v3491
        %v3506 = vmul.f32 %v3465, %v3490
        %v3507 = vmul.f32 %v3489, %v3491
        %v3508 = vadd.f32 %v3426, %v3492
        %v3509 = vadd.f32 %v3427, %v3493
        %v3510 = vadd.f32 %v3428, %v3494
        %v3511 = vadd.f32 %v3429, %v3495
        %v3512 = vadd.f32 %v3430, %v3496
        %v3513 = vadd.f32 %v3431, %v3497
        %v3514 = vadd.f32 %v3432, %v3498
        %v3515 = vadd.f32 %v3433, %v3499
        %v3516 = vadd.f32 %v3434, %v3500
        %v3517 = vadd.f32 %v3435, %v3501
        %v3518 = vadd.f32 %v3436, %v3502
        %v3519 = vadd.f32 %v3437, %v3503
        %v3520 = vadd.f32 %v3438, %v3504
        %v3521 = vadd.f32 %v3439, %v3505
        %v3522 = vadd.f32 %v3440, %v3506
        %v3523 = vadd.f32 %v3441, %v3507
        %s3524 = scalar_lea.vmem [#allocation2], 448
        %v3525 = vld [vmem:[%s3524] sm:$0xff]
        %v3526 = vld [vmem:[%s3524 + $0x8] sm:$0xff]
        %v3527 = vld [vmem:[%s3524 + $0x10] sm:$0xff]
        %v3528 = vld [vmem:[%s3524 + $0x18] sm:$0xff]
        %v3529 = vld [vmem:[%s3524 + $0x20] sm:$0xff]
        %v3530 = vld [vmem:[%s3524 + $0x28] sm:$0xff]
        %v3531 = vld [vmem:[%s3524 + $0x30] sm:$0xff]
        %v3532 = vld [vmem:[%s3524 + $0x38] sm:$0xff]
        %v3533 = vld [vmem:[%s3524 + $0x40] sm:$0xff]
        %v3534 = vld [vmem:[%s3524 + $0x48] sm:$0xff]
        %v3535 = vld [vmem:[%s3524 + $0x50] sm:$0xff]
        %v3536 = vld [vmem:[%s3524 + $0x58] sm:$0xff]
        %v3537 = vld [vmem:[%s3524 + $0x60] sm:$0xff]
        %v3538 = vld [vmem:[%s3524 + $0x68] sm:$0xff]
        %v3539 = vld [vmem:[%s3524 + $0x70] sm:$0xff]
        %v3540 = vld [vmem:[%s3524 + $0x78] sm:$0xff]
        %v3557 = vrot.slane %v3525, 7
        %v3558 = vrot.slane %v3526, 7
        %v3559 = vsel %vm973, %v3557, %v3558
        %v3560 = vrot.slane %v3527, 7
        %v3561 = vrot.slane %v3528, 7
        %v3562 = vsel %vm973, %v3560, %v3561
        %v3563 = vrot.slane %v3529, 7
        %v3564 = vrot.slane %v3530, 7
        %v3565 = vsel %vm973, %v3563, %v3564
        %v3566 = vrot.slane %v3531, 7
        %v3567 = vrot.slane %v3532, 7
        %v3568 = vsel %vm973, %v3566, %v3567
        %v3569 = vrot.slane %v3533, 7
        %v3570 = vrot.slane %v3534, 7
        %v3571 = vsel %vm973, %v3569, %v3570
        %v3572 = vrot.slane %v3535, 7
        %v3573 = vrot.slane %v3536, 7
        %v3574 = vsel %vm973, %v3572, %v3573
        %v3575 = vrot.slane %v3537, 7
        %v3576 = vrot.slane %v3538, 7
        %v3577 = vsel %vm973, %v3575, %v3576
        %v3578 = vrot.slane %v3539, 7
        %v3579 = vrot.slane %v3540, 7
        %v3580 = vsel %vm973, %v3578, %v3579
        %v3597 = vsel %vm973, 0.0, %v3557
        %v3598 = vsel %vm973, 0.0, %v3560
        %v3599 = vsel %vm973, 0.0, %v3563
        %v3600 = vsel %vm973, 0.0, %v3566
        %v3601 = vsel %vm973, 0.0, %v3569
        %v3602 = vsel %vm973, 0.0, %v3572
        %v3603 = vsel %vm973, 0.0, %v3575
        %v3604 = vsel %vm973, 0.0, %v3578
        %v3605 = vld [vmem:[%s1473] sm:$0xff]
        %v3606 = vld [vmem:[%s1473 + $0x8] sm:$0xff]
        %v3607 = vmul.f32 %v3597, %v3605
        %v3608 = vmul.f32 %v3559, %v3606
        %v3609 = vmul.f32 %v3598, %v3605
        %v3610 = vmul.f32 %v3562, %v3606
        %v3611 = vmul.f32 %v3599, %v3605
        %v3612 = vmul.f32 %v3565, %v3606
        %v3613 = vmul.f32 %v3600, %v3605
        %v3614 = vmul.f32 %v3568, %v3606
        %v3615 = vmul.f32 %v3601, %v3605
        %v3616 = vmul.f32 %v3571, %v3606
        %v3617 = vmul.f32 %v3602, %v3605
        %v3618 = vmul.f32 %v3574, %v3606
        %v3619 = vmul.f32 %v3603, %v3605
        %v3620 = vmul.f32 %v3577, %v3606
        %v3621 = vmul.f32 %v3604, %v3605
        %v3622 = vmul.f32 %v3580, %v3606
        %v3623 = vadd.f32 %v3508, %v3607
        %v3624 = vadd.f32 %v3509, %v3608
        %v3625 = vadd.f32 %v3510, %v3609
        %v3626 = vadd.f32 %v3511, %v3610
        %v3627 = vadd.f32 %v3512, %v3611
        %v3628 = vadd.f32 %v3513, %v3612
        %v3629 = vadd.f32 %v3514, %v3613
        %v3630 = vadd.f32 %v3515, %v3614
        %v3631 = vadd.f32 %v3516, %v3615
        %v3632 = vadd.f32 %v3517, %v3616
        %v3633 = vadd.f32 %v3518, %v3617
        %v3634 = vadd.f32 %v3519, %v3618
        %v3635 = vadd.f32 %v3520, %v3619
        %v3636 = vadd.f32 %v3521, %v3620
        %v3637 = vadd.f32 %v3522, %v3621
        %v3638 = vadd.f32 %v3523, %v3622
        %v3639 = vld [vmem:[%s1508] sm:$0xff]
        %v3640 = vld [vmem:[%s1508 + $0x8] sm:$0xff]
        %v3641 = vmul.f32 %v3525, %v3639
        %v3642 = vmul.f32 %v3526, %v3640
        %v3643 = vmul.f32 %v3527, %v3639
        %v3644 = vmul.f32 %v3528, %v3640
        %v3645 = vmul.f32 %v3529, %v3639
        %v3646 = vmul.f32 %v3530, %v3640
        %v3647 = vmul.f32 %v3531, %v3639
        %v3648 = vmul.f32 %v3532, %v3640
        %v3649 = vmul.f32 %v3533, %v3639
        %v3650 = vmul.f32 %v3534, %v3640
        %v3651 = vmul.f32 %v3535, %v3639
        %v3652 = vmul.f32 %v3536, %v3640
        %v3653 = vmul.f32 %v3537, %v3639
        %v3654 = vmul.f32 %v3538, %v3640
        %v3655 = vmul.f32 %v3539, %v3639
        %v3656 = vmul.f32 %v3540, %v3640
        %v3657 = vadd.f32 %v3623, %v3641
        %v3658 = vadd.f32 %v3624, %v3642
        %v3659 = vadd.f32 %v3625, %v3643
        %v3660 = vadd.f32 %v3626, %v3644
        %v3661 = vadd.f32 %v3627, %v3645
        %v3662 = vadd.f32 %v3628, %v3646
        %v3663 = vadd.f32 %v3629, %v3647
        %v3664 = vadd.f32 %v3630, %v3648
        %v3665 = vadd.f32 %v3631, %v3649
        %v3666 = vadd.f32 %v3632, %v3650
        %v3667 = vadd.f32 %v3633, %v3651
        %v3668 = vadd.f32 %v3634, %v3652
        %v3669 = vadd.f32 %v3635, %v3653
        %v3670 = vadd.f32 %v3636, %v3654
        %v3671 = vadd.f32 %v3637, %v3655
        %v3672 = vadd.f32 %v3638, %v3656
        %v3673 = vrot.slane %v3525, 1
        %v3674 = vrot.slane %v3526, 1
        %v3675 = vsel %vm1075, %v3673, %v3674
        %v3676 = vrot.slane %v3527, 1
        %v3677 = vrot.slane %v3528, 1
        %v3678 = vsel %vm1075, %v3676, %v3677
        %v3679 = vrot.slane %v3529, 1
        %v3680 = vrot.slane %v3530, 1
        %v3681 = vsel %vm1075, %v3679, %v3680
        %v3682 = vrot.slane %v3531, 1
        %v3683 = vrot.slane %v3532, 1
        %v3684 = vsel %vm1075, %v3682, %v3683
        %v3685 = vrot.slane %v3533, 1
        %v3686 = vrot.slane %v3534, 1
        %v3687 = vsel %vm1075, %v3685, %v3686
        %v3688 = vrot.slane %v3535, 1
        %v3689 = vrot.slane %v3536, 1
        %v3690 = vsel %vm1075, %v3688, %v3689
        %v3691 = vrot.slane %v3537, 1
        %v3692 = vrot.slane %v3538, 1
        %v3693 = vsel %vm1075, %v3691, %v3692
        %v3694 = vrot.slane %v3539, 1
        %v3695 = vrot.slane %v3540, 1
        %v3696 = vsel %vm1075, %v3694, %v3695
        %v3713 = vsel %vm1075, %v3674, 0.0
        %v3714 = vsel %vm1075, %v3677, 0.0
        %v3715 = vsel %vm1075, %v3680, 0.0
        %v3716 = vsel %vm1075, %v3683, 0.0
        %v3717 = vsel %vm1075, %v3686, 0.0
        %v3718 = vsel %vm1075, %v3689, 0.0
        %v3719 = vsel %vm1075, %v3692, 0.0
        %v3720 = vsel %vm1075, %v3695, 0.0
        %v3721 = vld [vmem:[%s1591] sm:$0xff]
        %v3722 = vld [vmem:[%s1591 + $0x8] sm:$0xff]
        %v3723 = vmul.f32 %v3675, %v3721
        %v3724 = vmul.f32 %v3713, %v3722
        %v3725 = vmul.f32 %v3678, %v3721
        %v3726 = vmul.f32 %v3714, %v3722
        %v3727 = vmul.f32 %v3681, %v3721
        %v3728 = vmul.f32 %v3715, %v3722
        %v3729 = vmul.f32 %v3684, %v3721
        %v3730 = vmul.f32 %v3716, %v3722
        %v3731 = vmul.f32 %v3687, %v3721
        %v3732 = vmul.f32 %v3717, %v3722
        %v3733 = vmul.f32 %v3690, %v3721
        %v3734 = vmul.f32 %v3718, %v3722
        %v3735 = vmul.f32 %v3693, %v3721
        %v3736 = vmul.f32 %v3719, %v3722
        %v3737 = vmul.f32 %v3696, %v3721
        %v3738 = vmul.f32 %v3720, %v3722
        %v3739 = vadd.f32 %v3657, %v3723
        %v3740 = vadd.f32 %v3658, %v3724
        %v3741 = vadd.f32 %v3659, %v3725
        %v3742 = vadd.f32 %v3660, %v3726
        %v3743 = vadd.f32 %v3661, %v3727
        %v3744 = vadd.f32 %v3662, %v3728
        %v3745 = vadd.f32 %v3663, %v3729
        %v3746 = vadd.f32 %v3664, %v3730
        %v3747 = vadd.f32 %v3665, %v3731
        %v3748 = vadd.f32 %v3666, %v3732
        %v3749 = vadd.f32 %v3667, %v3733
        %v3750 = vadd.f32 %v3668, %v3734
        %v3751 = vadd.f32 %v3669, %v3735
        %v3752 = vadd.f32 %v3670, %v3736
        %v3753 = vadd.f32 %v3671, %v3737
        %v3754 = vadd.f32 %v3672, %v3738
        %v3755 = vadd.f32 %v3739, %v939
        %v3756 = vadd.f32 %v3740, %v940
        %v3757 = vadd.f32 %v3741, %v939
        %v3758 = vadd.f32 %v3742, %v940
        %v3759 = vadd.f32 %v3743, %v939
        %v3760 = vadd.f32 %v3744, %v940
        %v3761 = vadd.f32 %v3745, %v939
        %v3762 = vadd.f32 %v3746, %v940
        %v3763 = vadd.f32 %v3747, %v939
        %v3764 = vadd.f32 %v3748, %v940
        %v3765 = vadd.f32 %v3749, %v939
        %v3766 = vadd.f32 %v3750, %v940
        %v3767 = vadd.f32 %v3751, %v939
        %v3768 = vadd.f32 %v3752, %v940
        %v3769 = vadd.f32 %v3753, %v939
        %v3770 = vadd.f32 %v3754, %v940
        %s3771 = scalar_lea.vmem %s216, 384 [#allocation6]
        %3772 = vst [vmem:[%s3771] sm:$0xff] %v3755
        %3773 = vst [vmem:[%s3771 + $0x8] sm:$0xff] %v3756
        %3774 = vst [vmem:[%s3771 + $0x10] sm:$0xff] %v3757
        %3775 = vst [vmem:[%s3771 + $0x18] sm:$0xff] %v3758
        %3776 = vst [vmem:[%s3771 + $0x20] sm:$0xff] %v3759
        %3777 = vst [vmem:[%s3771 + $0x28] sm:$0xff] %v3760
        %3778 = vst [vmem:[%s3771 + $0x30] sm:$0xff] %v3761
        %3779 = vst [vmem:[%s3771 + $0x38] sm:$0xff] %v3762
        %3780 = vst [vmem:[%s3771 + $0x40] sm:$0xff] %v3763
        %3781 = vst [vmem:[%s3771 + $0x48] sm:$0xff] %v3764
        %3782 = vst [vmem:[%s3771 + $0x50] sm:$0xff] %v3765
        %3783 = vst [vmem:[%s3771 + $0x58] sm:$0xff] %v3766
        %3784 = vst [vmem:[%s3771 + $0x60] sm:$0xff] %v3767
        %3785 = vst [vmem:[%s3771 + $0x68] sm:$0xff] %v3768
        %3786 = vst [vmem:[%s3771 + $0x70] sm:$0xff] %v3769
        %3787 = vst [vmem:[%s3771 + $0x78] sm:$0xff] %v3770
        %s3788 = sand.u32 %s118, 1
        %s3789 = scalar_lea.sflag [#allocation5], %s3788
        %s3790 = sand.u32 %s118, 1
        %s3791 = smul.addr %s3790, 512
        %s3792 = scalar_lea.vmem [#allocation6], %s3791
        // Predicated region
        $region41: #{seprep_forward.1} parent=35 // pred_check
          %p3793 = pneg %p128
        $region42: #{seprep_forward.1} parent=35 // pred_check_branch
          %3795 = sbr.rel (%p3793) target = $region44
        $region43: #{seprep_forward.1} parent=35 // pred_region
          %s3796 = smul.u32 2, %s21
          %s3798 = ssub.s32 8192, 8192
          %3799 = vsyncadd %s3789, %s3798
          %s3800 = smul.addr %s3796, 32
          %s3801 = smul.addr %s3800, 128
          %s3802 = scalar_lea.hbm %s4, %s3801
          %s3803 = sshll.u32 %s3792, 4
          %s3804 = int_to_ptr.vmem [resolvable:$true] %s3803
          %3809 = dma.vmem_to_hbm [thread:$0]  %s3804, 8192, %s3802, %s3789, 128, 128, 8
        $region44: #{seprep_forward.1} parent=35 // pred_fallthru
          _
      $region36: #{seprep_forward.1} parent=5 // pred_fallthru
        _
      %p3810 = scmp.le.s32.totalorder 2, %s16
      // Predicated region
      $region45: #{seprep_forward.1} parent=5 // pred_check
        %p3811 = pneg %p3810
      $region46: #{seprep_forward.1} parent=5 // pred_check_branch
        %3813 = sbr.rel (%p3811) target = $region48
      $region47: #{seprep_forward.1} parent=5 // pred_region
        %s3814 = ssub.s32 %s16, 2
        // Predicated region
        $region49: #{seprep_forward.1} parent=47 // pred_check
          %p3815 = pneg %p134
        $region50: #{seprep_forward.1} parent=47 // pred_check_branch
          %3817 = sbr.rel (%p3815) target = $region52
        $region51: #{seprep_forward.1} parent=47 // pred_region
          %s3818 = sand.u32 %s119, 1
          %s3819 = scalar_lea.sflag [#allocation5], %s3818
          %s3820 = sand.u32 %s119, 1
          %s3821 = smul.addr %s3820, 512
          %s3822 = scalar_lea.vmem [#allocation6], %s3821
          %3823 = dma.done %s3819, 8192
        $region52: #{seprep_forward.1} parent=47 // pred_fallthru
          _
      $region48: #{seprep_forward.1} parent=5 // pred_fallthru
        _
    $region6: #{seprep_forward.1} parent=1 // loop_footer
      %s20 = sadd.s32 1, %s16
    $region7: #{seprep_forward.1} parent=1 // loop_footer_branch
      %15 = sbr.rel target = $region3
    $region8: #{seprep_forward.1} parent=1 // loop_exit
      _
    %3824 = vsyncpa [#allocation4], 1
    %s3825 = scalar_lea.sflag [#allocation4], 1
    %3826 = vsyncpa %s3825, 1
    %3827 = vsyncpa [#allocation5], 1
    %s3828 = scalar_lea.sflag [#allocation5], 1
    %3829 = vsyncpa %s3828, 1

</llo_original>
